<compile_context>
chip_gen: v7x
topology: tpu7x:2x2x1
jax: 0.10.0
libtpu: 0.0.40
codegen_flags: <defaults>
</compile_context>

<pallas_src>
import functools

import jax
import jax.numpy as jnp
from jax.experimental import pallas as pl
from jax.experimental.pallas import tpu as pltpu

BN_EPS = 1e-5
_LANE = 128


# --------------------------------------------------------------------------
# In-kernel helpers
# --------------------------------------------------------------------------
def _lane_fold(v):
    """(C, TP) f32 -> ((C,128) partial sum, (C,128) partial sum-of-squares).

    Pure VPU adds over 128-lane groups (lane-tile-aligned static slices); the
    single cross-lane reduce happens once per layer in the JAX wrapper, which
    keeps the XLU off the per-step path.
    """
    acc_s = v[:, 0:_LANE]
    acc_q = acc_s * acc_s
    for k in range(1, v.shape[1] // _LANE):
        blk = v[:, k * _LANE:(k + 1) * _LANE]
        acc_s = acc_s + blk
        acc_q = acc_q + blk * blk
    return acc_s, acc_q


def _pixel_mask(c, t, tpc, tp, p_valid):
    """1.0 for pixels inside the true H*W extent, 0.0 for padded lanes."""
    start = (c * tpc + t) * tp
    lane = jax.lax.broadcasted_iota(jnp.int32, (1, tp), 1)
    return (lane + start < p_valid).astype(jnp.float32)


# --------------------------------------------------------------------------
# Kernels
# --------------------------------------------------------------------------
def head_stats_kernel(x_ref, w_ref, sum_ref, sq_ref,
                      *, n_batch, tpc, p_valid, needs_mask):
    """Sweep 1: per-chunk partial BN statistics of (w @ x)."""
    c, t = pl.program_id(0), pl.program_id(1)
    tp = x_ref.shape[-1]

    @pl.when(t == 0)
    def _init():
        sum_ref[...] = jnp.zeros_like(sum_ref)
        sq_ref[...] = jnp.zeros_like(sq_ref)

    mask = _pixel_mask(c, t, tpc, tp, p_valid) if needs_mask else None
    w = w_ref[...]
    psum = jnp.zeros(sum_ref.shape[1:], jnp.float32)
    psq = jnp.zeros(sq_ref.shape[1:], jnp.float32)
    for n in range(n_batch):
        h = jnp.dot(w, x_ref[n], preferred_element_type=jnp.float32)
        if needs_mask:
            h = h * mask
        s, q = _lane_fold(h)
        psum = psum + s
        psq = psq + q
    sum_ref[0] += psum
    sq_ref[0] += psq


def mid_kernel(a_ref, wp_ref, scp_ref, shp_ref, w_ref,
               a_out_ref, sum_ref, sq_ref,
               *, n_batch, tpc, p_valid, needs_mask):
    """Apply previous layer (conv -> BN(scale/shift) -> ReLU), write the
    activation, run the next conv and accumulate its per-chunk BN partials."""
    c, t = pl.program_id(0), pl.program_id(1)
    tp = a_ref.shape[-1]

    @pl.when(t == 0)
    def _init():
        sum_ref[...] = jnp.zeros_like(sum_ref)
        sq_ref[...] = jnp.zeros_like(sq_ref)

    mask = _pixel_mask(c, t, tpc, tp, p_valid) if needs_mask else None
    wp = wp_ref[...]
    w = w_ref[...]
    scp = scp_ref[...]
    shp = shp_ref[...]
    psum = jnp.zeros(sum_ref.shape[1:], jnp.float32)
    psq = jnp.zeros(sq_ref.shape[1:], jnp.float32)
    for n in range(n_batch):
        hp = jnp.dot(wp, a_ref[n], preferred_element_type=jnp.float32)
        hb = jnp.maximum(hp * scp + shp, 0.0).astype(a_out_ref.dtype)
        a_out_ref[n] = hb
        p = jnp.dot(w, hb, preferred_element_type=jnp.float32)
        if needs_mask:
            p = p * mask
        s, q = _lane_fold(p)
        psum = psum + s
        psq = psq + q
    sum_ref[0] += psum
    sq_ref[0] += psq


def tail_kernel(a_ref, wp_ref, scp_ref, shp_ref, w_ref, bias_ref, y_ref,
                *, n_batch):
    """Apply last BN+ReLU and the final (bias-carrying) conv."""
    wp = wp_ref[...]
    w = w_ref[...]
    scp = scp_ref[...]
    shp = shp_ref[...]
    bias = bias_ref[...]
    for n in range(n_batch):
        hp = jnp.dot(wp, a_ref[n], preferred_element_type=jnp.float32)
        h = jnp.maximum(hp * scp + shp, 0.0).astype(wp.dtype)
        y = jnp.dot(w, h, preferred_element_type=jnp.float32) + bias
        y_ref[n] = y.astype(y_ref.dtype)


# --------------------------------------------------------------------------
# Planning / wrapper helpers
# --------------------------------------------------------------------------
def _plan_tiling(n, cin, cm, c2l, out_bytes, p):
    """VMEM-budgeted, generation-aware pixel tile TP and chunk split."""
    try:
        info = pltpu.get_tpu_info()
        cap = int(getattr(info, "vmem_capacity_bytes", 64 * 1024 * 1024))
    except Exception:  # pragma: no cover - conservative fallback off-TPU
        cap = 64 * 1024 * 1024
    # ~75% of physical VMEM: ~48 MiB on v7x (64 MiB/TC), ~96 MiB on v5e/v6e.
    vmem_limit = max(32 * 1024 * 1024, (cap * 3) // 4)

    # Double-buffered activation block bytes per pixel column, per sweep
    # (bf16 activations; the tail writes out_bytes per output channel).
    blk_px = max(
        4 * n * cin,                              # sweep 1 (input only)
        4 * n * (cin + cm),                       # sweep 2
        4 * n * (cm + c2l),                       # sweep 3
        4 * n * (c2l + c2l),                      # sweep 4
        4 * n * c2l + 2 * n * cin * out_bytes,    # sweep 5 (f32/bf16 output)
    )
    # Resident weights (single-buffered bf16), BN vectors, partial-stat blocks.
    w_res = 2 * max(cm * cin,
                    cm * cin + c2l * cm,
                    c2l * cm + c2l * c2l,
                    c2l * c2l + cm * c2l,
                    cm * c2l + cin * cm)
    reserve = w_res + 4 * 4 * _LANE * max(cin, cm, c2l) + (4 << 20)

    budget = max(vmem_limit - reserve, 2 << 20)
    # Blocks take ~half the budget; the rest covers f32 matmul intermediates
    # inside the kernel and compiler scratch.
    tp = (budget // 2 // blk_px) // _LANE * _LANE
    tp = max(tp, _LANE)
    tp = min(tp, ((p + _LANE - 1) // _LANE) * _LANE)

    p_pad = ((p + tp - 1) // tp) * tp
    pt = p_pad // tp
    nch = 2 if pt % 2 == 0 else 1   # megacore (v7x): independent stat chunks
    tpc = pt // nch
    return tp, p_pad, nch, tpc, int(vmem_limit)


def _const_spec(shape):
    """BlockSpec for blocks whose index never changes (weights, BN vectors)."""
    imap = lambda ci, ti: (0,) * len(shape)
    try:
        return pl.BlockSpec(shape, imap, pipeline_mode=pl.Buffered(1))
    except TypeError:  # older jax without pipeline_mode kwarg
        return pl.BlockSpec(shape, imap)


def _finish_bn(psum, psq, gamma, beta, inv_m):
    """Combine per-chunk / per-lane partial moments into BN scale/shift."""
    s = jnp.sum(psum, axis=(0, 2))
    q = jnp.sum(psq, axis=(0, 2))
    mean = s * inv_m
    # Note: E[h^2] - E[h]^2 in f32; adequate at bf16-operand tolerances.
    var = q * inv_m - mean * mean
    scale = gamma * jax.lax.rsqrt(var + BN_EPS)
    shift = beta - mean * scale
    return (scale.reshape(-1, 1).astype(jnp.float32),
            shift.reshape(-1, 1).astype(jnp.float32))


# --------------------------------------------------------------------------
# Parameters (PyTorch-shaped) and forward wrapper
# --------------------------------------------------------------------------
def init_params(key, in_channels, latent_dim):
    """Same parameter set as the PyTorch module. Conv weights stored (Cout, Cin)
    (== PyTorch (Cout, Cin, 1, 1) squeezed), biases/gamma/beta as (C,)."""
    mid = (in_channels + 2 * latent_dim) // 2
    dims = [
        (in_channels, mid, True),             # conv1 + bn
        (mid, 2 * latent_dim, True),          # conv2 + bn
        (2 * latent_dim, latent_dim, False),  # conv3
        (latent_dim, 2 * latent_dim, True),   # conv4 + bn
        (2 * latent_dim, mid, True),          # conv5 + bn
        (mid, in_channels, False),            # conv6
    ]
    params = []
    for cin, cout, has_bn in dims:
        key, kw, kb = jax.random.split(key, 3)
        w = jax.random.normal(kw, (cout, cin), jnp.float32) * 0.05
        b = jax.random.normal(kb, (cout,), jnp.float32) * 0.01
        params += [w, b]
        if has_bn:
            params += [jnp.ones((cout,), jnp.float32),
                       jnp.zeros((cout,), jnp.float32)]
    return params


@functools.partial(jax.jit, static_argnames=("out_dtype",))
def resnet18_autoencoder_forward(x_nchw, *params, out_dtype=jnp.float32):
    (w1, b1, g1, be1,
     w2, b2, g2, be2,
     w3, b3,
     w4, b4, g4, be4,
     w5, b5, g5, be5,
     w6, b6) = params

    N, Cin, H, W = x_nchw.shape
    P = H * W
    Cm = w1.shape[0]     # (in_channels + 2*latent)//2
    C2L = w2.shape[0]    # 2*latent_dim
    out_bytes = jnp.dtype(out_dtype).itemsize

    TP, P_pad, NCH, TPC, vmem_limit = _plan_tiling(N, Cin, Cm, C2L, out_bytes, P)
    needs_mask = (P_pad != P)
    inv_m = 1.0 / float(N * P)

    bf = jnp.bfloat16
    x_b = x_nchw.reshape(N, Cin, P).astype(bf)          # NCHW native layout
    if needs_mask:
        x_b = jnp.pad(x_b, ((0, 0), (0, 0), (0, P_pad - P)))

    # Exact algebraic folds: conv3 o conv4 as one matmul; biases before BN cancel.
    w34 = jnp.dot(w4, w3, precision=jax.lax.Precision.HIGHEST)   # (C2L, C2L)
    w1b, w2b, w34b, w5b, w6b = (w.astype(bf) for w in (w1, w2, w34, w5, w6))
    b6c = b6.reshape(-1, 1).astype(jnp.float32)

    act = lambda ch: pl.BlockSpec((N, ch, TP),
                                  lambda ci, ti: (0, 0, ci * TPC + ti))
    stats_spec = lambda ch: pl.BlockSpec((1, ch, _LANE),
                                         lambda ci, ti: (ci, 0, 0))
    stats_shape = lambda ch: jax.ShapeDtypeStruct((NCH, ch, _LANE), jnp.float32)
    sds = jax.ShapeDtypeStruct

    # Reduction sweeps: chunk axis parallel (megacore), tile axis arbitrary
    # (per-chunk resident stats accumulator).  Final sweep: fully parallel.
    cp_red = pltpu.CompilerParams(
        dimension_semantics=("parallel", "arbitrary"),
        vmem_limit_bytes=vmem_limit)
    cp_par = pltpu.CompilerParams(
        dimension_semantics=("parallel", "parallel"),
        vmem_limit_bytes=vmem_limit)

    grid = (NCH, TPC)
    kw = dict(n_batch=N, tpc=TPC, p_valid=P, needs_mask=needs_mask)

    # Sweep 1: BN1 partial statistics of w1 @ x.
    s1, q1 = pl.pallas_call(
        functools.partial(head_stats_kernel, **kw),
        grid=grid,
        in_specs=[act(Cin), _const_spec((Cm, Cin))],
        out_specs=(stats_spec(Cm), stats_spec(Cm)),
        out_shape=(stats_shape(Cm), stats_shape(Cm)),
        compiler_params=cp_red,
    )(x_b, w1b)
    scale1, shift1 = _finish_bn(s1, q1, g1, be1, inv_m)

    # Sweep 2: a1 = relu(bn1(w1 x)); BN2 partial statistics of w2 a1.
    a1, s2, q2 = pl.pallas_call(
        functools.partial(mid_kernel, **kw),
        grid=grid,
        in_specs=[act(Cin), _const_spec((Cm, Cin)), _const_spec((Cm, 1)),
                  _const_spec((Cm, 1)), _const_spec((C2L, Cm))],
        out_specs=(act(Cm), stats_spec(C2L), stats_spec(C2L)),
        out_shape=(sds((N, Cm, P_pad), bf), stats_shape(C2L), stats_shape(C2L)),
        compiler_params=cp_red,
    )(x_b, w1b, scale1, shift1, w2b)
    scale2, shift2 = _finish_bn(s2, q2, g2, be2, inv_m)

    # Sweep 3: a2 = relu(bn2(w2 a1)); BN3 partial statistics of w34 a2.
    a2, s3, q3 = pl.pallas_call(
        functools.partial(mid_kernel, **kw),
        grid=grid,
        in_specs=[act(Cm), _const_spec((C2L, Cm)), _const_spec((C2L, 1)),
                  _const_spec((C2L, 1)), _const_spec((C2L, C2L))],
        out_specs=(act(C2L), stats_spec(C2L), stats_spec(C2L)),
        out_shape=(sds((N, C2L, P_pad), bf), stats_shape(C2L), stats_shape(C2L)),
        compiler_params=cp_red,
    )(a1, w2b, scale2, shift2, w34b)
    scale3, shift3 = _finish_bn(s3, q3, g4, be4, inv_m)

    # Sweep 4: a3 = relu(bn3(w34 a2)); BN4 partial statistics of w5 a3.
    a3, s4, q4 = pl.pallas_call(
        functools.partial(mid_kernel, **kw),
        grid=grid,
        in_specs=[act(C2L), _const_spec((C2L, C2L)), _const_spec((C2L, 1)),
                  _const_spec((C2L, 1)), _const_spec((Cm, C2L))],
        out_specs=(act(C2L), stats_spec(Cm), stats_spec(Cm)),
        out_shape=(sds((N, C2L, P_pad), bf), stats_shape(Cm), stats_shape(Cm)),
        compiler_params=cp_red,
    )(a2, w34b, scale3, shift3, w5b)
    scale4, shift4 = _finish_bn(s4, q4, g5, be5, inv_m)

    # Sweep 5: y = w6 relu(bn4(w5 a3)) + b6  (fully parallel, lane-dense stores).
    y = pl.pallas_call(
        functools.partial(tail_kernel, n_batch=N),
        grid=grid,
        in_specs=[act(C2L), _const_spec((Cm, C2L)), _const_spec((Cm, 1)),
                  _const_spec((Cm, 1)), _const_spec((Cin, Cm)),
                  _const_spec((Cin, 1))],
        out_specs=act(Cin),
        out_shape=sds((N, Cin, P_pad), out_dtype),
        compiler_params=cp_par,
    )(a3, w5b, scale4, shift4, w6b, b6c)

    if needs_mask:
        y = y[:, :, :P]
    return y.reshape(N, Cin, H, W)


# --------------------------------------------------------------------------
# Pure-JAX f32 reference (exact PyTorch training-mode semantics)
# --------------------------------------------------------------------------
def reference_forward(x_nchw, params):
    (w1, b1, g1, be1, w2, b2, g2, be2, w3, b3,
     w4, b4, g4, be4, w5, b5, g5, be5, w6, b6) = params
    N, C, H, W = x_nchw.shape
    h = jnp.transpose(x_nchw, (0, 2, 3, 1)).reshape(N * H * W, C)

    def conv(h, w, b):   # w: (Cout, Cin)
        return jnp.dot(h, w.T, precision=jax.lax.Precision.HIGHEST) + b

    def bn_relu(h, g, b):  # training-mode BatchNorm2d (batch stats, biased var)
        m = jnp.mean(h, axis=0, keepdims=True)
        v = jnp.mean((h - m) ** 2, axis=0, keepdims=True)
        return jnp.maximum((h - m) * jax.lax.rsqrt(v + BN_EPS) * g + b, 0.0)

    h = bn_relu(conv(h, w1, b1), g1, be1)
    h = bn_relu(conv(h, w2, b2), g2, be2)
    h = conv(h, w3, b3)
    h = bn_relu(conv(h, w4, b4), g4, be4)
    h = bn_relu(conv(h, w5, b5), g5, be5)
    h = conv(h, w6, b6)
    return jnp.transpose(h.reshape(N, H, W, C), (0, 3, 1, 2))


if __name__ == "__main__":
    # Small shapes consistent with the module (in_channels/latent_dim scaled down).
    in_channels, latent_dim = 128, 32
    N, H, W = 2, 16, 16

    key = jax.random.PRNGKey(0)
    key, kx = jax.random.split(key)
    x = jax.random.normal(kx, (N, in_channels, H, W), jnp.float32)
    params = init_params(key, in_channels, latent_dim)

    y = jax.block_until_ready(resnet18_autoencoder_forward(x, *params))
    y_ref = reference_forward(x, params)

    assert y.shape == (N, in_channels, H, W), y.shape
    # Kernel uses bf16 MXU operands (f32 accumulation) and the exact w3@w4 fold;
    # compare against the f32 PyTorch-faithful reference with bf16-level tolerance.
    max_err = float(jnp.max(jnp.abs(y - y_ref)))
    assert jnp.allclose(y, y_ref, atol=5e-2, rtol=5e-2), max_err

    print("KERNEL_OK")
</pallas_src>

<mosaic_0001>
module attributes {stable_mosaic.version = 11 : i64} {
  func.func @head_stats_kernel(%arg0: i32, %arg1: i32, %arg2: memref<2x128x256xbf16, #tpu.memory_space<vmem>>, %arg3: memref<96x128xbf16, #tpu.memory_space<vmem>>, %arg4: memref<1x96x128xf32, #tpu.memory_space<vmem>>, %arg5: memref<1x96x128xf32, #tpu.memory_space<vmem>>) attributes {dimension_semantics = [#tpu.dimension_semantics<parallel>, #tpu.dimension_semantics<arbitrary>], iteration_bounds = array<i64: 1, 1>, scalar_prefetch = 0 : i64, scratch_operands = 0 : i64, tpu.core_type = #tpu.core_type<tc>, window_params = [{transform_indices = @transform_0, window_bounds = array<i64: 2, 128, 256>}, {pipeline_mode = #tpu.pipeline_mode<synchronous>, transform_indices = @transform_1, window_bounds = array<i64: 96, 128>}, {transform_indices = @transform_2, window_bounds = array<i64: 1, 96, 128>}, {transform_indices = @transform_3, window_bounds = array<i64: 1, 96, 128>}]} {
    %c0_i32 = arith.constant 0 : i32
    %0 = arith.cmpi eq, %arg1, %c0_i32 : i32
    %1 = arith.extui %0 : i1 to i32
    %c0_i32_0 = arith.constant 0 : i32
    %2 = arith.cmpi ne, %1, %c0_i32_0 : i32
    scf.if %2 {
      %cst_22 = arith.constant 0.000000e+00 : f32
      %40 = vector.broadcast %cst_22 : f32 to vector<1x96x128xf32>
      %c0_23 = arith.constant 0 : index
      %c0_24 = arith.constant 0 : index
      %c0_25 = arith.constant 0 : index
      %41 = vector.load %arg4[%c0_23, %c0_24, %c0_25] : memref<1x96x128xf32, #tpu.memory_space<vmem>>, vector<1x96x128xf32>
      tpu.vector_store %arg4[%c0_23, %c0_24, %c0_25], %40 {strides = array<i32>} : memref<1x96x128xf32, #tpu.memory_space<vmem>>, vector<1x96x128xf32>,
      %cst_26 = arith.constant 0.000000e+00 : f32
      %42 = vector.broadcast %cst_26 : f32 to vector<1x96x128xf32>
      %c0_27 = arith.constant 0 : index
      %c0_28 = arith.constant 0 : index
      %c0_29 = arith.constant 0 : index
      %43 = vector.load %arg5[%c0_27, %c0_28, %c0_29] : memref<1x96x128xf32, #tpu.memory_space<vmem>>, vector<1x96x128xf32>
      tpu.vector_store %arg5[%c0_27, %c0_28, %c0_29], %42 {strides = array<i32>} : memref<1x96x128xf32, #tpu.memory_space<vmem>>, vector<1x96x128xf32>,
    } else {
    }
    %c0 = arith.constant 0 : index
    %c0_1 = arith.constant 0 : index
    %3 = vector.load %arg3[%c0, %c0_1] : memref<96x128xbf16, #tpu.memory_space<vmem>>, vector<96x128xbf16>
    %cst = arith.constant 0.000000e+00 : f32
    %4 = vector.broadcast %cst : f32 to vector<96x128xf32>
    %cst_2 = arith.constant 0.000000e+00 : f32
    %5 = vector.broadcast %cst_2 : f32 to vector<96x128xf32>
    %c0_3 = arith.constant 0 : index
    %c0_4 = arith.constant 0 : index
    %c0_5 = arith.constant 0 : index
    %6 = vector.load %arg2[%c0_3, %c0_4, %c0_5] : memref<2x128x256xbf16, #tpu.memory_space<vmem>>, vector<1x128x256xbf16>
    %7 = vector.shape_cast %6 : vector<1x128x256xbf16> to vector<128x256xbf16>
    %cst_6 = arith.constant dense<0.000000e+00> : vector<96x256xf32>
    %8 = tpu.matmul %3, %7, %cst_6 {dimension_numbers = #tpu.dot_dimension_numbers<[1], [0], [0], [1], [0, 0, 1, 1], [], []>} : vector<96x128xbf16>, vector<128x256xbf16>, vector<96x256xf32> -> vector<96x256xf32>
    %9 = vector.extract_strided_slice %8 {offsets = [0, 0], sizes = [96, 128], strides = [1, 1]} : vector<96x256xf32> to vector<96x128xf32>
    %10 = arith.mulf %9, %9 : vector<96x128xf32>
    %11 = vector.extract_strided_slice %8 {offsets = [0, 128], sizes = [96, 128], strides = [1, 1]} : vector<96x256xf32> to vector<96x128xf32>
    %12 = arith.addf %9, %11 : vector<96x128xf32>
    %13 = arith.mulf %11, %11 : vector<96x128xf32>
    %14 = arith.addf %10, %13 : vector<96x128xf32>
    %15 = arith.addf %4, %12 : vector<96x128xf32>
    %16 = arith.addf %5, %14 : vector<96x128xf32>
    %c1 = arith.constant 1 : index
    %c0_7 = arith.constant 0 : index
    %c0_8 = arith.constant 0 : index
    %17 = vector.load %arg2[%c1, %c0_7, %c0_8] : memref<2x128x256xbf16, #tpu.memory_space<vmem>>, vector<1x128x256xbf16>
    %18 = vector.shape_cast %17 : vector<1x128x256xbf16> to vector<128x256xbf16>
    %cst_9 = arith.constant dense<0.000000e+00> : vector<96x256xf32>
    %19 = tpu.matmul %3, %18, %cst_9 {dimension_numbers = #tpu.dot_dimension_numbers<[1], [0], [0], [1], [0, 0, 1, 1], [], []>} : vector<96x128xbf16>, vector<128x256xbf16>, vector<96x256xf32> -> vector<96x256xf32>
    %20 = vector.extract_strided_slice %19 {offsets = [0, 0], sizes = [96, 128], strides = [1, 1]} : vector<96x256xf32> to vector<96x128xf32>
    %21 = arith.mulf %20, %20 : vector<96x128xf32>
    %22 = vector.extract_strided_slice %19 {offsets = [0, 128], sizes = [96, 128], strides = [1, 1]} : vector<96x256xf32> to vector<96x128xf32>
    %23 = arith.addf %20, %22 : vector<96x128xf32>
    %24 = arith.mulf %22, %22 : vector<96x128xf32>
    %25 = arith.addf %21, %24 : vector<96x128xf32>
    %26 = arith.addf %15, %23 : vector<96x128xf32>
    %27 = arith.addf %16, %25 : vector<96x128xf32>
    %c0_10 = arith.constant 0 : index
    %c0_11 = arith.constant 0 : index
    %c0_12 = arith.constant 0 : index
    %28 = vector.load %arg4[%c0_10, %c0_11, %c0_12] : memref<1x96x128xf32, #tpu.memory_space<vmem>>, vector<1x96x128xf32>
    %29 = vector.shape_cast %28 : vector<1x96x128xf32> to vector<96x128xf32>
    %30 = arith.addf %29, %26 : vector<96x128xf32>
    %c0_13 = arith.constant 0 : index
    %c0_14 = arith.constant 0 : index
    %c0_15 = arith.constant 0 : index
    %31 = vector.load %arg4[%c0_13, %c0_14, %c0_15] : memref<1x96x128xf32, #tpu.memory_space<vmem>>, vector<1x96x128xf32>
    %32 = vector.shape_cast %31 : vector<1x96x128xf32> to vector<96x128xf32>
    %33 = vector.shape_cast %30 : vector<96x128xf32> to vector<1x96x128xf32>
    tpu.vector_store %arg4[%c0_13, %c0_14, %c0_15], %33 {strides = array<i32>} : memref<1x96x128xf32, #tpu.memory_space<vmem>>, vector<1x96x128xf32>,
    %c0_16 = arith.constant 0 : index
    %c0_17 = arith.constant 0 : index
    %c0_18 = arith.constant 0 : index
    %34 = vector.load %arg5[%c0_16, %c0_17, %c0_18] : memref<1x96x128xf32, #tpu.memory_space<vmem>>, vector<1x96x128xf32>
    %35 = vector.shape_cast %34 : vector<1x96x128xf32> to vector<96x128xf32>
    %36 = arith.addf %35, %27 : vector<96x128xf32>
    %c0_19 = arith.constant 0 : index
    %c0_20 = arith.constant 0 : index
    %c0_21 = arith.constant 0 : index
    %37 = vector.load %arg5[%c0_19, %c0_20, %c0_21] : memref<1x96x128xf32, #tpu.memory_space<vmem>>, vector<1x96x128xf32>
    %38 = vector.shape_cast %37 : vector<1x96x128xf32> to vector<96x128xf32>
    %39 = vector.shape_cast %36 : vector<96x128xf32> to vector<1x96x128xf32>
    tpu.vector_store %arg5[%c0_19, %c0_20, %c0_21], %39 {strides = array<i32>} : memref<1x96x128xf32, #tpu.memory_space<vmem>>, vector<1x96x128xf32>,
    return
  }
  func.func @transform_0(%arg0: i32, %arg1: i32) -> (i32, i32, i32) {
    %c1_i32 = arith.constant 1 : i32
    %0 = arith.muli %arg0, %c1_i32 : i32
    %1 = arith.addi %0, %arg1 : i32
    %c0_i32 = arith.constant 0 : i32
    %c0_i32_0 = arith.constant 0 : i32
    %c0_i32_1 = arith.constant 0 : i32
    return %c0_i32, %c0_i32_0, %1 : i32, i32, i32
  }
  func.func @transform_1(%arg0: i32, %arg1: i32) -> (i32, i32) {
    %c0_i32 = arith.constant 0 : i32
    %c0_i32_0 = arith.constant 0 : i32
    %c0_i32_1 = arith.constant 0 : i32
    return %c0_i32, %c0_i32_0 : i32, i32
  }
  func.func @transform_2(%arg0: i32, %arg1: i32) -> (i32, i32, i32) {
    %c0_i32 = arith.constant 0 : i32
    %c0_i32_0 = arith.constant 0 : i32
    %c0_i32_1 = arith.constant 0 : i32
    return %arg0, %c0_i32, %c0_i32_0 : i32, i32, i32
  }
  func.func @transform_3(%arg0: i32, %arg1: i32) -> (i32, i32, i32) {
    %c0_i32 = arith.constant 0 : i32
    %c0_i32_0 = arith.constant 0 : i32
    %c0_i32_1 = arith.constant 0 : i32
    return %arg0, %c0_i32, %c0_i32_0 : i32, i32, i32
  }
}

module attributes {stable_mosaic.version = 11 : i64} {
  func.func @mid_kernel(%arg0: i32, %arg1: i32, %arg2: memref<2x128x256xbf16, #tpu.memory_space<vmem>>, %arg3: memref<96x128xbf16, #tpu.memory_space<vmem>>, %arg4: memref<96x1xf32, #tpu.memory_space<vmem>>, %arg5: memref<96x1xf32, #tpu.memory_space<vmem>>, %arg6: memref<64x96xbf16, #tpu.memory_space<vmem>>, %arg7: memref<2x96x256xbf16, #tpu.memory_space<vmem>>, %arg8: memref<1x64x128xf32, #tpu.memory_space<vmem>>, %arg9: memref<1x64x128xf32, #tpu.memory_space<vmem>>) attributes {dimension_semantics = [#tpu.dimension_semantics<parallel>, #tpu.dimension_semantics<arbitrary>], iteration_bounds = array<i64: 1, 1>, scalar_prefetch = 0 : i64, scratch_operands = 0 : i64, tpu.core_type = #tpu.core_type<tc>, window_params = [{transform_indices = @transform_0, window_bounds = array<i64: 2, 128, 256>}, {pipeline_mode = #tpu.pipeline_mode<synchronous>, transform_indices = @transform_1, window_bounds = array<i64: 96, 128>}, {pipeline_mode = #tpu.pipeline_mode<synchronous>, transform_indices = @transform_2, window_bounds = array<i64: 96, 1>}, {pipeline_mode = #tpu.pipeline_mode<synchronous>, transform_indices = @transform_3, window_bounds = array<i64: 96, 1>}, {pipeline_mode = #tpu.pipeline_mode<synchronous>, transform_indices = @transform_4, window_bounds = array<i64: 64, 96>}, {transform_indices = @transform_5, window_bounds = array<i64: 2, 96, 256>}, {transform_indices = @transform_6, window_bounds = array<i64: 1, 64, 128>}, {transform_indices = @transform_7, window_bounds = array<i64: 1, 64, 128>}]} {
    %c0_i32 = arith.constant 0 : i32
    %0 = arith.cmpi eq, %arg1, %c0_i32 : i32
    %1 = arith.extui %0 : i1 to i32
    %c0_i32_0 = arith.constant 0 : i32
    %2 = arith.cmpi ne, %1, %c0_i32_0 : i32
    scf.if %2 {
      %cst_38 = arith.constant 0.000000e+00 : f32
      %65 = vector.broadcast %cst_38 : f32 to vector<1x64x128xf32>
      %c0_39 = arith.constant 0 : index
      %c0_40 = arith.constant 0 : index
      %c0_41 = arith.constant 0 : index
      %66 = vector.load %arg8[%c0_39, %c0_40, %c0_41] : memref<1x64x128xf32, #tpu.memory_space<vmem>>, vector<1x64x128xf32>
      tpu.vector_store %arg8[%c0_39, %c0_40, %c0_41], %65 {strides = array<i32>} : memref<1x64x128xf32, #tpu.memory_space<vmem>>, vector<1x64x128xf32>,
      %cst_42 = arith.constant 0.000000e+00 : f32
      %67 = vector.broadcast %cst_42 : f32 to vector<1x64x128xf32>
      %c0_43 = arith.constant 0 : index
      %c0_44 = arith.constant 0 : index
      %c0_45 = arith.constant 0 : index
      %68 = vector.load %arg9[%c0_43, %c0_44, %c0_45] : memref<1x64x128xf32, #tpu.memory_space<vmem>>, vector<1x64x128xf32>
      tpu.vector_store %arg9[%c0_43, %c0_44, %c0_45], %67 {strides = array<i32>} : memref<1x64x128xf32, #tpu.memory_space<vmem>>, vector<1x64x128xf32>,
    } else {
    }
    %c0 = arith.constant 0 : index
    %c0_1 = arith.constant 0 : index
    %3 = vector.load %arg3[%c0, %c0_1] : memref<96x128xbf16, #tpu.memory_space<vmem>>, vector<96x128xbf16>
    %c0_2 = arith.constant 0 : index
    %c0_3 = arith.constant 0 : index
    %4 = vector.load %arg6[%c0_2, %c0_3] : memref<64x96xbf16, #tpu.memory_space<vmem>>, vector<64x96xbf16>
    %c0_4 = arith.constant 0 : index
    %c0_5 = arith.constant 0 : index
    %5 = vector.load %arg4[%c0_4, %c0_5] : memref<96x1xf32, #tpu.memory_space<vmem>>, vector<96x1xf32>
    %c0_6 = arith.constant 0 : index
    %c0_7 = arith.constant 0 : index
    %6 = vector.load %arg5[%c0_6, %c0_7] : memref<96x1xf32, #tpu.memory_space<vmem>>, vector<96x1xf32>
    %cst = arith.constant 0.000000e+00 : f32
    %7 = vector.broadcast %cst : f32 to vector<64x128xf32>
    %cst_8 = arith.constant 0.000000e+00 : f32
    %8 = vector.broadcast %cst_8 : f32 to vector<64x128xf32>
    %c0_9 = arith.constant 0 : index
    %c0_10 = arith.constant 0 : index
    %c0_11 = arith.constant 0 : index
    %9 = vector.load %arg2[%c0_9, %c0_10, %c0_11] : memref<2x128x256xbf16, #tpu.memory_space<vmem>>, vector<1x128x256xbf16>
    %10 = vector.shape_cast %9 : vector<1x128x256xbf16> to vector<128x256xbf16>
    %cst_12 = arith.constant dense<0.000000e+00> : vector<96x256xf32>
    %11 = tpu.matmul %3, %10, %cst_12 {dimension_numbers = #tpu.dot_dimension_numbers<[1], [0], [0], [1], [0, 0, 1, 1], [], []>} : vector<96x128xbf16>, vector<128x256xbf16>, vector<96x256xf32> -> vector<96x256xf32>
    %12 = vector.broadcast %5 : vector<96x1xf32> to vector<96x256xf32>
    %13 = arith.mulf %11, %12 : vector<96x256xf32>
    %14 = vector.broadcast %6 : vector<96x1xf32> to vector<96x256xf32>
    %15 = arith.addf %13, %14 : vector<96x256xf32>
    %cst_13 = arith.constant 0.000000e+00 : f32
    %16 = vector.broadcast %cst_13 : f32 to vector<96x256xf32>
    %17 = arith.maximumf %15, %16 : vector<96x256xf32>
    %18 = arith.truncf %17 : vector<96x256xf32> to vector<96x256xbf16>
    %c0_14 = arith.constant 0 : index
    %c0_15 = arith.constant 0 : index
    %c0_16 = arith.constant 0 : index
    %19 = vector.load %arg7[%c0_14, %c0_15, %c0_16] : memref<2x96x256xbf16, #tpu.memory_space<vmem>>, vector<1x96x256xbf16>
    %20 = vector.shape_cast %19 : vector<1x96x256xbf16> to vector<96x256xbf16>
    %21 = vector.shape_cast %18 : vector<96x256xbf16> to vector<1x96x256xbf16>
    tpu.vector_store %arg7[%c0_14, %c0_15, %c0_16], %21 {strides = array<i32>} : memref<2x96x256xbf16, #tpu.memory_space<vmem>>, vector<1x96x256xbf16>,
    %cst_17 = arith.constant dense<0.000000e+00> : vector<64x256xf32>
    %22 = tpu.matmul %4, %18, %cst_17 {dimension_numbers = #tpu.dot_dimension_numbers<[1], [0], [0], [1], [0, 0, 1, 1], [], []>} : vector<64x96xbf16>, vector<96x256xbf16>, vector<64x256xf32> -> vector<64x256xf32>
    %23 = vector.extract_strided_slice %22 {offsets = [0, 0], sizes = [64, 128], strides = [1, 1]} : vector<64x256xf32> to vector<64x128xf32>
    %24 = arith.mulf %23, %23 : vector<64x128xf32>
    %25 = vector.extract_strided_slice %22 {offsets = [0, 128], sizes = [64, 128], strides = [1, 1]} : vector<64x256xf32> to vector<64x128xf32>
    %26 = arith.addf %23, %25 : vector<64x128xf32>
    %27 = arith.mulf %25, %25 : vector<64x128xf32>
    %28 = arith.addf %24, %27 : vector<64x128xf32>
    %29 = arith.addf %7, %26 : vector<64x128xf32>
    %30 = arith.addf %8, %28 : vector<64x128xf32>
    %c1 = arith.constant 1 : index
    %c0_18 = arith.constant 0 : index
    %c0_19 = arith.constant 0 : index
    %31 = vector.load %arg2[%c1, %c0_18, %c0_19] : memref<2x128x256xbf16, #tpu.memory_space<vmem>>, vector<1x128x256xbf16>
    %32 = vector.shape_cast %31 : vector<1x128x256xbf16> to vector<128x256xbf16>
    %cst_20 = arith.constant dense<0.000000e+00> : vector<96x256xf32>
    %33 = tpu.matmul %3, %32, %cst_20 {dimension_numbers = #tpu.dot_dimension_numbers<[1], [0], [0], [1], [0, 0, 1, 1], [], []>} : vector<96x128xbf16>, vector<128x256xbf16>, vector<96x256xf32> -> vector<96x256xf32>
    %34 = vector.broadcast %5 : vector<96x1xf32> to vector<96x256xf32>
    %35 = arith.mulf %33, %34 : vector<96x256xf32>
    %36 = vector.broadcast %6 : vector<96x1xf32> to vector<96x256xf32>
    %37 = arith.addf %35, %36 : vector<96x256xf32>
    %cst_21 = arith.constant 0.000000e+00 : f32
    %38 = vector.broadcast %cst_21 : f32 to vector<96x256xf32>
    %39 = arith.maximumf %37, %38 : vector<96x256xf32>
    %40 = arith.truncf %39 : vector<96x256xf32> to vector<96x256xbf16>
    %c1_22 = arith.constant 1 : index
    %c0_23 = arith.constant 0 : index
    %c0_24 = arith.constant 0 : index
    %41 = vector.load %arg7[%c1_22, %c0_23, %c0_24] : memref<2x96x256xbf16, #tpu.memory_space<vmem>>, vector<1x96x256xbf16>
    %42 = vector.shape_cast %41 : vector<1x96x256xbf16> to vector<96x256xbf16>
    %43 = vector.shape_cast %40 : vector<96x256xbf16> to vector<1x96x256xbf16>
    tpu.vector_store %arg7[%c1_22, %c0_23, %c0_24], %43 {strides = array<i32>} : memref<2x96x256xbf16, #tpu.memory_space<vmem>>, vector<1x96x256xbf16>,
    %cst_25 = arith.constant dense<0.000000e+00> : vector<64x256xf32>
    %44 = tpu.matmul %4, %40, %cst_25 {dimension_numbers = #tpu.dot_dimension_numbers<[1], [0], [0], [1], [0, 0, 1, 1], [], []>} : vector<64x96xbf16>, vector<96x256xbf16>, vector<64x256xf32> -> vector<64x256xf32>
    %45 = vector.extract_strided_slice %44 {offsets = [0, 0], sizes = [64, 128], strides = [1, 1]} : vector<64x256xf32> to vector<64x128xf32>
    %46 = arith.mulf %45, %45 : vector<64x128xf32>
    %47 = vector.extract_strided_slice %44 {offsets = [0, 128], sizes = [64, 128], strides = [1, 1]} : vector<64x256xf32> to vector<64x128xf32>
    %48 = arith.addf %45, %47 : vector<64x128xf32>
    %49 = arith.mulf %47, %47 : vector<64x128xf32>
    %50 = arith.addf %46, %49 : vector<64x128xf32>
    %51 = arith.addf %29, %48 : vector<64x128xf32>
    %52 = arith.addf %30, %50 : vector<64x128xf32>
    %c0_26 = arith.constant 0 : index
    %c0_27 = arith.constant 0 : index
    %c0_28 = arith.constant 0 : index
    %53 = vector.load %arg8[%c0_26, %c0_27, %c0_28] : memref<1x64x128xf32, #tpu.memory_space<vmem>>, vector<1x64x128xf32>
    %54 = vector.shape_cast %53 : vector<1x64x128xf32> to vector<64x128xf32>
    %55 = arith.addf %54, %51 : vector<64x128xf32>
    %c0_29 = arith.constant 0 : index
    %c0_30 = arith.constant 0 : index
    %c0_31 = arith.constant 0 : index
    %56 = vector.load %arg8[%c0_29, %c0_30, %c0_31] : memref<1x64x128xf32, #tpu.memory_space<vmem>>, vector<1x64x128xf32>
    %57 = vector.shape_cast %56 : vector<1x64x128xf32> to vector<64x128xf32>
    %58 = vector.shape_cast %55 : vector<64x128xf32> to vector<1x64x128xf32>
    tpu.vector_store %arg8[%c0_29, %c0_30, %c0_31], %58 {strides = array<i32>} : memref<1x64x128xf32, #tpu.memory_space<vmem>>, vector<1x64x128xf32>,
    %c0_32 = arith.constant 0 : index
    %c0_33 = arith.constant 0 : index
    %c0_34 = arith.constant 0 : index
    %59 = vector.load %arg9[%c0_32, %c0_33, %c0_34] : memref<1x64x128xf32, #tpu.memory_space<vmem>>, vector<1x64x128xf32>
    %60 = vector.shape_cast %59 : vector<1x64x128xf32> to vector<64x128xf32>
    %61 = arith.addf %60, %52 : vector<64x128xf32>
    %c0_35 = arith.constant 0 : index
    %c0_36 = arith.constant 0 : index
    %c0_37 = arith.constant 0 : index
    %62 = vector.load %arg9[%c0_35, %c0_36, %c0_37] : memref<1x64x128xf32, #tpu.memory_space<vmem>>, vector<1x64x128xf32>
    %63 = vector.shape_cast %62 : vector<1x64x128xf32> to vector<64x128xf32>
    %64 = vector.shape_cast %61 : vector<64x128xf32> to vector<1x64x128xf32>
    tpu.vector_store %arg9[%c0_35, %c0_36, %c0_37], %64 {strides = array<i32>} : memref<1x64x128xf32, #tpu.memory_space<vmem>>, vector<1x64x128xf32>,
    return
  }
  func.func @transform_0(%arg0: i32, %arg1: i32) -> (i32, i32, i32) {
    %c1_i32 = arith.constant 1 : i32
    %0 = arith.muli %arg0, %c1_i32 : i32
    %1 = arith.addi %0, %arg1 : i32
    %c0_i32 = arith.constant 0 : i32
    %c0_i32_0 = arith.constant 0 : i32
    %c0_i32_1 = arith.constant 0 : i32
    return %c0_i32, %c0_i32_0, %1 : i32, i32, i32
  }
  func.func @transform_1(%arg0: i32, %arg1: i32) -> (i32, i32) {
    %c0_i32 = arith.constant 0 : i32
    %c0_i32_0 = arith.constant 0 : i32
    %c0_i32_1 = arith.constant 0 : i32
    return %c0_i32, %c0_i32_0 : i32, i32
  }
  func.func @transform_2(%arg0: i32, %arg1: i32) -> (i32, i32) {
    %c0_i32 = arith.constant 0 : i32
    %c0_i32_0 = arith.constant 0 : i32
    %c0_i32_1 = arith.constant 0 : i32
    return %c0_i32, %c0_i32_0 : i32, i32
  }
  func.func @transform_3(%arg0: i32, %arg1: i32) -> (i32, i32) {
    %c0_i32 = arith.constant 0 : i32
    %c0_i32_0 = arith.constant 0 : i32
    %c0_i32_1 = arith.constant 0 : i32
    return %c0_i32, %c0_i32_0 : i32, i32
  }
  func.func @transform_4(%arg0: i32, %arg1: i32) -> (i32, i32) {
    %c0_i32 = arith.constant 0 : i32
    %c0_i32_0 = arith.constant 0 : i32
    %c0_i32_1 = arith.constant 0 : i32
    return %c0_i32, %c0_i32_0 : i32, i32
  }
  func.func @transform_5(%arg0: i32, %arg1: i32) -> (i32, i32, i32) {
    %c1_i32 = arith.constant 1 : i32
    %0 = arith.muli %arg0, %c1_i32 : i32
    %1 = arith.addi %0, %arg1 : i32
    %c0_i32 = arith.constant 0 : i32
    %c0_i32_0 = arith.constant 0 : i32
    %c0_i32_1 = arith.constant 0 : i32
    return %c0_i32, %c0_i32_0, %1 : i32, i32, i32
  }
  func.func @transform_6(%arg0: i32, %arg1: i32) -> (i32, i32, i32) {
    %c0_i32 = arith.constant 0 : i32
    %c0_i32_0 = arith.constant 0 : i32
    %c0_i32_1 = arith.constant 0 : i32
    return %arg0, %c0_i32, %c0_i32_0 : i32, i32, i32
  }
  func.func @transform_7(%arg0: i32, %arg1: i32) -> (i32, i32, i32) {
    %c0_i32 = arith.constant 0 : i32
    %c0_i32_0 = arith.constant 0 : i32
    %c0_i32_1 = arith.constant 0 : i32
    return %arg0, %c0_i32, %c0_i32_0 : i32, i32, i32
  }
}

module attributes {stable_mosaic.version = 11 : i64} {
  func.func @mid_kernel(%arg0: i32, %arg1: i32, %arg2: memref<2x96x256xbf16, #tpu.memory_space<vmem>>, %arg3: memref<64x96xbf16, #tpu.memory_space<vmem>>, %arg4: memref<64x1xf32, #tpu.memory_space<vmem>>, %arg5: memref<64x1xf32, #tpu.memory_space<vmem>>, %arg6: memref<64x64xbf16, #tpu.memory_space<vmem>>, %arg7: memref<2x64x256xbf16, #tpu.memory_space<vmem>>, %arg8: memref<1x64x128xf32, #tpu.memory_space<vmem>>, %arg9: memref<1x64x128xf32, #tpu.memory_space<vmem>>) attributes {dimension_semantics = [#tpu.dimension_semantics<parallel>, #tpu.dimension_semantics<arbitrary>], iteration_bounds = array<i64: 1, 1>, scalar_prefetch = 0 : i64, scratch_operands = 0 : i64, tpu.core_type = #tpu.core_type<tc>, window_params = [{transform_indices = @transform_0, window_bounds = array<i64: 2, 96, 256>}, {pipeline_mode = #tpu.pipeline_mode<synchronous>, transform_indices = @transform_1, window_bounds = array<i64: 64, 96>}, {pipeline_mode = #tpu.pipeline_mode<synchronous>, transform_indices = @transform_2, window_bounds = array<i64: 64, 1>}, {pipeline_mode = #tpu.pipeline_mode<synchronous>, transform_indices = @transform_3, window_bounds = array<i64: 64, 1>}, {pipeline_mode = #tpu.pipeline_mode<synchronous>, transform_indices = @transform_4, window_bounds = array<i64: 64, 64>}, {transform_indices = @transform_5, window_bounds = array<i64: 2, 64, 256>}, {transform_indices = @transform_6, window_bounds = array<i64: 1, 64, 128>}, {transform_indices = @transform_7, window_bounds = array<i64: 1, 64, 128>}]} {
    %c0_i32 = arith.constant 0 : i32
    %0 = arith.cmpi eq, %arg1, %c0_i32 : i32
    %1 = arith.extui %0 : i1 to i32
    %c0_i32_0 = arith.constant 0 : i32
    %2 = arith.cmpi ne, %1, %c0_i32_0 : i32
    scf.if %2 {
      %cst_38 = arith.constant 0.000000e+00 : f32
      %65 = vector.broadcast %cst_38 : f32 to vector<1x64x128xf32>
      %c0_39 = arith.constant 0 : index
      %c0_40 = arith.constant 0 : index
      %c0_41 = arith.constant 0 : index
      %66 = vector.load %arg8[%c0_39, %c0_40, %c0_41] : memref<1x64x128xf32, #tpu.memory_space<vmem>>, vector<1x64x128xf32>
      tpu.vector_store %arg8[%c0_39, %c0_40, %c0_41], %65 {strides = array<i32>} : memref<1x64x128xf32, #tpu.memory_space<vmem>>, vector<1x64x128xf32>,
      %cst_42 = arith.constant 0.000000e+00 : f32
      %67 = vector.broadcast %cst_42 : f32 to vector<1x64x128xf32>
      %c0_43 = arith.constant 0 : index
      %c0_44 = arith.constant 0 : index
      %c0_45 = arith.constant 0 : index
      %68 = vector.load %arg9[%c0_43, %c0_44, %c0_45] : memref<1x64x128xf32, #tpu.memory_space<vmem>>, vector<1x64x128xf32>
      tpu.vector_store %arg9[%c0_43, %c0_44, %c0_45], %67 {strides = array<i32>} : memref<1x64x128xf32, #tpu.memory_space<vmem>>, vector<1x64x128xf32>,
    } else {
    }
    %c0 = arith.constant 0 : index
    %c0_1 = arith.constant 0 : index
    %3 = vector.load %arg3[%c0, %c0_1] : memref<64x96xbf16, #tpu.memory_space<vmem>>, vector<64x96xbf16>
    %c0_2 = arith.constant 0 : index
    %c0_3 = arith.constant 0 : index
    %4 = vector.load %arg6[%c0_2, %c0_3] : memref<64x64xbf16, #tpu.memory_space<vmem>>, vector<64x64xbf16>
    %c0_4 = arith.constant 0 : index
    %c0_5 = arith.constant 0 : index
    %5 = vector.load %arg4[%c0_4, %c0_5] : memref<64x1xf32, #tpu.memory_space<vmem>>, vector<64x1xf32>
    %c0_6 = arith.constant 0 : index
    %c0_7 = arith.constant 0 : index
    %6 = vector.load %arg5[%c0_6, %c0_7] : memref<64x1xf32, #tpu.memory_space<vmem>>, vector<64x1xf32>
    %cst = arith.constant 0.000000e+00 : f32
    %7 = vector.broadcast %cst : f32 to vector<64x128xf32>
    %cst_8 = arith.constant 0.000000e+00 : f32
    %8 = vector.broadcast %cst_8 : f32 to vector<64x128xf32>
    %c0_9 = arith.constant 0 : index
    %c0_10 = arith.constant 0 : index
    %c0_11 = arith.constant 0 : index
    %9 = vector.load %arg2[%c0_9, %c0_10, %c0_11] : memref<2x96x256xbf16, #tpu.memory_space<vmem>>, vector<1x96x256xbf16>
    %10 = vector.shape_cast %9 : vector<1x96x256xbf16> to vector<96x256xbf16>
    %cst_12 = arith.constant dense<0.000000e+00> : vector<64x256xf32>
    %11 = tpu.matmul %3, %10, %cst_12 {dimension_numbers = #tpu.dot_dimension_numbers<[1], [0], [0], [1], [0, 0, 1, 1], [], []>} : vector<64x96xbf16>, vector<96x256xbf16>, vector<64x256xf32> -> vector<64x256xf32>
    %12 = vector.broadcast %5 : vector<64x1xf32> to vector<64x256xf32>
    %13 = arith.mulf %11, %12 : vector<64x256xf32>
    %14 = vector.broadcast %6 : vector<64x1xf32> to vector<64x256xf32>
    %15 = arith.addf %13, %14 : vector<64x256xf32>
    %cst_13 = arith.constant 0.000000e+00 : f32
    %16 = vector.broadcast %cst_13 : f32 to vector<64x256xf32>
    %17 = arith.maximumf %15, %16 : vector<64x256xf32>
    %18 = arith.truncf %17 : vector<64x256xf32> to vector<64x256xbf16>
    %c0_14 = arith.constant 0 : index
    %c0_15 = arith.constant 0 : index
    %c0_16 = arith.constant 0 : index
    %19 = vector.load %arg7[%c0_14, %c0_15, %c0_16] : memref<2x64x256xbf16, #tpu.memory_space<vmem>>, vector<1x64x256xbf16>
    %20 = vector.shape_cast %19 : vector<1x64x256xbf16> to vector<64x256xbf16>
    %21 = vector.shape_cast %18 : vector<64x256xbf16> to vector<1x64x256xbf16>
    tpu.vector_store %arg7[%c0_14, %c0_15, %c0_16], %21 {strides = array<i32>} : memref<2x64x256xbf16, #tpu.memory_space<vmem>>, vector<1x64x256xbf16>,
    %cst_17 = arith.constant dense<0.000000e+00> : vector<64x256xf32>
    %22 = tpu.matmul %4, %18, %cst_17 {dimension_numbers = #tpu.dot_dimension_numbers<[1], [0], [0], [1], [0, 0, 1, 1], [], []>} : vector<64x64xbf16>, vector<64x256xbf16>, vector<64x256xf32> -> vector<64x256xf32>
    %23 = vector.extract_strided_slice %22 {offsets = [0, 0], sizes = [64, 128], strides = [1, 1]} : vector<64x256xf32> to vector<64x128xf32>
    %24 = arith.mulf %23, %23 : vector<64x128xf32>
    %25 = vector.extract_strided_slice %22 {offsets = [0, 128], sizes = [64, 128], strides = [1, 1]} : vector<64x256xf32> to vector<64x128xf32>
    %26 = arith.addf %23, %25 : vector<64x128xf32>
    %27 = arith.mulf %25, %25 : vector<64x128xf32>
    %28 = arith.addf %24, %27 : vector<64x128xf32>
    %29 = arith.addf %7, %26 : vector<64x128xf32>
    %30 = arith.addf %8, %28 : vector<64x128xf32>
    %c1 = arith.constant 1 : index
    %c0_18 = arith.constant 0 : index
    %c0_19 = arith.constant 0 : index
    %31 = vector.load %arg2[%c1, %c0_18, %c0_19] : memref<2x96x256xbf16, #tpu.memory_space<vmem>>, vector<1x96x256xbf16>
    %32 = vector.shape_cast %31 : vector<1x96x256xbf16> to vector<96x256xbf16>
    %cst_20 = arith.constant dense<0.000000e+00> : vector<64x256xf32>
    %33 = tpu.matmul %3, %32, %cst_20 {dimension_numbers = #tpu.dot_dimension_numbers<[1], [0], [0], [1], [0, 0, 1, 1], [], []>} : vector<64x96xbf16>, vector<96x256xbf16>, vector<64x256xf32> -> vector<64x256xf32>
    %34 = vector.broadcast %5 : vector<64x1xf32> to vector<64x256xf32>
    %35 = arith.mulf %33, %34 : vector<64x256xf32>
    %36 = vector.broadcast %6 : vector<64x1xf32> to vector<64x256xf32>
    %37 = arith.addf %35, %36 : vector<64x256xf32>
    %cst_21 = arith.constant 0.000000e+00 : f32
    %38 = vector.broadcast %cst_21 : f32 to vector<64x256xf32>
    %39 = arith.maximumf %37, %38 : vector<64x256xf32>
    %40 = arith.truncf %39 : vector<64x256xf32> to vector<64x256xbf16>
    %c1_22 = arith.constant 1 : index
    %c0_23 = arith.constant 0 : index
    %c0_24 = arith.constant 0 : index
    %41 = vector.load %arg7[%c1_22, %c0_23, %c0_24] : memref<2x64x256xbf16, #tpu.memory_space<vmem>>, vector<1x64x256xbf16>
    %42 = vector.shape_cast %41 : vector<1x64x256xbf16> to vector<64x256xbf16>
    %43 = vector.shape_cast %40 : vector<64x256xbf16> to vector<1x64x256xbf16>
    tpu.vector_store %arg7[%c1_22, %c0_23, %c0_24], %43 {strides = array<i32>} : memref<2x64x256xbf16, #tpu.memory_space<vmem>>, vector<1x64x256xbf16>,
    %cst_25 = arith.constant dense<0.000000e+00> : vector<64x256xf32>
    %44 = tpu.matmul %4, %40, %cst_25 {dimension_numbers = #tpu.dot_dimension_numbers<[1], [0], [0], [1], [0, 0, 1, 1], [], []>} : vector<64x64xbf16>, vector<64x256xbf16>, vector<64x256xf32> -> vector<64x256xf32>
    %45 = vector.extract_strided_slice %44 {offsets = [0, 0], sizes = [64, 128], strides = [1, 1]} : vector<64x256xf32> to vector<64x128xf32>
    %46 = arith.mulf %45, %45 : vector<64x128xf32>
    %47 = vector.extract_strided_slice %44 {offsets = [0, 128], sizes = [64, 128], strides = [1, 1]} : vector<64x256xf32> to vector<64x128xf32>
    %48 = arith.addf %45, %47 : vector<64x128xf32>
    %49 = arith.mulf %47, %47 : vector<64x128xf32>
    %50 = arith.addf %46, %49 : vector<64x128xf32>
    %51 = arith.addf %29, %48 : vector<64x128xf32>
    %52 = arith.addf %30, %50 : vector<64x128xf32>
    %c0_26 = arith.constant 0 : index
    %c0_27 = arith.constant 0 : index
    %c0_28 = arith.constant 0 : index
    %53 = vector.load %arg8[%c0_26, %c0_27, %c0_28] : memref<1x64x128xf32, #tpu.memory_space<vmem>>, vector<1x64x128xf32>
    %54 = vector.shape_cast %53 : vector<1x64x128xf32> to vector<64x128xf32>
    %55 = arith.addf %54, %51 : vector<64x128xf32>
    %c0_29 = arith.constant 0 : index
    %c0_30 = arith.constant 0 : index
    %c0_31 = arith.constant 0 : index
    %56 = vector.load %arg8[%c0_29, %c0_30, %c0_31] : memref<1x64x128xf32, #tpu.memory_space<vmem>>, vector<1x64x128xf32>
    %57 = vector.shape_cast %56 : vector<1x64x128xf32> to vector<64x128xf32>
    %58 = vector.shape_cast %55 : vector<64x128xf32> to vector<1x64x128xf32>
    tpu.vector_store %arg8[%c0_29, %c0_30, %c0_31], %58 {strides = array<i32>} : memref<1x64x128xf32, #tpu.memory_space<vmem>>, vector<1x64x128xf32>,
    %c0_32 = arith.constant 0 : index
    %c0_33 = arith.constant 0 : index
    %c0_34 = arith.constant 0 : index
    %59 = vector.load %arg9[%c0_32, %c0_33, %c0_34] : memref<1x64x128xf32, #tpu.memory_space<vmem>>, vector<1x64x128xf32>
    %60 = vector.shape_cast %59 : vector<1x64x128xf32> to vector<64x128xf32>
    %61 = arith.addf %60, %52 : vector<64x128xf32>
    %c0_35 = arith.constant 0 : index
    %c0_36 = arith.constant 0 : index
    %c0_37 = arith.constant 0 : index
    %62 = vector.load %arg9[%c0_35, %c0_36, %c0_37] : memref<1x64x128xf32, #tpu.memory_space<vmem>>, vector<1x64x128xf32>
    %63 = vector.shape_cast %62 : vector<1x64x128xf32> to vector<64x128xf32>
    %64 = vector.shape_cast %61 : vector<64x128xf32> to vector<1x64x128xf32>
    tpu.vector_store %arg9[%c0_35, %c0_36, %c0_37], %64 {strides = array<i32>} : memref<1x64x128xf32, #tpu.memory_space<vmem>>, vector<1x64x128xf32>,
    return
  }
  func.func @transform_0(%arg0: i32, %arg1: i32) -> (i32, i32, i32) {
    %c1_i32 = arith.constant 1 : i32
    %0 = arith.muli %arg0, %c1_i32 : i32
    %1 = arith.addi %0, %arg1 : i32
    %c0_i32 = arith.constant 0 : i32
    %c0_i32_0 = arith.constant 0 : i32
    %c0_i32_1 = arith.constant 0 : i32
    return %c0_i32, %c0_i32_0, %1 : i32, i32, i32
  }
  func.func @transform_1(%arg0: i32, %arg1: i32) -> (i32, i32) {
    %c0_i32 = arith.constant 0 : i32
    %c0_i32_0 = arith.constant 0 : i32
    %c0_i32_1 = arith.constant 0 : i32
    return %c0_i32, %c0_i32_0 : i32, i32
  }
  func.func @transform_2(%arg0: i32, %arg1: i32) -> (i32, i32) {
    %c0_i32 = arith.constant 0 : i32
    %c0_i32_0 = arith.constant 0 : i32
    %c0_i32_1 = arith.constant 0 : i32
    return %c0_i32, %c0_i32_0 : i32, i32
  }
  func.func @transform_3(%arg0: i32, %arg1: i32) -> (i32, i32) {
    %c0_i32 = arith.constant 0 : i32
    %c0_i32_0 = arith.constant 0 : i32
    %c0_i32_1 = arith.constant 0 : i32
    return %c0_i32, %c0_i32_0 : i32, i32
  }
  func.func @transform_4(%arg0: i32, %arg1: i32) -> (i32, i32) {
    %c0_i32 = arith.constant 0 : i32
    %c0_i32_0 = arith.constant 0 : i32
    %c0_i32_1 = arith.constant 0 : i32
    return %c0_i32, %c0_i32_0 : i32, i32
  }
  func.func @transform_5(%arg0: i32, %arg1: i32) -> (i32, i32, i32) {
    %c1_i32 = arith.constant 1 : i32
    %0 = arith.muli %arg0, %c1_i32 : i32
    %1 = arith.addi %0, %arg1 : i32
    %c0_i32 = arith.constant 0 : i32
    %c0_i32_0 = arith.constant 0 : i32
    %c0_i32_1 = arith.constant 0 : i32
    return %c0_i32, %c0_i32_0, %1 : i32, i32, i32
  }
  func.func @transform_6(%arg0: i32, %arg1: i32) -> (i32, i32, i32) {
    %c0_i32 = arith.constant 0 : i32
    %c0_i32_0 = arith.constant 0 : i32
    %c0_i32_1 = arith.constant 0 : i32
    return %arg0, %c0_i32, %c0_i32_0 : i32, i32, i32
  }
  func.func @transform_7(%arg0: i32, %arg1: i32) -> (i32, i32, i32) {
    %c0_i32 = arith.constant 0 : i32
    %c0_i32_0 = arith.constant 0 : i32
    %c0_i32_1 = arith.constant 0 : i32
    return %arg0, %c0_i32, %c0_i32_0 : i32, i32, i32
  }
}

module attributes {stable_mosaic.version = 11 : i64} {
  func.func @mid_kernel(%arg0: i32, %arg1: i32, %arg2: memref<2x64x256xbf16, #tpu.memory_space<vmem>>, %arg3: memref<64x64xbf16, #tpu.memory_space<vmem>>, %arg4: memref<64x1xf32, #tpu.memory_space<vmem>>, %arg5: memref<64x1xf32, #tpu.memory_space<vmem>>, %arg6: memref<96x64xbf16, #tpu.memory_space<vmem>>, %arg7: memref<2x64x256xbf16, #tpu.memory_space<vmem>>, %arg8: memref<1x96x128xf32, #tpu.memory_space<vmem>>, %arg9: memref<1x96x128xf32, #tpu.memory_space<vmem>>) attributes {dimension_semantics = [#tpu.dimension_semantics<parallel>, #tpu.dimension_semantics<arbitrary>], iteration_bounds = array<i64: 1, 1>, scalar_prefetch = 0 : i64, scratch_operands = 0 : i64, tpu.core_type = #tpu.core_type<tc>, window_params = [{transform_indices = @transform_0, window_bounds = array<i64: 2, 64, 256>}, {pipeline_mode = #tpu.pipeline_mode<synchronous>, transform_indices = @transform_1, window_bounds = array<i64: 64, 64>}, {pipeline_mode = #tpu.pipeline_mode<synchronous>, transform_indices = @transform_2, window_bounds = array<i64: 64, 1>}, {pipeline_mode = #tpu.pipeline_mode<synchronous>, transform_indices = @transform_3, window_bounds = array<i64: 64, 1>}, {pipeline_mode = #tpu.pipeline_mode<synchronous>, transform_indices = @transform_4, window_bounds = array<i64: 96, 64>}, {transform_indices = @transform_5, window_bounds = array<i64: 2, 64, 256>}, {transform_indices = @transform_6, window_bounds = array<i64: 1, 96, 128>}, {transform_indices = @transform_7, window_bounds = array<i64: 1, 96, 128>}]} {
    %c0_i32 = arith.constant 0 : i32
    %0 = arith.cmpi eq, %arg1, %c0_i32 : i32
    %1 = arith.extui %0 : i1 to i32
    %c0_i32_0 = arith.constant 0 : i32
    %2 = arith.cmpi ne, %1, %c0_i32_0 : i32
    scf.if %2 {
      %cst_38 = arith.constant 0.000000e+00 : f32
      %65 = vector.broadcast %cst_38 : f32 to vector<1x96x128xf32>
      %c0_39 = arith.constant 0 : index
      %c0_40 = arith.constant 0 : index
      %c0_41 = arith.constant 0 : index
      %66 = vector.load %arg8[%c0_39, %c0_40, %c0_41] : memref<1x96x128xf32, #tpu.memory_space<vmem>>, vector<1x96x128xf32>
      tpu.vector_store %arg8[%c0_39, %c0_40, %c0_41], %65 {strides = array<i32>} : memref<1x96x128xf32, #tpu.memory_space<vmem>>, vector<1x96x128xf32>,
      %cst_42 = arith.constant 0.000000e+00 : f32
      %67 = vector.broadcast %cst_42 : f32 to vector<1x96x128xf32>
      %c0_43 = arith.constant 0 : index
      %c0_44 = arith.constant 0 : index
      %c0_45 = arith.constant 0 : index
      %68 = vector.load %arg9[%c0_43, %c0_44, %c0_45] : memref<1x96x128xf32, #tpu.memory_space<vmem>>, vector<1x96x128xf32>
      tpu.vector_store %arg9[%c0_43, %c0_44, %c0_45], %67 {strides = array<i32>} : memref<1x96x128xf32, #tpu.memory_space<vmem>>, vector<1x96x128xf32>,
    } else {
    }
    %c0 = arith.constant 0 : index
    %c0_1 = arith.constant 0 : index
    %3 = vector.load %arg3[%c0, %c0_1] : memref<64x64xbf16, #tpu.memory_space<vmem>>, vector<64x64xbf16>
    %c0_2 = arith.constant 0 : index
    %c0_3 = arith.constant 0 : index
    %4 = vector.load %arg6[%c0_2, %c0_3] : memref<96x64xbf16, #tpu.memory_space<vmem>>, vector<96x64xbf16>
    %c0_4 = arith.constant 0 : index
    %c0_5 = arith.constant 0 : index
    %5 = vector.load %arg4[%c0_4, %c0_5] : memref<64x1xf32, #tpu.memory_space<vmem>>, vector<64x1xf32>
    %c0_6 = arith.constant 0 : index
    %c0_7 = arith.constant 0 : index
    %6 = vector.load %arg5[%c0_6, %c0_7] : memref<64x1xf32, #tpu.memory_space<vmem>>, vector<64x1xf32>
    %cst = arith.constant 0.000000e+00 : f32
    %7 = vector.broadcast %cst : f32 to vector<96x128xf32>
    %cst_8 = arith.constant 0.000000e+00 : f32
    %8 = vector.broadcast %cst_8 : f32 to vector<96x128xf32>
    %c0_9 = arith.constant 0 : index
    %c0_10 = arith.constant 0 : index
    %c0_11 = arith.constant 0 : index
    %9 = vector.load %arg2[%c0_9, %c0_10, %c0_11] : memref<2x64x256xbf16, #tpu.memory_space<vmem>>, vector<1x64x256xbf16>
    %10 = vector.shape_cast %9 : vector<1x64x256xbf16> to vector<64x256xbf16>
    %cst_12 = arith.constant dense<0.000000e+00> : vector<64x256xf32>
    %11 = tpu.matmul %3, %10, %cst_12 {dimension_numbers = #tpu.dot_dimension_numbers<[1], [0], [0], [1], [0, 0, 1, 1], [], []>} : vector<64x64xbf16>, vector<64x256xbf16>, vector<64x256xf32> -> vector<64x256xf32>
    %12 = vector.broadcast %5 : vector<64x1xf32> to vector<64x256xf32>
    %13 = arith.mulf %11, %12 : vector<64x256xf32>
    %14 = vector.broadcast %6 : vector<64x1xf32> to vector<64x256xf32>
    %15 = arith.addf %13, %14 : vector<64x256xf32>
    %cst_13 = arith.constant 0.000000e+00 : f32
    %16 = vector.broadcast %cst_13 : f32 to vector<64x256xf32>
    %17 = arith.maximumf %15, %16 : vector<64x256xf32>
    %18 = arith.truncf %17 : vector<64x256xf32> to vector<64x256xbf16>
    %c0_14 = arith.constant 0 : index
    %c0_15 = arith.constant 0 : index
    %c0_16 = arith.constant 0 : index
    %19 = vector.load %arg7[%c0_14, %c0_15, %c0_16] : memref<2x64x256xbf16, #tpu.memory_space<vmem>>, vector<1x64x256xbf16>
    %20 = vector.shape_cast %19 : vector<1x64x256xbf16> to vector<64x256xbf16>
    %21 = vector.shape_cast %18 : vector<64x256xbf16> to vector<1x64x256xbf16>
    tpu.vector_store %arg7[%c0_14, %c0_15, %c0_16], %21 {strides = array<i32>} : memref<2x64x256xbf16, #tpu.memory_space<vmem>>, vector<1x64x256xbf16>,
    %cst_17 = arith.constant dense<0.000000e+00> : vector<96x256xf32>
    %22 = tpu.matmul %4, %18, %cst_17 {dimension_numbers = #tpu.dot_dimension_numbers<[1], [0], [0], [1], [0, 0, 1, 1], [], []>} : vector<96x64xbf16>, vector<64x256xbf16>, vector<96x256xf32> -> vector<96x256xf32>
    %23 = vector.extract_strided_slice %22 {offsets = [0, 0], sizes = [96, 128], strides = [1, 1]} : vector<96x256xf32> to vector<96x128xf32>
    %24 = arith.mulf %23, %23 : vector<96x128xf32>
    %25 = vector.extract_strided_slice %22 {offsets = [0, 128], sizes = [96, 128], strides = [1, 1]} : vector<96x256xf32> to vector<96x128xf32>
    %26 = arith.addf %23, %25 : vector<96x128xf32>
    %27 = arith.mulf %25, %25 : vector<96x128xf32>
    %28 = arith.addf %24, %27 : vector<96x128xf32>
    %29 = arith.addf %7, %26 : vector<96x128xf32>
    %30 = arith.addf %8, %28 : vector<96x128xf32>
    %c1 = arith.constant 1 : index
    %c0_18 = arith.constant 0 : index
    %c0_19 = arith.constant 0 : index
    %31 = vector.load %arg2[%c1, %c0_18, %c0_19] : memref<2x64x256xbf16, #tpu.memory_space<vmem>>, vector<1x64x256xbf16>
    %32 = vector.shape_cast %31 : vector<1x64x256xbf16> to vector<64x256xbf16>
    %cst_20 = arith.constant dense<0.000000e+00> : vector<64x256xf32>
    %33 = tpu.matmul %3, %32, %cst_20 {dimension_numbers = #tpu.dot_dimension_numbers<[1], [0], [0], [1], [0, 0, 1, 1], [], []>} : vector<64x64xbf16>, vector<64x256xbf16>, vector<64x256xf32> -> vector<64x256xf32>
    %34 = vector.broadcast %5 : vector<64x1xf32> to vector<64x256xf32>
    %35 = arith.mulf %33, %34 : vector<64x256xf32>
    %36 = vector.broadcast %6 : vector<64x1xf32> to vector<64x256xf32>
    %37 = arith.addf %35, %36 : vector<64x256xf32>
    %cst_21 = arith.constant 0.000000e+00 : f32
    %38 = vector.broadcast %cst_21 : f32 to vector<64x256xf32>
    %39 = arith.maximumf %37, %38 : vector<64x256xf32>
    %40 = arith.truncf %39 : vector<64x256xf32> to vector<64x256xbf16>
    %c1_22 = arith.constant 1 : index
    %c0_23 = arith.constant 0 : index
    %c0_24 = arith.constant 0 : index
    %41 = vector.load %arg7[%c1_22, %c0_23, %c0_24] : memref<2x64x256xbf16, #tpu.memory_space<vmem>>, vector<1x64x256xbf16>
    %42 = vector.shape_cast %41 : vector<1x64x256xbf16> to vector<64x256xbf16>
    %43 = vector.shape_cast %40 : vector<64x256xbf16> to vector<1x64x256xbf16>
    tpu.vector_store %arg7[%c1_22, %c0_23, %c0_24], %43 {strides = array<i32>} : memref<2x64x256xbf16, #tpu.memory_space<vmem>>, vector<1x64x256xbf16>,
    %cst_25 = arith.constant dense<0.000000e+00> : vector<96x256xf32>
    %44 = tpu.matmul %4, %40, %cst_25 {dimension_numbers = #tpu.dot_dimension_numbers<[1], [0], [0], [1], [0, 0, 1, 1], [], []>} : vector<96x64xbf16>, vector<64x256xbf16>, vector<96x256xf32> -> vector<96x256xf32>
    %45 = vector.extract_strided_slice %44 {offsets = [0, 0], sizes = [96, 128], strides = [1, 1]} : vector<96x256xf32> to vector<96x128xf32>
    %46 = arith.mulf %45, %45 : vector<96x128xf32>
    %47 = vector.extract_strided_slice %44 {offsets = [0, 128], sizes = [96, 128], strides = [1, 1]} : vector<96x256xf32> to vector<96x128xf32>
    %48 = arith.addf %45, %47 : vector<96x128xf32>
    %49 = arith.mulf %47, %47 : vector<96x128xf32>
    %50 = arith.addf %46, %49 : vector<96x128xf32>
    %51 = arith.addf %29, %48 : vector<96x128xf32>
    %52 = arith.addf %30, %50 : vector<96x128xf32>
    %c0_26 = arith.constant 0 : index
    %c0_27 = arith.constant 0 : index
    %c0_28 = arith.constant 0 : index
    %53 = vector.load %arg8[%c0_26, %c0_27, %c0_28] : memref<1x96x128xf32, #tpu.memory_space<vmem>>, vector<1x96x128xf32>
    %54 = vector.shape_cast %53 : vector<1x96x128xf32> to vector<96x128xf32>
    %55 = arith.addf %54, %51 : vector<96x128xf32>
    %c0_29 = arith.constant 0 : index
    %c0_30 = arith.constant 0 : index
    %c0_31 = arith.constant 0 : index
    %56 = vector.load %arg8[%c0_29, %c0_30, %c0_31] : memref<1x96x128xf32, #tpu.memory_space<vmem>>, vector<1x96x128xf32>
    %57 = vector.shape_cast %56 : vector<1x96x128xf32> to vector<96x128xf32>
    %58 = vector.shape_cast %55 : vector<96x128xf32> to vector<1x96x128xf32>
    tpu.vector_store %arg8[%c0_29, %c0_30, %c0_31], %58 {strides = array<i32>} : memref<1x96x128xf32, #tpu.memory_space<vmem>>, vector<1x96x128xf32>,
    %c0_32 = arith.constant 0 : index
    %c0_33 = arith.constant 0 : index
    %c0_34 = arith.constant 0 : index
    %59 = vector.load %arg9[%c0_32, %c0_33, %c0_34] : memref<1x96x128xf32, #tpu.memory_space<vmem>>, vector<1x96x128xf32>
    %60 = vector.shape_cast %59 : vector<1x96x128xf32> to vector<96x128xf32>
    %61 = arith.addf %60, %52 : vector<96x128xf32>
    %c0_35 = arith.constant 0 : index
    %c0_36 = arith.constant 0 : index
    %c0_37 = arith.constant 0 : index
    %62 = vector.load %arg9[%c0_35, %c0_36, %c0_37] : memref<1x96x128xf32, #tpu.memory_space<vmem>>, vector<1x96x128xf32>
    %63 = vector.shape_cast %62 : vector<1x96x128xf32> to vector<96x128xf32>
    %64 = vector.shape_cast %61 : vector<96x128xf32> to vector<1x96x128xf32>
    tpu.vector_store %arg9[%c0_35, %c0_36, %c0_37], %64 {strides = array<i32>} : memref<1x96x128xf32, #tpu.memory_space<vmem>>, vector<1x96x128xf32>,
    return
  }
  func.func @transform_0(%arg0: i32, %arg1: i32) -> (i32, i32, i32) {
    %c1_i32 = arith.constant 1 : i32
    %0 = arith.muli %arg0, %c1_i32 : i32
    %1 = arith.addi %0, %arg1 : i32
    %c0_i32 = arith.constant 0 : i32
    %c0_i32_0 = arith.constant 0 : i32
    %c0_i32_1 = arith.constant 0 : i32
    return %c0_i32, %c0_i32_0, %1 : i32, i32, i32
  }
  func.func @transform_1(%arg0: i32, %arg1: i32) -> (i32, i32) {
    %c0_i32 = arith.constant 0 : i32
    %c0_i32_0 = arith.constant 0 : i32
    %c0_i32_1 = arith.constant 0 : i32
    return %c0_i32, %c0_i32_0 : i32, i32
  }
  func.func @transform_2(%arg0: i32, %arg1: i32) -> (i32, i32) {
    %c0_i32 = arith.constant 0 : i32
    %c0_i32_0 = arith.constant 0 : i32
    %c0_i32_1 = arith.constant 0 : i32
    return %c0_i32, %c0_i32_0 : i32, i32
  }
  func.func @transform_3(%arg0: i32, %arg1: i32) -> (i32, i32) {
    %c0_i32 = arith.constant 0 : i32
    %c0_i32_0 = arith.constant 0 : i32
    %c0_i32_1 = arith.constant 0 : i32
    return %c0_i32, %c0_i32_0 : i32, i32
  }
  func.func @transform_4(%arg0: i32, %arg1: i32) -> (i32, i32) {
    %c0_i32 = arith.constant 0 : i32
    %c0_i32_0 = arith.constant 0 : i32
    %c0_i32_1 = arith.constant 0 : i32
    return %c0_i32, %c0_i32_0 : i32, i32
  }
  func.func @transform_5(%arg0: i32, %arg1: i32) -> (i32, i32, i32) {
    %c1_i32 = arith.constant 1 : i32
    %0 = arith.muli %arg0, %c1_i32 : i32
    %1 = arith.addi %0, %arg1 : i32
    %c0_i32 = arith.constant 0 : i32
    %c0_i32_0 = arith.constant 0 : i32
    %c0_i32_1 = arith.constant 0 : i32
    return %c0_i32, %c0_i32_0, %1 : i32, i32, i32
  }
  func.func @transform_6(%arg0: i32, %arg1: i32) -> (i32, i32, i32) {
    %c0_i32 = arith.constant 0 : i32
    %c0_i32_0 = arith.constant 0 : i32
    %c0_i32_1 = arith.constant 0 : i32
    return %arg0, %c0_i32, %c0_i32_0 : i32, i32, i32
  }
  func.func @transform_7(%arg0: i32, %arg1: i32) -> (i32, i32, i32) {
    %c0_i32 = arith.constant 0 : i32
    %c0_i32_0 = arith.constant 0 : i32
    %c0_i32_1 = arith.constant 0 : i32
    return %arg0, %c0_i32, %c0_i32_0 : i32, i32, i32
  }
}

module attributes {stable_mosaic.version = 11 : i64} {
  func.func @tail_kernel(%arg0: i32, %arg1: i32, %arg2: memref<2x64x256xbf16, #tpu.memory_space<vmem>>, %arg3: memref<96x64xbf16, #tpu.memory_space<vmem>>, %arg4: memref<96x1xf32, #tpu.memory_space<vmem>>, %arg5: memref<96x1xf32, #tpu.memory_space<vmem>>, %arg6: memref<128x96xbf16, #tpu.memory_space<vmem>>, %arg7: memref<128x1xf32, #tpu.memory_space<vmem>>, %arg8: memref<2x128x256xf32, #tpu.memory_space<vmem>>) attributes {dimension_semantics = [#tpu.dimension_semantics<parallel>, #tpu.dimension_semantics<parallel>], iteration_bounds = array<i64: 1, 1>, scalar_prefetch = 0 : i64, scratch_operands = 0 : i64, tpu.core_type = #tpu.core_type<tc>, window_params = [{transform_indices = @transform_0, window_bounds = array<i64: 2, 64, 256>}, {pipeline_mode = #tpu.pipeline_mode<synchronous>, transform_indices = @transform_1, window_bounds = array<i64: 96, 64>}, {pipeline_mode = #tpu.pipeline_mode<synchronous>, transform_indices = @transform_2, window_bounds = array<i64: 96, 1>}, {pipeline_mode = #tpu.pipeline_mode<synchronous>, transform_indices = @transform_3, window_bounds = array<i64: 96, 1>}, {pipeline_mode = #tpu.pipeline_mode<synchronous>, transform_indices = @transform_4, window_bounds = array<i64: 128, 96>}, {pipeline_mode = #tpu.pipeline_mode<synchronous>, transform_indices = @transform_5, window_bounds = array<i64: 128, 1>}, {transform_indices = @transform_6, window_bounds = array<i64: 2, 128, 256>}]} {
    %c0 = arith.constant 0 : index
    %c0_0 = arith.constant 0 : index
    %0 = vector.load %arg3[%c0, %c0_0] : memref<96x64xbf16, #tpu.memory_space<vmem>>, vector<96x64xbf16>
    %c0_1 = arith.constant 0 : index
    %c0_2 = arith.constant 0 : index
    %1 = vector.load %arg6[%c0_1, %c0_2] : memref<128x96xbf16, #tpu.memory_space<vmem>>, vector<128x96xbf16>
    %c0_3 = arith.constant 0 : index
    %c0_4 = arith.constant 0 : index
    %2 = vector.load %arg4[%c0_3, %c0_4] : memref<96x1xf32, #tpu.memory_space<vmem>>, vector<96x1xf32>
    %c0_5 = arith.constant 0 : index
    %c0_6 = arith.constant 0 : index
    %3 = vector.load %arg5[%c0_5, %c0_6] : memref<96x1xf32, #tpu.memory_space<vmem>>, vector<96x1xf32>
    %c0_7 = arith.constant 0 : index
    %c0_8 = arith.constant 0 : index
    %4 = vector.load %arg7[%c0_7, %c0_8] : memref<128x1xf32, #tpu.memory_space<vmem>>, vector<128x1xf32>
    %c0_9 = arith.constant 0 : index
    %c0_10 = arith.constant 0 : index
    %c0_11 = arith.constant 0 : index
    %5 = vector.load %arg2[%c0_9, %c0_10, %c0_11] : memref<2x64x256xbf16, #tpu.memory_space<vmem>>, vector<1x64x256xbf16>
    %6 = vector.shape_cast %5 : vector<1x64x256xbf16> to vector<64x256xbf16>
    %cst = arith.constant dense<0.000000e+00> : vector<96x256xf32>
    %7 = tpu.matmul %0, %6, %cst {dimension_numbers = #tpu.dot_dimension_numbers<[1], [0], [0], [1], [0, 0, 1, 1], [], []>} : vector<96x64xbf16>, vector<64x256xbf16>, vector<96x256xf32> -> vector<96x256xf32>
    %8 = vector.broadcast %2 : vector<96x1xf32> to vector<96x256xf32>
    %9 = arith.mulf %7, %8 : vector<96x256xf32>
    %10 = vector.broadcast %3 : vector<96x1xf32> to vector<96x256xf32>
    %11 = arith.addf %9, %10 : vector<96x256xf32>
    %cst_12 = arith.constant 0.000000e+00 : f32
    %12 = vector.broadcast %cst_12 : f32 to vector<96x256xf32>
    %13 = arith.maximumf %11, %12 : vector<96x256xf32>
    %14 = arith.truncf %13 : vector<96x256xf32> to vector<96x256xbf16>
    %cst_13 = arith.constant dense<0.000000e+00> : vector<128x256xf32>
    %15 = tpu.matmul %1, %14, %cst_13 {dimension_numbers = #tpu.dot_dimension_numbers<[1], [0], [0], [1], [0, 0, 1, 1], [], []>} : vector<128x96xbf16>, vector<96x256xbf16>, vector<128x256xf32> -> vector<128x256xf32>
    %16 = vector.broadcast %4 : vector<128x1xf32> to vector<128x256xf32>
    %17 = arith.addf %15, %16 : vector<128x256xf32>
    %c0_14 = arith.constant 0 : index
    %c0_15 = arith.constant 0 : index
    %c0_16 = arith.constant 0 : index
    %18 = vector.load %arg8[%c0_14, %c0_15, %c0_16] : memref<2x128x256xf32, #tpu.memory_space<vmem>>, vector<1x128x256xf32>
    %19 = vector.shape_cast %18 : vector<1x128x256xf32> to vector<128x256xf32>
    %20 = vector.shape_cast %17 : vector<128x256xf32> to vector<1x128x256xf32>
    tpu.vector_store %arg8[%c0_14, %c0_15, %c0_16], %20 {strides = array<i32>} : memref<2x128x256xf32, #tpu.memory_space<vmem>>, vector<1x128x256xf32>,
    %c1 = arith.constant 1 : index
    %c0_17 = arith.constant 0 : index
    %c0_18 = arith.constant 0 : index
    %21 = vector.load %arg2[%c1, %c0_17, %c0_18] : memref<2x64x256xbf16, #tpu.memory_space<vmem>>, vector<1x64x256xbf16>
    %22 = vector.shape_cast %21 : vector<1x64x256xbf16> to vector<64x256xbf16>
    %cst_19 = arith.constant dense<0.000000e+00> : vector<96x256xf32>
    %23 = tpu.matmul %0, %22, %cst_19 {dimension_numbers = #tpu.dot_dimension_numbers<[1], [0], [0], [1], [0, 0, 1, 1], [], []>} : vector<96x64xbf16>, vector<64x256xbf16>, vector<96x256xf32> -> vector<96x256xf32>
    %24 = vector.broadcast %2 : vector<96x1xf32> to vector<96x256xf32>
    %25 = arith.mulf %23, %24 : vector<96x256xf32>
    %26 = vector.broadcast %3 : vector<96x1xf32> to vector<96x256xf32>
    %27 = arith.addf %25, %26 : vector<96x256xf32>
    %cst_20 = arith.constant 0.000000e+00 : f32
    %28 = vector.broadcast %cst_20 : f32 to vector<96x256xf32>
    %29 = arith.maximumf %27, %28 : vector<96x256xf32>
    %30 = arith.truncf %29 : vector<96x256xf32> to vector<96x256xbf16>
    %cst_21 = arith.constant dense<0.000000e+00> : vector<128x256xf32>
    %31 = tpu.matmul %1, %30, %cst_21 {dimension_numbers = #tpu.dot_dimension_numbers<[1], [0], [0], [1], [0, 0, 1, 1], [], []>} : vector<128x96xbf16>, vector<96x256xbf16>, vector<128x256xf32> -> vector<128x256xf32>
    %32 = vector.broadcast %4 : vector<128x1xf32> to vector<128x256xf32>
    %33 = arith.addf %31, %32 : vector<128x256xf32>
    %c1_22 = arith.constant 1 : index
    %c0_23 = arith.constant 0 : index
    %c0_24 = arith.constant 0 : index
    %34 = vector.load %arg8[%c1_22, %c0_23, %c0_24] : memref<2x128x256xf32, #tpu.memory_space<vmem>>, vector<1x128x256xf32>
    %35 = vector.shape_cast %34 : vector<1x128x256xf32> to vector<128x256xf32>
    %36 = vector.shape_cast %33 : vector<128x256xf32> to vector<1x128x256xf32>
    tpu.vector_store %arg8[%c1_22, %c0_23, %c0_24], %36 {strides = array<i32>} : memref<2x128x256xf32, #tpu.memory_space<vmem>>, vector<1x128x256xf32>,
    return
  }
  func.func @transform_0(%arg0: i32, %arg1: i32) -> (i32, i32, i32) {
    %c1_i32 = arith.constant 1 : i32
    %0 = arith.muli %arg0, %c1_i32 : i32
    %1 = arith.addi %0, %arg1 : i32
    %c0_i32 = arith.constant 0 : i32
    %c0_i32_0 = arith.constant 0 : i32
    %c0_i32_1 = arith.constant 0 : i32
    return %c0_i32, %c0_i32_0, %1 : i32, i32, i32
  }
  func.func @transform_1(%arg0: i32, %arg1: i32) -> (i32, i32) {
    %c0_i32 = arith.constant 0 : i32
    %c0_i32_0 = arith.constant 0 : i32
    %c0_i32_1 = arith.constant 0 : i32
    return %c0_i32, %c0_i32_0 : i32, i32
  }
  func.func @transform_2(%arg0: i32, %arg1: i32) -> (i32, i32) {
    %c0_i32 = arith.constant 0 : i32
    %c0_i32_0 = arith.constant 0 : i32
    %c0_i32_1 = arith.constant 0 : i32
    return %c0_i32, %c0_i32_0 : i32, i32
  }
  func.func @transform_3(%arg0: i32, %arg1: i32) -> (i32, i32) {
    %c0_i32 = arith.constant 0 : i32
    %c0_i32_0 = arith.constant 0 : i32
    %c0_i32_1 = arith.constant 0 : i32
    return %c0_i32, %c0_i32_0 : i32, i32
  }
  func.func @transform_4(%arg0: i32, %arg1: i32) -> (i32, i32) {
    %c0_i32 = arith.constant 0 : i32
    %c0_i32_0 = arith.constant 0 : i32
    %c0_i32_1 = arith.constant 0 : i32
    return %c0_i32, %c0_i32_0 : i32, i32
  }
  func.func @transform_5(%arg0: i32, %arg1: i32) -> (i32, i32) {
    %c0_i32 = arith.constant 0 : i32
    %c0_i32_0 = arith.constant 0 : i32
    %c0_i32_1 = arith.constant 0 : i32
    return %c0_i32, %c0_i32_0 : i32, i32
  }
  func.func @transform_6(%arg0: i32, %arg1: i32) -> (i32, i32, i32) {
    %c1_i32 = arith.constant 1 : i32
    %0 = arith.muli %arg0, %c1_i32 : i32
    %1 = arith.addi %0, %arg1 : i32
    %c0_i32 = arith.constant 0 : i32
    %c0_i32_0 = arith.constant 0 : i32
    %c0_i32_1 = arith.constant 0 : i32
    return %c0_i32, %c0_i32_0, %1 : i32, i32, i32
  }
}

</mosaic_0001>

<llo_original>
// kernel: resnet18_autoencoder_forward.5
$region0: #{resnet18_autoencoder_forward.5}
  #allocation0 [shape = 'u32[]', space=smem, size = 0x4, offset = 0x4, fixed_abs, tag = 'smem constant byte address 0x4 - core index']
  #allocation1 [shape = 'u32[144,128]{1,0:T(1,128)}', space=vmem, size = 0x12000, scoped, tag = 'internal scratch']
  %s0 = inlined_call_operand.vmem [shape: bf16[2,128,256], index: 0, kind: input, shape index: {}]
  %s1 = inlined_call_operand.vmem [shape: bf16[96,128], index: 1, kind: input, shape index: {}]
  %s2 = inlined_call_operand.vmem [shape: f32[1,96,128], index: 2, kind: output, shape index: {0}]
  %s3 = inlined_call_operand.vmem [shape: f32[1,96,128], index: 3, kind: output, shape index: {1}]
  %4 = xla_tuple %s2, %s3
  %s5 = sld [smem:[#allocation0]]
  $region30: #{resnet18_autoencoder_forward.5} parent=0
    _
  %s7 = ssub.s32 1, %s5
  %s8 = scalar_select 0, %s7, %s5
  // Predicated region
  $region2: #{resnet18_autoencoder_forward.5} parent=0 // pred_check
    _
  $region3: #{resnet18_autoencoder_forward.5} parent=0 // pred_check_branch
    %10 = sbr.rel (0) target = $region5
  $region4: #{resnet18_autoencoder_forward.5} parent=0 // pred_region
    %s11 = sadd.s32 0, 0
    %s12 = smul.u32 2, %s11
    %p13 = scmp.lt.s32.totalorder %s12, 1
    %s14 = scalar_select %p13, %s12, 1
    %s15 = smul.addr %s14, 4
    %s16 = scalar_lea.vmem %s0, %s15
    %s17 = sadd.s32 0, 0
    %s18 = smul.u32 2, %s17
  $region5: #{resnet18_autoencoder_forward.5} parent=0 // pred_fallthru
    _
  // Predicated region
  $region6: #{resnet18_autoencoder_forward.5} parent=0 // pred_check
    _
  $region7: #{resnet18_autoencoder_forward.5} parent=0 // pred_check_branch
    %20 = sbr.rel (0) target = $region9
  $region8: #{resnet18_autoencoder_forward.5} parent=0 // pred_region
    _
  $region9: #{resnet18_autoencoder_forward.5} parent=0 // pred_fallthru
    _
  %s21 = sadd.s32 0, 0
  %s22 = smul.u32 2, %s21
  %p23 = scmp.lt.s32.totalorder %s22, 1
  %s24 = scalar_select %p23, %s22, 1
  %s25 = smul.addr %s24, 4
  %s26 = scalar_lea.vmem %s0, %s25
  %s27 = sadd.s32 0, 0
  %s28 = smul.u32 2, %s27
  %p29 = scmp.lt.s32.totalorder %s28, 1
  %s30 = scalar_select %p29, %s28, 1
  %s31 = smul.addr %s30, 4
  %s32 = scalar_lea.vmem %s0, %s31
  %s33 = sadd.s32 0, 0
  %s34 = smul.u32 2, %s33
  %p36 = scmp.eq.s32.totalorder 0, 0
  // Predicated region
  $region10: #{resnet18_autoencoder_forward.5} parent=0 // pred_check
    %p37 = pneg %p36
  $region11: #{resnet18_autoencoder_forward.5} parent=0 // pred_check_branch
    %39 = sbr.rel (%p37) target = $region13
  $region12: #{resnet18_autoencoder_forward.5} parent=0 // pred_region
    %40 = vst [vmem:[%s2] sm:$0xff] 0.0
    %41 = vst [vmem:[%s2 + $0x8] sm:$0xff] 0.0
    %42 = vst [vmem:[%s2 + $0x10] sm:$0xff] 0.0
    %43 = vst [vmem:[%s2 + $0x18] sm:$0xff] 0.0
    %44 = vst [vmem:[%s2 + $0x20] sm:$0xff] 0.0
    %45 = vst [vmem:[%s2 + $0x28] sm:$0xff] 0.0
    %46 = vst [vmem:[%s2 + $0x30] sm:$0xff] 0.0
    %47 = vst [vmem:[%s2 + $0x38] sm:$0xff] 0.0
    %48 = vst [vmem:[%s2 + $0x40] sm:$0xff] 0.0
    %49 = vst [vmem:[%s2 + $0x48] sm:$0xff] 0.0
    %50 = vst [vmem:[%s2 + $0x50] sm:$0xff] 0.0
    %51 = vst [vmem:[%s2 + $0x58] sm:$0xff] 0.0
    %52 = vst [vmem:[%s3] sm:$0xff] 0.0
    %53 = vst [vmem:[%s3 + $0x8] sm:$0xff] 0.0
    %54 = vst [vmem:[%s3 + $0x10] sm:$0xff] 0.0
    %55 = vst [vmem:[%s3 + $0x18] sm:$0xff] 0.0
    %56 = vst [vmem:[%s3 + $0x20] sm:$0xff] 0.0
    %57 = vst [vmem:[%s3 + $0x28] sm:$0xff] 0.0
    %58 = vst [vmem:[%s3 + $0x30] sm:$0xff] 0.0
    %59 = vst [vmem:[%s3 + $0x38] sm:$0xff] 0.0
    %60 = vst [vmem:[%s3 + $0x40] sm:$0xff] 0.0
    %61 = vst [vmem:[%s3 + $0x48] sm:$0xff] 0.0
    %62 = vst [vmem:[%s3 + $0x50] sm:$0xff] 0.0
    %63 = vst [vmem:[%s3 + $0x58] sm:$0xff] 0.0
  $region13: #{resnet18_autoencoder_forward.5} parent=0 // pred_fallthru
    _
  %v64 = vld [vmem:[%s1] sm:$0xf]
  %v65 = vld [vmem:[%s1 + $0x4] sm:$0xf]
  %v66 = vld [vmem:[%s1 + $0x8] sm:$0xf]
  %v67 = vld [vmem:[%s1 + $0xc] sm:$0xf]
  %v68 = vld [vmem:[%s1 + $0x10] sm:$0xf]
  %v69 = vld [vmem:[%s1 + $0x14] sm:$0xf]
  %v70 = vld [vmem:[%s1 + $0x18] sm:$0xf]
  %v71 = vld [vmem:[%s1 + $0x1c] sm:$0xf]
  %v72 = vld [vmem:[%s1 + $0x20] sm:$0xf]
  %v73 = vld [vmem:[%s1 + $0x24] sm:$0xf]
  %v74 = vld [vmem:[%s1 + $0x28] sm:$0xf]
  %v75 = vld [vmem:[%s1 + $0x2c] sm:$0xf]
  %v76 = vld [vmem:[%s32] sm:$0xff]
  %v77 = vld [vmem:[%s32 + $0x8] sm:$0xff]
  %v78 = vld [vmem:[%s32 + $0x10] sm:$0xff]
  %v79 = vld [vmem:[%s32 + $0x18] sm:$0xff]
  %v80 = vld [vmem:[%s32 + $0x20] sm:$0xff]
  %v81 = vld [vmem:[%s32 + $0x28] sm:$0xff]
  %v82 = vld [vmem:[%s32 + $0x30] sm:$0xff]
  %v83 = vld [vmem:[%s32 + $0x38] sm:$0xff]
  %v84 = vld [vmem:[%s32 + $0x40] sm:$0xff]
  %v85 = vld [vmem:[%s32 + $0x48] sm:$0xff]
  %v86 = vld [vmem:[%s32 + $0x50] sm:$0xff]
  %v87 = vld [vmem:[%s32 + $0x58] sm:$0xff]
  %v88 = vld [vmem:[%s32 + $0x60] sm:$0xff]
  %v89 = vld [vmem:[%s32 + $0x68] sm:$0xff]
  %v90 = vld [vmem:[%s32 + $0x70] sm:$0xff]
  %v91 = vld [vmem:[%s32 + $0x78] sm:$0xff]
  %v104 = vunpack.c.l.b16 %v64
  %v105 = vunpack.c.l.b16 %v65
  %v106 = vunpack.c.l.b16 %v66
  %v107 = vunpack.c.l.b16 %v67
  %v108 = vunpack.c.l.b16 %v68
  %v109 = vunpack.c.l.b16 %v69
  %v110 = vunpack.c.l.b16 %v70
  %v111 = vunpack.c.l.b16 %v71
  %v112 = vunpack.c.l.b16 %v72
  %v113 = vunpack.c.l.b16 %v73
  %v114 = vunpack.c.l.b16 %v74
  %v115 = vunpack.c.l.b16 %v75
  %v116 = vpack.c.b16 %v105, %v104
  %v117 = vpack.c.b16 %v107, %v106
  %v118 = vpack.c.b16 %v109, %v108
  %v119 = vpack.c.b16 %v111, %v110
  %v120 = vpack.c.b16 %v113, %v112
  %v121 = vpack.c.b16 %v115, %v114
  %v144 = vunpack.c.l.b16 %v76
  %v145 = vunpack.c.h.b16 %v76
  %v146 = vunpack.c.l.b16 %v77
  %v147 = vunpack.c.h.b16 %v77
  %v148 = vunpack.c.l.b16 %v78
  %v149 = vunpack.c.h.b16 %v78
  %v150 = vunpack.c.l.b16 %v79
  %v151 = vunpack.c.h.b16 %v79
  %v152 = vunpack.c.l.b16 %v80
  %v153 = vunpack.c.h.b16 %v80
  %v154 = vunpack.c.l.b16 %v81
  %v155 = vunpack.c.h.b16 %v81
  %v156 = vunpack.c.l.b16 %v82
  %v157 = vunpack.c.h.b16 %v82
  %v158 = vunpack.c.l.b16 %v83
  %v159 = vunpack.c.h.b16 %v83
  %v160 = vunpack.c.l.b16 %v84
  %v161 = vunpack.c.h.b16 %v84
  %v162 = vunpack.c.l.b16 %v85
  %v163 = vunpack.c.h.b16 %v85
  %v164 = vunpack.c.l.b16 %v86
  %v165 = vunpack.c.h.b16 %v86
  %v166 = vunpack.c.l.b16 %v87
  %v167 = vunpack.c.h.b16 %v87
  %v168 = vunpack.c.l.b16 %v88
  %v169 = vunpack.c.h.b16 %v88
  %v170 = vunpack.c.l.b16 %v89
  %v171 = vunpack.c.h.b16 %v89
  %v172 = vunpack.c.l.b16 %v90
  %v173 = vunpack.c.h.b16 %v90
  %v174 = vunpack.c.l.b16 %v91
  %v175 = vunpack.c.h.b16 %v91
  %v176 = vpack.c.b16 %v146, %v144
  %v177 = vpack.c.b16 %v147, %v145
  %v178 = vpack.c.b16 %v150, %v148
  %v179 = vpack.c.b16 %v151, %v149
  %v180 = vpack.c.b16 %v154, %v152
  %v181 = vpack.c.b16 %v155, %v153
  %v182 = vpack.c.b16 %v158, %v156
  %v183 = vpack.c.b16 %v159, %v157
  %v184 = vpack.c.b16 %v162, %v160
  %v185 = vpack.c.b16 %v163, %v161
  %v186 = vpack.c.b16 %v166, %v164
  %v187 = vpack.c.b16 %v167, %v165
  %v188 = vpack.c.b16 %v170, %v168
  %v189 = vpack.c.b16 %v171, %v169
  %v190 = vpack.c.b16 %v174, %v172
  %v191 = vpack.c.b16 %v175, %v173
  %208 = vmatprep.subr.bf16.mxu0 %v177
  %209 = vmatpush1.bf16.msra.mxu0 %v176
  %210 = vmatprep.subr.bf16.mxu0 %v179
  %211 = vmatpush1.bf16.msra.mxu0 %v178
  %212 = vmatprep.subr.bf16.mxu0 %v181
  %213 = vmatpush1.bf16.msra.mxu0 %v180
  %214 = vmatprep.subr.bf16.mxu0 %v183
  %215 = vmatpush1.bf16.msra.mxu0 %v182
  %216 = vmatprep.subr.bf16.mxu0 %v185
  %217 = vmatpush1.bf16.msra.mxu0 %v184
  %218 = vmatprep.subr.bf16.mxu0 %v187
  %219 = vmatpush1.bf16.msra.mxu0 %v186
  %220 = vmatprep.subr.bf16.mxu0 %v189
  %221 = vmatpush1.bf16.msra.mxu0 %v188
  %222 = vmatprep.subr.bf16.mxu0 %v191
  %223 = vmatpush1.bf16.msra.mxu0 %v190
  %224 = vmatprep.subr.bf16.mxu0 0
  %225 = vmatpush1.bf16.msra.mxu0 0
  %226 = vmatprep.subr.bf16.mxu0 0
  %227 = vmatpush1.bf16.msra.mxu0 0
  %228 = vmatprep.subr.bf16.mxu0 0
  %229 = vmatpush1.bf16.msra.mxu0 0
  %230 = vmatprep.subr.bf16.mxu0 0
  %231 = vmatpush1.bf16.msra.mxu0 0
  %232 = vmatprep.subr.bf16.mxu0 0
  %233 = vmatpush1.bf16.msra.mxu0 0
  %234 = vmatprep.subr.bf16.mxu0 0
  %235 = vmatpush1.bf16.msra.mxu0 0
  %236 = vmatprep.subr.bf16.mxu0 0
  %237 = vmatpush1.bf16.msra.mxu0 0
  %238 = vmatprep.subr.bf16.mxu0 0
  %239 = vmatpush1.bf16.msra.mxu0 0
  %240 = vmatprep.mubr.bf16.mxu0 0
  %241 = vmatmul.mubr.bf16.gmra.mrb[0].mxu0 %v116
  %v242 = vpop.f32.mrb[0].mxu0
  %v243 = vadd.f32 0.0, %v242
  %v244 = vpop.f32.mrb[0].mxu0
  %v245 = vadd.f32 0.0, %v244
  %v246 = vpop.f32.mrb[0].mxu0
  %v247 = vadd.f32 0.0, %v246
  %v248 = vpop.f32.mrb[0].mxu0
  %v249 = vadd.f32 0.0, %v248
  %250 = vmatprep.mubr.bf16.mxu0 0
  %251 = vmatmul.mubr.bf16.gmra.mrb[0].mxu0 %v117
  %v252 = vpop.f32.mrb[0].mxu0
  %v253 = vadd.f32 0.0, %v252
  %v254 = vpop.f32.mrb[0].mxu0
  %v255 = vadd.f32 0.0, %v254
  %v256 = vpop.f32.mrb[0].mxu0
  %v257 = vadd.f32 0.0, %v256
  %v258 = vpop.f32.mrb[0].mxu0
  %v259 = vadd.f32 0.0, %v258
  %260 = vmatprep.mubr.bf16.mxu0 0
  %261 = vmatmul.mubr.bf16.gmra.mrb[0].mxu0 %v118
  %v262 = vpop.f32.mrb[0].mxu0
  %v263 = vadd.f32 0.0, %v262
  %v264 = vpop.f32.mrb[0].mxu0
  %v265 = vadd.f32 0.0, %v264
  %v266 = vpop.f32.mrb[0].mxu0
  %v267 = vadd.f32 0.0, %v266
  %v268 = vpop.f32.mrb[0].mxu0
  %v269 = vadd.f32 0.0, %v268
  %270 = vmatprep.mubr.bf16.mxu0 0
  %271 = vmatmul.mubr.bf16.gmra.mrb[0].mxu0 %v119
  %v272 = vpop.f32.mrb[0].mxu0
  %v273 = vadd.f32 0.0, %v272
  %v274 = vpop.f32.mrb[0].mxu0
  %v275 = vadd.f32 0.0, %v274
  %v276 = vpop.f32.mrb[0].mxu0
  %v277 = vadd.f32 0.0, %v276
  %v278 = vpop.f32.mrb[0].mxu0
  %v279 = vadd.f32 0.0, %v278
  %280 = vmatprep.mubr.bf16.mxu0 0
  %281 = vmatmul.mubr.bf16.gmra.mrb[0].mxu0 %v120
  %v282 = vpop.f32.mrb[0].mxu0
  %v283 = vadd.f32 0.0, %v282
  %v284 = vpop.f32.mrb[0].mxu0
  %v285 = vadd.f32 0.0, %v284
  %v286 = vpop.f32.mrb[0].mxu0
  %v287 = vadd.f32 0.0, %v286
  %v288 = vpop.f32.mrb[0].mxu0
  %v289 = vadd.f32 0.0, %v288
  %290 = vmatprep.mubr.bf16.mxu0 0
  %291 = vmatmul.mubr.bf16.gmra.mrb[0].mxu0 %v121
  %v292 = vpop.f32.mrb[0].mxu0
  %v293 = vadd.f32 0.0, %v292
  %v294 = vpop.f32.mrb[0].mxu0
  %v295 = vadd.f32 0.0, %v294
  %v296 = vpop.f32.mrb[0].mxu0
  %v297 = vadd.f32 0.0, %v296
  %v298 = vpop.f32.mrb[0].mxu0
  %v299 = vadd.f32 0.0, %v298
  %300 = vdwg.mxu0
  %v301 = vmul.f32 %v243, %v243
  %v302 = vmul.f32 %v247, %v247
  %v303 = vmul.f32 %v253, %v253
  %v304 = vmul.f32 %v257, %v257
  %v305 = vmul.f32 %v263, %v263
  %v306 = vmul.f32 %v267, %v267
  %v307 = vmul.f32 %v273, %v273
  %v308 = vmul.f32 %v277, %v277
  %v309 = vmul.f32 %v283, %v283
  %v310 = vmul.f32 %v287, %v287
  %v311 = vmul.f32 %v293, %v293
  %v312 = vmul.f32 %v297, %v297
  %v313 = vadd.f32 %v243, %v245
  %v314 = vadd.f32 %v247, %v249
  %v315 = vadd.f32 %v253, %v255
  %v316 = vadd.f32 %v257, %v259
  %v317 = vadd.f32 %v263, %v265
  %v318 = vadd.f32 %v267, %v269
  %v319 = vadd.f32 %v273, %v275
  %v320 = vadd.f32 %v277, %v279
  %v321 = vadd.f32 %v283, %v285
  %v322 = vadd.f32 %v287, %v289
  %v323 = vadd.f32 %v293, %v295
  %v324 = vadd.f32 %v297, %v299
  %v325 = vmul.f32 %v245, %v245
  %v326 = vmul.f32 %v249, %v249
  %v327 = vmul.f32 %v255, %v255
  %v328 = vmul.f32 %v259, %v259
  %v329 = vmul.f32 %v265, %v265
  %v330 = vmul.f32 %v269, %v269
  %v331 = vmul.f32 %v275, %v275
  %v332 = vmul.f32 %v279, %v279
  %v333 = vmul.f32 %v285, %v285
  %v334 = vmul.f32 %v289, %v289
  %v335 = vmul.f32 %v295, %v295
  %v336 = vmul.f32 %v299, %v299
  %v337 = vadd.f32 %v301, %v325
  %v338 = vadd.f32 %v302, %v326
  %v339 = vadd.f32 %v303, %v327
  %v340 = vadd.f32 %v304, %v328
  %v341 = vadd.f32 %v305, %v329
  %v342 = vadd.f32 %v306, %v330
  %v343 = vadd.f32 %v307, %v331
  %v344 = vadd.f32 %v308, %v332
  %v345 = vadd.f32 %v309, %v333
  %v346 = vadd.f32 %v310, %v334
  %v347 = vadd.f32 %v311, %v335
  %v348 = vadd.f32 %v312, %v336
  %v349 = vadd.f32 %v313, 0.0
  %v350 = vadd.f32 %v314, 0.0
  %v351 = vadd.f32 %v315, 0.0
  %v352 = vadd.f32 %v316, 0.0
  %v353 = vadd.f32 %v317, 0.0
  %v354 = vadd.f32 %v318, 0.0
  %v355 = vadd.f32 %v319, 0.0
  %v356 = vadd.f32 %v320, 0.0
  %v357 = vadd.f32 %v321, 0.0
  %v358 = vadd.f32 %v322, 0.0
  %v359 = vadd.f32 %v323, 0.0
  %v360 = vadd.f32 %v324, 0.0
  %v361 = vadd.f32 %v337, 0.0
  %v362 = vadd.f32 %v338, 0.0
  %v363 = vadd.f32 %v339, 0.0
  %v364 = vadd.f32 %v340, 0.0
  %v365 = vadd.f32 %v341, 0.0
  %v366 = vadd.f32 %v342, 0.0
  %v367 = vadd.f32 %v343, 0.0
  %v368 = vadd.f32 %v344, 0.0
  %v369 = vadd.f32 %v345, 0.0
  %v370 = vadd.f32 %v346, 0.0
  %v371 = vadd.f32 %v347, 0.0
  %v372 = vadd.f32 %v348, 0.0
  %s373 = scalar_lea.vmem %s32, 128
  %v374 = vld [vmem:[%s373] sm:$0xff]
  %v375 = vld [vmem:[%s373 + $0x8] sm:$0xff]
  %v376 = vld [vmem:[%s373 + $0x10] sm:$0xff]
  %v377 = vld [vmem:[%s373 + $0x18] sm:$0xff]
  %v378 = vld [vmem:[%s373 + $0x20] sm:$0xff]
  %v379 = vld [vmem:[%s373 + $0x28] sm:$0xff]
  %v380 = vld [vmem:[%s373 + $0x30] sm:$0xff]
  %v381 = vld [vmem:[%s373 + $0x38] sm:$0xff]
  %v382 = vld [vmem:[%s373 + $0x40] sm:$0xff]
  %v383 = vld [vmem:[%s373 + $0x48] sm:$0xff]
  %v384 = vld [vmem:[%s373 + $0x50] sm:$0xff]
  %v385 = vld [vmem:[%s373 + $0x58] sm:$0xff]
  %v386 = vld [vmem:[%s373 + $0x60] sm:$0xff]
  %v387 = vld [vmem:[%s373 + $0x68] sm:$0xff]
  %v388 = vld [vmem:[%s373 + $0x70] sm:$0xff]
  %v389 = vld [vmem:[%s373 + $0x78] sm:$0xff]
  %v406 = vunpack.c.l.b16 %v374
  %v407 = vunpack.c.h.b16 %v374
  %v408 = vunpack.c.l.b16 %v375
  %v409 = vunpack.c.h.b16 %v375
  %v410 = vunpack.c.l.b16 %v376
  %v411 = vunpack.c.h.b16 %v376
  %v412 = vunpack.c.l.b16 %v377
  %v413 = vunpack.c.h.b16 %v377
  %v414 = vunpack.c.l.b16 %v378
  %v415 = vunpack.c.h.b16 %v378
  %v416 = vunpack.c.l.b16 %v379
  %v417 = vunpack.c.h.b16 %v379
  %v418 = vunpack.c.l.b16 %v380
  %v419 = vunpack.c.h.b16 %v380
  %v420 = vunpack.c.l.b16 %v381
  %v421 = vunpack.c.h.b16 %v381
  %v422 = vunpack.c.l.b16 %v382
  %v423 = vunpack.c.h.b16 %v382
  %v424 = vunpack.c.l.b16 %v383
  %v425 = vunpack.c.h.b16 %v383
  %v426 = vunpack.c.l.b16 %v384
  %v427 = vunpack.c.h.b16 %v384
  %v428 = vunpack.c.l.b16 %v385
  %v429 = vunpack.c.h.b16 %v385
  %v430 = vunpack.c.l.b16 %v386
  %v431 = vunpack.c.h.b16 %v386
  %v432 = vunpack.c.l.b16 %v387
  %v433 = vunpack.c.h.b16 %v387
  %v434 = vunpack.c.l.b16 %v388
  %v435 = vunpack.c.h.b16 %v388
  %v436 = vunpack.c.l.b16 %v389
  %v437 = vunpack.c.h.b16 %v389
  %v438 = vpack.c.b16 %v408, %v406
  %v439 = vpack.c.b16 %v409, %v407
  %v440 = vpack.c.b16 %v412, %v410
  %v441 = vpack.c.b16 %v413, %v411
  %v442 = vpack.c.b16 %v416, %v414
  %v443 = vpack.c.b16 %v417, %v415
  %v444 = vpack.c.b16 %v420, %v418
  %v445 = vpack.c.b16 %v421, %v419
  %v446 = vpack.c.b16 %v424, %v422
  %v447 = vpack.c.b16 %v425, %v423
  %v448 = vpack.c.b16 %v428, %v426
  %v449 = vpack.c.b16 %v429, %v427
  %v450 = vpack.c.b16 %v432, %v430
  %v451 = vpack.c.b16 %v433, %v431
  %v452 = vpack.c.b16 %v436, %v434
  %v453 = vpack.c.b16 %v437, %v435
  %470 = vmatprep.subr.bf16.mxu0 %v439
  %471 = vmatpush1.bf16.msra.mxu0 %v438
  %472 = vmatprep.subr.bf16.mxu0 %v441
  %473 = vmatpush1.bf16.msra.mxu0 %v440
  %474 = vmatprep.subr.bf16.mxu0 %v443
  %475 = vmatpush1.bf16.msra.mxu0 %v442
  %476 = vmatprep.subr.bf16.mxu0 %v445
  %477 = vmatpush1.bf16.msra.mxu0 %v444
  %478 = vmatprep.subr.bf16.mxu0 %v447
  %479 = vmatpush1.bf16.msra.mxu0 %v446
  %480 = vmatprep.subr.bf16.mxu0 %v449
  %481 = vmatpush1.bf16.msra.mxu0 %v448
  %482 = vmatprep.subr.bf16.mxu0 %v451
  %483 = vmatpush1.bf16.msra.mxu0 %v450
  %484 = vmatprep.subr.bf16.mxu0 %v453
  %485 = vmatpush1.bf16.msra.mxu0 %v452
  %486 = vmatprep.subr.bf16.mxu0 0
  %487 = vmatpush1.bf16.msra.mxu0 0
  %488 = vmatprep.subr.bf16.mxu0 0
  %489 = vmatpush1.bf16.msra.mxu0 0
  %490 = vmatprep.subr.bf16.mxu0 0
  %491 = vmatpush1.bf16.msra.mxu0 0
  %492 = vmatprep.subr.bf16.mxu0 0
  %493 = vmatpush1.bf16.msra.mxu0 0
  %494 = vmatprep.subr.bf16.mxu0 0
  %495 = vmatpush1.bf16.msra.mxu0 0
  %496 = vmatprep.subr.bf16.mxu0 0
  %497 = vmatpush1.bf16.msra.mxu0 0
  %498 = vmatprep.subr.bf16.mxu0 0
  %499 = vmatpush1.bf16.msra.mxu0 0
  %500 = vmatprep.subr.bf16.mxu0 0
  %501 = vmatpush1.bf16.msra.mxu0 0
  %502 = vmatprep.mubr.bf16.mxu0 0
  %503 = vmatmul.mubr.bf16.gmra.mrb[0].mxu0 %v116
  %v504 = vpop.f32.mrb[0].mxu0
  %v505 = vadd.f32 0.0, %v504
  %v506 = vpop.f32.mrb[0].mxu0
  %v507 = vadd.f32 0.0, %v506
  %v508 = vpop.f32.mrb[0].mxu0
  %v509 = vadd.f32 0.0, %v508
  %v510 = vpop.f32.mrb[0].mxu0
  %v511 = vadd.f32 0.0, %v510
  %512 = vmatprep.mubr.bf16.mxu0 0
  %513 = vmatmul.mubr.bf16.gmra.mrb[0].mxu0 %v117
  %v514 = vpop.f32.mrb[0].mxu0
  %v515 = vadd.f32 0.0, %v514
  %v516 = vpop.f32.mrb[0].mxu0
  %v517 = vadd.f32 0.0, %v516
  %v518 = vpop.f32.mrb[0].mxu0
  %v519 = vadd.f32 0.0, %v518
  %v520 = vpop.f32.mrb[0].mxu0
  %v521 = vadd.f32 0.0, %v520
  %522 = vmatprep.mubr.bf16.mxu0 0
  %523 = vmatmul.mubr.bf16.gmra.mrb[0].mxu0 %v118
  %v524 = vpop.f32.mrb[0].mxu0
  %v525 = vadd.f32 0.0, %v524
  %v526 = vpop.f32.mrb[0].mxu0
  %v527 = vadd.f32 0.0, %v526
  %v528 = vpop.f32.mrb[0].mxu0
  %v529 = vadd.f32 0.0, %v528
  %v530 = vpop.f32.mrb[0].mxu0
  %v531 = vadd.f32 0.0, %v530
  %532 = vmatprep.mubr.bf16.mxu0 0
  %533 = vmatmul.mubr.bf16.gmra.mrb[0].mxu0 %v119
  %v534 = vpop.f32.mrb[0].mxu0
  %v535 = vadd.f32 0.0, %v534
  %v536 = vpop.f32.mrb[0].mxu0
  %v537 = vadd.f32 0.0, %v536
  %v538 = vpop.f32.mrb[0].mxu0
  %v539 = vadd.f32 0.0, %v538
  %v540 = vpop.f32.mrb[0].mxu0
  %v541 = vadd.f32 0.0, %v540
  %542 = vmatprep.mubr.bf16.mxu0 0
  %543 = vmatmul.mubr.bf16.gmra.mrb[0].mxu0 %v120
  %v544 = vpop.f32.mrb[0].mxu0
  %v545 = vadd.f32 0.0, %v544
  %v546 = vpop.f32.mrb[0].mxu0
  %v547 = vadd.f32 0.0, %v546
  %v548 = vpop.f32.mrb[0].mxu0
  %v549 = vadd.f32 0.0, %v548
  %v550 = vpop.f32.mrb[0].mxu0
  %v551 = vadd.f32 0.0, %v550
  %552 = vmatprep.mubr.bf16.mxu0 0
  %553 = vmatmul.mubr.bf16.gmra.mrb[0].mxu0 %v121
  %v554 = vpop.f32.mrb[0].mxu0
  %v555 = vadd.f32 0.0, %v554
  %v556 = vpop.f32.mrb[0].mxu0
  %v557 = vadd.f32 0.0, %v556
  %v558 = vpop.f32.mrb[0].mxu0
  %v559 = vadd.f32 0.0, %v558
  %v560 = vpop.f32.mrb[0].mxu0
  %v561 = vadd.f32 0.0, %v560
  %562 = vdwg.mxu0
  %v563 = vmul.f32 %v505, %v505
  %v564 = vmul.f32 %v509, %v509
  %v565 = vmul.f32 %v515, %v515
  %v566 = vmul.f32 %v519, %v519
  %v567 = vmul.f32 %v525, %v525
  %v568 = vmul.f32 %v529, %v529
  %v569 = vmul.f32 %v535, %v535
  %v570 = vmul.f32 %v539, %v539
  %v571 = vmul.f32 %v545, %v545
  %v572 = vmul.f32 %v549, %v549
  %v573 = vmul.f32 %v555, %v555
  %v574 = vmul.f32 %v559, %v559
  %v575 = vadd.f32 %v505, %v507
  %v576 = vadd.f32 %v509, %v511
  %v577 = vadd.f32 %v515, %v517
  %v578 = vadd.f32 %v519, %v521
  %v579 = vadd.f32 %v525, %v527
  %v580 = vadd.f32 %v529, %v531
  %v581 = vadd.f32 %v535, %v537
  %v582 = vadd.f32 %v539, %v541
  %v583 = vadd.f32 %v545, %v547
  %v584 = vadd.f32 %v549, %v551
  %v585 = vadd.f32 %v555, %v557
  %v586 = vadd.f32 %v559, %v561
  %v587 = vmul.f32 %v507, %v507
  %v588 = vmul.f32 %v511, %v511
  %v589 = vmul.f32 %v517, %v517
  %v590 = vmul.f32 %v521, %v521
  %v591 = vmul.f32 %v527, %v527
  %v592 = vmul.f32 %v531, %v531
  %v593 = vmul.f32 %v537, %v537
  %v594 = vmul.f32 %v541, %v541
  %v595 = vmul.f32 %v547, %v547
  %v596 = vmul.f32 %v551, %v551
  %v597 = vmul.f32 %v557, %v557
  %v598 = vmul.f32 %v561, %v561
  %v599 = vadd.f32 %v563, %v587
  %v600 = vadd.f32 %v564, %v588
  %v601 = vadd.f32 %v565, %v589
  %v602 = vadd.f32 %v566, %v590
  %v603 = vadd.f32 %v567, %v591
  %v604 = vadd.f32 %v568, %v592
  %v605 = vadd.f32 %v569, %v593
  %v606 = vadd.f32 %v570, %v594
  %v607 = vadd.f32 %v571, %v595
  %v608 = vadd.f32 %v572, %v596
  %v609 = vadd.f32 %v573, %v597
  %v610 = vadd.f32 %v574, %v598
  %v611 = vadd.f32 %v349, %v575
  %v612 = vadd.f32 %v350, %v576
  %v613 = vadd.f32 %v351, %v577
  %v614 = vadd.f32 %v352, %v578
  %v615 = vadd.f32 %v353, %v579
  %v616 = vadd.f32 %v354, %v580
  %v617 = vadd.f32 %v355, %v581
  %v618 = vadd.f32 %v356, %v582
  %v619 = vadd.f32 %v357, %v583
  %v620 = vadd.f32 %v358, %v584
  %v621 = vadd.f32 %v359, %v585
  %v622 = vadd.f32 %v360, %v586
  %v623 = vadd.f32 %v361, %v599
  %v624 = vadd.f32 %v362, %v600
  %v625 = vadd.f32 %v363, %v601
  %v626 = vadd.f32 %v364, %v602
  %v627 = vadd.f32 %v365, %v603
  %v628 = vadd.f32 %v366, %v604
  %v629 = vadd.f32 %v367, %v605
  %v630 = vadd.f32 %v368, %v606
  %v631 = vadd.f32 %v369, %v607
  %v632 = vadd.f32 %v370, %v608
  %v633 = vadd.f32 %v371, %v609
  %v634 = vadd.f32 %v372, %v610
  %v635 = vld [vmem:[%s2] sm:$0xff]
  %v636 = vld [vmem:[%s2 + $0x8] sm:$0xff]
  %v637 = vld [vmem:[%s2 + $0x10] sm:$0xff]
  %v638 = vld [vmem:[%s2 + $0x18] sm:$0xff]
  %v639 = vld [vmem:[%s2 + $0x20] sm:$0xff]
  %v640 = vld [vmem:[%s2 + $0x28] sm:$0xff]
  %v641 = vld [vmem:[%s2 + $0x30] sm:$0xff]
  %v642 = vld [vmem:[%s2 + $0x38] sm:$0xff]
  %v643 = vld [vmem:[%s2 + $0x40] sm:$0xff]
  %v644 = vld [vmem:[%s2 + $0x48] sm:$0xff]
  %v645 = vld [vmem:[%s2 + $0x50] sm:$0xff]
  %v646 = vld [vmem:[%s2 + $0x58] sm:$0xff]
  %v647 = vadd.f32 %v635, %v611
  %v648 = vadd.f32 %v636, %v612
  %v649 = vadd.f32 %v637, %v613
  %v650 = vadd.f32 %v638, %v614
  %v651 = vadd.f32 %v639, %v615
  %v652 = vadd.f32 %v640, %v616
  %v653 = vadd.f32 %v641, %v617
  %v654 = vadd.f32 %v642, %v618
  %v655 = vadd.f32 %v643, %v619
  %v656 = vadd.f32 %v644, %v620
  %v657 = vadd.f32 %v645, %v621
  %v658 = vadd.f32 %v646, %v622
  %659 = vst [vmem:[%s2] sm:$0xff] %v647
  %660 = vst [vmem:[%s2 + $0x8] sm:$0xff] %v648
  %661 = vst [vmem:[%s2 + $0x10] sm:$0xff] %v649
  %662 = vst [vmem:[%s2 + $0x18] sm:$0xff] %v650
  %663 = vst [vmem:[%s2 + $0x20] sm:$0xff] %v651
  %664 = vst [vmem:[%s2 + $0x28] sm:$0xff] %v652
  %665 = vst [vmem:[%s2 + $0x30] sm:$0xff] %v653
  %666 = vst [vmem:[%s2 + $0x38] sm:$0xff] %v654
  %667 = vst [vmem:[%s2 + $0x40] sm:$0xff] %v655
  %668 = vst [vmem:[%s2 + $0x48] sm:$0xff] %v656
  %669 = vst [vmem:[%s2 + $0x50] sm:$0xff] %v657
  %670 = vst [vmem:[%s2 + $0x58] sm:$0xff] %v658
  %v671 = vld [vmem:[%s3] sm:$0xff]
  %v672 = vld [vmem:[%s3 + $0x8] sm:$0xff]
  %v673 = vld [vmem:[%s3 + $0x10] sm:$0xff]
  %v674 = vld [vmem:[%s3 + $0x18] sm:$0xff]
  %v675 = vld [vmem:[%s3 + $0x20] sm:$0xff]
  %v676 = vld [vmem:[%s3 + $0x28] sm:$0xff]
  %v677 = vld [vmem:[%s3 + $0x30] sm:$0xff]
  %v678 = vld [vmem:[%s3 + $0x38] sm:$0xff]
  %v679 = vld [vmem:[%s3 + $0x40] sm:$0xff]
  %v680 = vld [vmem:[%s3 + $0x48] sm:$0xff]
  %v681 = vld [vmem:[%s3 + $0x50] sm:$0xff]
  %v682 = vld [vmem:[%s3 + $0x58] sm:$0xff]
  %v683 = vadd.f32 %v671, %v623
  %v684 = vadd.f32 %v672, %v624
  %v685 = vadd.f32 %v673, %v625
  %v686 = vadd.f32 %v674, %v626
  %v687 = vadd.f32 %v675, %v627
  %v688 = vadd.f32 %v676, %v628
  %v689 = vadd.f32 %v677, %v629
  %v690 = vadd.f32 %v678, %v630
  %v691 = vadd.f32 %v679, %v631
  %v692 = vadd.f32 %v680, %v632
  %v693 = vadd.f32 %v681, %v633
  %v694 = vadd.f32 %v682, %v634
  %695 = vst [vmem:[%s3] sm:$0xff] %v683
  %696 = vst [vmem:[%s3 + $0x8] sm:$0xff] %v684
  %697 = vst [vmem:[%s3 + $0x10] sm:$0xff] %v685
  %698 = vst [vmem:[%s3 + $0x18] sm:$0xff] %v686
  %699 = vst [vmem:[%s3 + $0x20] sm:$0xff] %v687
  %700 = vst [vmem:[%s3 + $0x28] sm:$0xff] %v688
  %701 = vst [vmem:[%s3 + $0x30] sm:$0xff] %v689
  %702 = vst [vmem:[%s3 + $0x38] sm:$0xff] %v690
  %703 = vst [vmem:[%s3 + $0x40] sm:$0xff] %v691
  %704 = vst [vmem:[%s3 + $0x48] sm:$0xff] %v692
  %705 = vst [vmem:[%s3 + $0x50] sm:$0xff] %v693
  %706 = vst [vmem:[%s3 + $0x58] sm:$0xff] %v694
  // Predicated region
  $region14: #{resnet18_autoencoder_forward.5} parent=0 // pred_check
    _
  $region15: #{resnet18_autoencoder_forward.5} parent=0 // pred_check_branch
    %708 = sbr.rel (0) target = $region17
  $region16: #{resnet18_autoencoder_forward.5} parent=0 // pred_region
    _
  $region17: #{resnet18_autoencoder_forward.5} parent=0 // pred_fallthru
    _
  // Predicated region
  $region18: #{resnet18_autoencoder_forward.5} parent=0 // pred_check
    _
  $region19: #{resnet18_autoencoder_forward.5} parent=0 // pred_check_branch
    %710 = sbr.rel (0) target = $region21
  $region20: #{resnet18_autoencoder_forward.5} parent=0 // pred_region
    _
  $region21: #{resnet18_autoencoder_forward.5} parent=0 // pred_fallthru
    _
  // Predicated region
  $region22: #{resnet18_autoencoder_forward.5} parent=0 // pred_check
    _
  $region23: #{resnet18_autoencoder_forward.5} parent=0 // pred_check_branch
    %712 = sbr.rel (0) target = $region25
  $region24: #{resnet18_autoencoder_forward.5} parent=0 // pred_region
    _
  $region25: #{resnet18_autoencoder_forward.5} parent=0 // pred_fallthru
    _
  // Predicated region
  $region26: #{resnet18_autoencoder_forward.5} parent=0 // pred_check
    _
  $region27: #{resnet18_autoencoder_forward.5} parent=0 // pred_check_branch
    %714 = sbr.rel (0) target = $region29
  $region28: #{resnet18_autoencoder_forward.5} parent=0 // pred_region
    _
  $region29: #{resnet18_autoencoder_forward.5} parent=0 // pred_fallthru
    _

// kernel: resnet18_autoencoder_forward.7
$region0: #{resnet18_autoencoder_forward.7}
  #allocation0 [shape = 'u32[]', space=smem, size = 0x4, offset = 0x4, fixed_abs, tag = 'smem constant byte address 0x4 - core index']
  #allocation1 [shape = 'u32[144,128]{1,0:T(1,128)}', space=vmem, size = 0x12000, scoped, tag = 'internal scratch']
  %s0 = inlined_call_operand.vmem [shape: bf16[2,96,256], index: 0, kind: input, shape index: {}]
  %s1 = inlined_call_operand.vmem [shape: bf16[64,96], index: 1, kind: input, shape index: {}]
  %s2 = inlined_call_operand.vmem [shape: f32[64,1], index: 2, kind: input, shape index: {}]
  %s3 = inlined_call_operand.vmem [shape: f32[64,1], index: 3, kind: input, shape index: {}]
  %s4 = inlined_call_operand.vmem [shape: bf16[64,64], index: 4, kind: input, shape index: {}]
  %s5 = inlined_call_operand.vmem [shape: bf16[2,64,256], index: 5, kind: output, shape index: {0}]
  %s6 = inlined_call_operand.vmem [shape: f32[1,64,128], index: 6, kind: output, shape index: {1}]
  %s7 = inlined_call_operand.vmem [shape: f32[1,64,128], index: 7, kind: output, shape index: {2}]
  %8 = xla_tuple %s5, %s6, %s7
  %s9 = sld [smem:[#allocation0]]
  $region50: #{resnet18_autoencoder_forward.7} parent=0
    _
  %s11 = ssub.s32 1, %s9
  %s12 = scalar_select 0, %s11, %s9
  // Predicated region
  $region2: #{resnet18_autoencoder_forward.7} parent=0 // pred_check
    _
  $region3: #{resnet18_autoencoder_forward.7} parent=0 // pred_check_branch
    %14 = sbr.rel (0) target = $region5
  $region4: #{resnet18_autoencoder_forward.7} parent=0 // pred_region
    %s15 = sadd.s32 0, 0
    %s16 = smul.u32 2, %s15
    %p17 = scmp.lt.s32.totalorder %s16, 1
    %s18 = scalar_select %p17, %s16, 1
    %s19 = smul.addr %s18, 4
    %s20 = scalar_lea.vmem %s0, %s19
    %s21 = sadd.s32 0, 0
    %s22 = smul.u32 2, %s21
  $region5: #{resnet18_autoencoder_forward.7} parent=0 // pred_fallthru
    _
  // Predicated region
  $region6: #{resnet18_autoencoder_forward.7} parent=0 // pred_check
    _
  $region7: #{resnet18_autoencoder_forward.7} parent=0 // pred_check_branch
    %24 = sbr.rel (0) target = $region9
  $region8: #{resnet18_autoencoder_forward.7} parent=0 // pred_region
    _
  $region9: #{resnet18_autoencoder_forward.7} parent=0 // pred_fallthru
    _
  // Predicated region
  $region10: #{resnet18_autoencoder_forward.7} parent=0 // pred_check
    _
  $region11: #{resnet18_autoencoder_forward.7} parent=0 // pred_check_branch
    %26 = sbr.rel (0) target = $region13
  $region12: #{resnet18_autoencoder_forward.7} parent=0 // pred_region
    _
  $region13: #{resnet18_autoencoder_forward.7} parent=0 // pred_fallthru
    _
  // Predicated region
  $region14: #{resnet18_autoencoder_forward.7} parent=0 // pred_check
    _
  $region15: #{resnet18_autoencoder_forward.7} parent=0 // pred_check_branch
    %28 = sbr.rel (0) target = $region17
  $region16: #{resnet18_autoencoder_forward.7} parent=0 // pred_region
    _
  $region17: #{resnet18_autoencoder_forward.7} parent=0 // pred_fallthru
    _
  // Predicated region
  $region18: #{resnet18_autoencoder_forward.7} parent=0 // pred_check
    _
  $region19: #{resnet18_autoencoder_forward.7} parent=0 // pred_check_branch
    %30 = sbr.rel (0) target = $region21
  $region20: #{resnet18_autoencoder_forward.7} parent=0 // pred_region
    _
  $region21: #{resnet18_autoencoder_forward.7} parent=0 // pred_fallthru
    _
  %s31 = sadd.s32 0, 0
  %s32 = smul.u32 2, %s31
  %p33 = scmp.lt.s32.totalorder %s32, 1
  %s34 = scalar_select %p33, %s32, 1
  %s35 = smul.addr %s34, 4
  %s36 = scalar_lea.vmem %s0, %s35
  %s37 = sadd.s32 0, 0
  %s38 = smul.u32 2, %s37
  %p39 = scmp.lt.s32.totalorder %s38, 1
  %s40 = scalar_select %p39, %s38, 1
  %s41 = smul.addr %s40, 4
  %s42 = scalar_lea.vmem %s5, %s41
  %s43 = sadd.s32 0, 0
  %s44 = smul.u32 2, %s43
  %p45 = scmp.lt.s32.totalorder %s44, 1
  %s46 = scalar_select %p45, %s44, 1
  %s47 = smul.addr %s46, 4
  %s48 = scalar_lea.vmem %s0, %s47
  %s49 = sadd.s32 0, 0
  %s50 = smul.u32 2, %s49
  %s51 = sadd.s32 0, 0
  %s52 = smul.u32 2, %s51
  %p53 = scmp.lt.s32.totalorder %s52, 1
  %s54 = scalar_select %p53, %s52, 1
  %s55 = smul.addr %s54, 4
  %s56 = scalar_lea.vmem %s5, %s55
  %s57 = sadd.s32 0, 0
  %s58 = smul.u32 2, %s57
  %p60 = scmp.eq.s32.totalorder 0, 0
  // Predicated region
  $region22: #{resnet18_autoencoder_forward.7} parent=0 // pred_check
    %p61 = pneg %p60
  $region23: #{resnet18_autoencoder_forward.7} parent=0 // pred_check_branch
    %63 = sbr.rel (%p61) target = $region25
  $region24: #{resnet18_autoencoder_forward.7} parent=0 // pred_region
    %64 = vst [vmem:[%s6] sm:$0xff] 0.0
    %65 = vst [vmem:[%s6 + $0x8] sm:$0xff] 0.0
    %66 = vst [vmem:[%s6 + $0x10] sm:$0xff] 0.0
    %67 = vst [vmem:[%s6 + $0x18] sm:$0xff] 0.0
    %68 = vst [vmem:[%s6 + $0x20] sm:$0xff] 0.0
    %69 = vst [vmem:[%s6 + $0x28] sm:$0xff] 0.0
    %70 = vst [vmem:[%s6 + $0x30] sm:$0xff] 0.0
    %71 = vst [vmem:[%s6 + $0x38] sm:$0xff] 0.0
    %72 = vst [vmem:[%s7] sm:$0xff] 0.0
    %73 = vst [vmem:[%s7 + $0x8] sm:$0xff] 0.0
    %74 = vst [vmem:[%s7 + $0x10] sm:$0xff] 0.0
    %75 = vst [vmem:[%s7 + $0x18] sm:$0xff] 0.0
    %76 = vst [vmem:[%s7 + $0x20] sm:$0xff] 0.0
    %77 = vst [vmem:[%s7 + $0x28] sm:$0xff] 0.0
    %78 = vst [vmem:[%s7 + $0x30] sm:$0xff] 0.0
    %79 = vst [vmem:[%s7 + $0x38] sm:$0xff] 0.0
  $region25: #{resnet18_autoencoder_forward.7} parent=0 // pred_fallthru
    _
  %v80 = vld [vmem:[%s1] sm:$0xf]
  %v81 = vld [vmem:[%s1 + $0x4] sm:$0xf]
  %v82 = vld [vmem:[%s1 + $0x8] sm:$0xf]
  %v83 = vld [vmem:[%s1 + $0xc] sm:$0xf]
  %v84 = vld [vmem:[%s1 + $0x10] sm:$0xf]
  %v85 = vld [vmem:[%s1 + $0x14] sm:$0xf]
  %v86 = vld [vmem:[%s1 + $0x18] sm:$0xf]
  %v87 = vld [vmem:[%s1 + $0x1c] sm:$0xf]
  %v88 = vld [vmem:[%s4] sm:$0xf]
  %v89 = vld [vmem:[%s4 + $0x4] sm:$0xf]
  %v90 = vld [vmem:[%s4 + $0x8] sm:$0xf]
  %v91 = vld [vmem:[%s4 + $0xc] sm:$0xf]
  %v92 = vld [vmem:[%s4 + $0x10] sm:$0xf]
  %v93 = vld [vmem:[%s4 + $0x14] sm:$0xf]
  %v94 = vld [vmem:[%s4 + $0x18] sm:$0xf]
  %v95 = vld [vmem:[%s4 + $0x1c] sm:$0xf]
  %v96 = vld [vmem:[%s2] sm:$0xff]
  %v97 = vld [vmem:[%s2 + $0x8] sm:$0xff]
  %v98 = vld [vmem:[%s2 + $0x10] sm:$0xff]
  %v99 = vld [vmem:[%s2 + $0x18] sm:$0xff]
  %v100 = vld [vmem:[%s2 + $0x20] sm:$0xff]
  %v101 = vld [vmem:[%s2 + $0x28] sm:$0xff]
  %v102 = vld [vmem:[%s2 + $0x30] sm:$0xff]
  %v103 = vld [vmem:[%s2 + $0x38] sm:$0xff]
  %v104 = vld [vmem:[%s3] sm:$0xff]
  %v105 = vld [vmem:[%s3 + $0x8] sm:$0xff]
  %v106 = vld [vmem:[%s3 + $0x10] sm:$0xff]
  %v107 = vld [vmem:[%s3 + $0x18] sm:$0xff]
  %v108 = vld [vmem:[%s3 + $0x20] sm:$0xff]
  %v109 = vld [vmem:[%s3 + $0x28] sm:$0xff]
  %v110 = vld [vmem:[%s3 + $0x30] sm:$0xff]
  %v111 = vld [vmem:[%s3 + $0x38] sm:$0xff]
  %v112 = vld [vmem:[%s48] sm:$0xff]
  %v113 = vld [vmem:[%s48 + $0x8] sm:$0xff]
  %v114 = vld [vmem:[%s48 + $0x10] sm:$0xff]
  %v115 = vld [vmem:[%s48 + $0x18] sm:$0xff]
  %v116 = vld [vmem:[%s48 + $0x20] sm:$0xff]
  %v117 = vld [vmem:[%s48 + $0x28] sm:$0xff]
  %v118 = vld [vmem:[%s48 + $0x30] sm:$0xff]
  %v119 = vld [vmem:[%s48 + $0x38] sm:$0xff]
  %v120 = vld [vmem:[%s48 + $0x40] sm:$0xff]
  %v121 = vld [vmem:[%s48 + $0x48] sm:$0xff]
  %v122 = vld [vmem:[%s48 + $0x50] sm:$0xff]
  %v123 = vld [vmem:[%s48 + $0x58] sm:$0xff]
  %v132 = vunpack.c.l.b16 %v80
  %v133 = vunpack.c.l.b16 %v81
  %v134 = vunpack.c.l.b16 %v82
  %v135 = vunpack.c.l.b16 %v83
  %v136 = vunpack.c.l.b16 %v84
  %v137 = vunpack.c.l.b16 %v85
  %v138 = vunpack.c.l.b16 %v86
  %v139 = vunpack.c.l.b16 %v87
  %v140 = vpack.c.b16 %v133, %v132
  %v141 = vpack.c.b16 %v135, %v134
  %v142 = vpack.c.b16 %v137, %v136
  %v143 = vpack.c.b16 %v139, %v138
  %v156 = vunpack.c.l.b16 %v112
  %v157 = vunpack.c.h.b16 %v112
  %v158 = vunpack.c.l.b16 %v113
  %v159 = vunpack.c.h.b16 %v113
  %v160 = vunpack.c.l.b16 %v114
  %v161 = vunpack.c.h.b16 %v114
  %v162 = vunpack.c.l.b16 %v115
  %v163 = vunpack.c.h.b16 %v115
  %v164 = vunpack.c.l.b16 %v116
  %v165 = vunpack.c.h.b16 %v116
  %v166 = vunpack.c.l.b16 %v117
  %v167 = vunpack.c.h.b16 %v117
  %v168 = vunpack.c.l.b16 %v118
  %v169 = vunpack.c.h.b16 %v118
  %v170 = vunpack.c.l.b16 %v119
  %v171 = vunpack.c.h.b16 %v119
  %v172 = vunpack.c.l.b16 %v120
  %v173 = vunpack.c.h.b16 %v120
  %v174 = vunpack.c.l.b16 %v121
  %v175 = vunpack.c.h.b16 %v121
  %v176 = vunpack.c.l.b16 %v122
  %v177 = vunpack.c.h.b16 %v122
  %v178 = vunpack.c.l.b16 %v123
  %v179 = vunpack.c.h.b16 %v123
  %v180 = vpack.c.b16 %v158, %v156
  %v181 = vpack.c.b16 %v159, %v157
  %v182 = vpack.c.b16 %v162, %v160
  %v183 = vpack.c.b16 %v163, %v161
  %v184 = vpack.c.b16 %v166, %v164
  %v185 = vpack.c.b16 %v167, %v165
  %v186 = vpack.c.b16 %v170, %v168
  %v187 = vpack.c.b16 %v171, %v169
  %v188 = vpack.c.b16 %v174, %v172
  %v189 = vpack.c.b16 %v175, %v173
  %v190 = vpack.c.b16 %v178, %v176
  %v191 = vpack.c.b16 %v179, %v177
  %vm204 = vcmask 785408
  %v206 = vsel %vm204, %v140, 0
  %v209 = vsel %vm204, %v141, 0
  %v212 = vsel %vm204, %v142, 0
  %v215 = vsel %vm204, %v143, 0
  %217 = vmatprep.subr.bf16.mxu0 %v181
  %218 = vmatpush1.bf16.msra.mxu0 %v180
  %219 = vmatprep.subr.bf16.mxu0 %v183
  %220 = vmatpush1.bf16.msra.mxu0 %v182
  %221 = vmatprep.subr.bf16.mxu0 %v185
  %222 = vmatpush1.bf16.msra.mxu0 %v184
  %223 = vmatprep.subr.bf16.mxu0 %v187
  %224 = vmatpush1.bf16.msra.mxu0 %v186
  %225 = vmatprep.subr.bf16.mxu0 %v189
  %226 = vmatpush1.bf16.msra.mxu0 %v188
  %227 = vmatprep.subr.bf16.mxu0 %v191
  %228 = vmatpush1.bf16.msra.mxu0 %v190
  %229 = vmatprep.subr.bf16.mxu0 0
  %230 = vmatpush1.bf16.msra.mxu0 0
  %231 = vmatprep.subr.bf16.mxu0 0
  %232 = vmatpush1.bf16.msra.mxu0 0
  %233 = vmatprep.subr.bf16.mxu0 0
  %234 = vmatpush1.bf16.msra.mxu0 0
  %235 = vmatprep.subr.bf16.mxu0 0
  %236 = vmatpush1.bf16.msra.mxu0 0
  %237 = vmatprep.subr.bf16.mxu0 0
  %238 = vmatpush1.bf16.msra.mxu0 0
  %239 = vmatprep.subr.bf16.mxu0 0
  %240 = vmatpush1.bf16.msra.mxu0 0
  %241 = vmatprep.subr.bf16.mxu0 0
  %242 = vmatpush1.bf16.msra.mxu0 0
  %243 = vmatprep.subr.bf16.mxu0 0
  %244 = vmatpush1.bf16.msra.mxu0 0
  %245 = vmatprep.subr.bf16.mxu0 0
  %246 = vmatpush1.bf16.msra.mxu0 0
  %247 = vmatprep.subr.bf16.mxu0 0
  %248 = vmatpush1.bf16.msra.mxu0 0
  %249 = vmatprep.mubr.bf16.mxu0 0
  %250 = vmatmul.mubr.bf16.gmra.mrb[0].mxu0 %v206
  %v251 = vpop.f32.mrb[0].mxu0
  %v252 = vadd.f32 0.0, %v251
  %v253 = vpop.f32.mrb[0].mxu0
  %v254 = vadd.f32 0.0, %v253
  %v255 = vpop.f32.mrb[0].mxu0
  %v256 = vadd.f32 0.0, %v255
  %v257 = vpop.f32.mrb[0].mxu0
  %v258 = vadd.f32 0.0, %v257
  %259 = vmatprep.mubr.bf16.mxu0 0
  %260 = vmatmul.mubr.bf16.gmra.mrb[0].mxu0 %v209
  %v261 = vpop.f32.mrb[0].mxu0
  %v262 = vadd.f32 0.0, %v261
  %v263 = vpop.f32.mrb[0].mxu0
  %v264 = vadd.f32 0.0, %v263
  %v265 = vpop.f32.mrb[0].mxu0
  %v266 = vadd.f32 0.0, %v265
  %v267 = vpop.f32.mrb[0].mxu0
  %v268 = vadd.f32 0.0, %v267
  %269 = vmatprep.mubr.bf16.mxu0 0
  %270 = vmatmul.mubr.bf16.gmra.mrb[0].mxu0 %v212
  %v271 = vpop.f32.mrb[0].mxu0
  %v272 = vadd.f32 0.0, %v271
  %v273 = vpop.f32.mrb[0].mxu0
  %v274 = vadd.f32 0.0, %v273
  %v275 = vpop.f32.mrb[0].mxu0
  %v276 = vadd.f32 0.0, %v275
  %v277 = vpop.f32.mrb[0].mxu0
  %v278 = vadd.f32 0.0, %v277
  %279 = vmatprep.mubr.bf16.mxu0 0
  %280 = vmatmul.mubr.bf16.gmra.mrb[0].mxu0 %v215
  %v281 = vpop.f32.mrb[0].mxu0
  %v282 = vadd.f32 0.0, %v281
  %v283 = vpop.f32.mrb[0].mxu0
  %v284 = vadd.f32 0.0, %v283
  %v285 = vpop.f32.mrb[0].mxu0
  %v286 = vadd.f32 0.0, %v285
  %v287 = vpop.f32.mrb[0].mxu0
  %v288 = vadd.f32 0.0, %v287
  %289 = vdwg.mxu0
  %291 = vset.pattern.permute.xlu0 0
  %292 = vperm.xlu0 %291, %v96
  %v293 = vpop.permute.xlu0 %292
  %296 = vset.pattern.permute.xlu0 0
  %297 = vperm.xlu0 %296, %v97
  %v298 = vpop.permute.xlu0 %297
  %301 = vset.pattern.permute.xlu0 0
  %302 = vperm.xlu0 %301, %v98
  %v303 = vpop.permute.xlu0 %302
  %306 = vset.pattern.permute.xlu0 0
  %307 = vperm.xlu0 %306, %v99
  %v308 = vpop.permute.xlu0 %307
  %311 = vset.pattern.permute.xlu0 0
  %312 = vperm.xlu0 %311, %v100
  %v313 = vpop.permute.xlu0 %312
  %316 = vset.pattern.permute.xlu0 0
  %317 = vperm.xlu0 %316, %v101
  %v318 = vpop.permute.xlu0 %317
  %321 = vset.pattern.permute.xlu0 0
  %322 = vperm.xlu0 %321, %v102
  %v323 = vpop.permute.xlu0 %322
  %326 = vset.pattern.permute.xlu0 0
  %327 = vperm.xlu0 %326, %v103
  %v328 = vpop.permute.xlu0 %327
  %v330 = vmul.f32 %v252, %v293
  %v331 = vmul.f32 %v254, %v293
  %v332 = vmul.f32 %v256, %v298
  %v333 = vmul.f32 %v258, %v298
  %v334 = vmul.f32 %v262, %v303
  %v335 = vmul.f32 %v264, %v303
  %v336 = vmul.f32 %v266, %v308
  %v337 = vmul.f32 %v268, %v308
  %v338 = vmul.f32 %v272, %v313
  %v339 = vmul.f32 %v274, %v313
  %v340 = vmul.f32 %v276, %v318
  %v341 = vmul.f32 %v278, %v318
  %v342 = vmul.f32 %v282, %v323
  %v343 = vmul.f32 %v284, %v323
  %v344 = vmul.f32 %v286, %v328
  %v345 = vmul.f32 %v288, %v328
  %347 = vset.pattern.permute.xlu0 0
  %348 = vperm.xlu0 %347, %v104
  %v349 = vpop.permute.xlu0 %348
  %352 = vset.pattern.permute.xlu0 0
  %353 = vperm.xlu0 %352, %v105
  %v354 = vpop.permute.xlu0 %353
  %357 = vset.pattern.permute.xlu0 0
  %358 = vperm.xlu0 %357, %v106
  %v359 = vpop.permute.xlu0 %358
  %362 = vset.pattern.permute.xlu0 0
  %363 = vperm.xlu0 %362, %v107
  %v364 = vpop.permute.xlu0 %363
  %367 = vset.pattern.permute.xlu0 0
  %368 = vperm.xlu0 %367, %v108
  %v369 = vpop.permute.xlu0 %368
  %372 = vset.pattern.permute.xlu0 0
  %373 = vperm.xlu0 %372, %v109
  %v374 = vpop.permute.xlu0 %373
  %377 = vset.pattern.permute.xlu0 0
  %378 = vperm.xlu0 %377, %v110
  %v379 = vpop.permute.xlu0 %378
  %382 = vset.pattern.permute.xlu0 0
  %383 = vperm.xlu0 %382, %v111
  %v384 = vpop.permute.xlu0 %383
  %v386 = vadd.f32 %v330, %v349
  %v387 = vadd.f32 %v331, %v349
  %v388 = vadd.f32 %v332, %v354
  %v389 = vadd.f32 %v333, %v354
  %v390 = vadd.f32 %v334, %v359
  %v391 = vadd.f32 %v335, %v359
  %v392 = vadd.f32 %v336, %v364
  %v393 = vadd.f32 %v337, %v364
  %v394 = vadd.f32 %v338, %v369
  %v395 = vadd.f32 %v339, %v369
  %v396 = vadd.f32 %v340, %v374
  %v397 = vadd.f32 %v341, %v374
  %v398 = vadd.f32 %v342, %v379
  %v399 = vadd.f32 %v343, %v379
  %v400 = vadd.f32 %v344, %v384
  %v401 = vadd.f32 %v345, %v384
  %v402 = vmax.f32 %v386, 0.0
  %v403 = vmax.f32 %v387, 0.0
  %v404 = vmax.f32 %v388, 0.0
  %v405 = vmax.f32 %v389, 0.0
  %v406 = vmax.f32 %v390, 0.0
  %v407 = vmax.f32 %v391, 0.0
  %v408 = vmax.f32 %v392, 0.0
  %v409 = vmax.f32 %v393, 0.0
  %v410 = vmax.f32 %v394, 0.0
  %v411 = vmax.f32 %v395, 0.0
  %v412 = vmax.f32 %v396, 0.0
  %v413 = vmax.f32 %v397, 0.0
  %v414 = vmax.f32 %v398, 0.0
  %v415 = vmax.f32 %v399, 0.0
  %v416 = vmax.f32 %v400, 0.0
  %v417 = vmax.f32 %v401, 0.0
  %v418 = vpack.c.bf16 %v404, %v402
  %v419 = vpack.c.bf16 %v405, %v403
  %v420 = vpack.c.bf16 %v408, %v406
  %v421 = vpack.c.bf16 %v409, %v407
  %v422 = vpack.c.bf16 %v412, %v410
  %v423 = vpack.c.bf16 %v413, %v411
  %v424 = vpack.c.bf16 %v416, %v414
  %v425 = vpack.c.bf16 %v417, %v415
  %v434 = vunpack.c.l.b16 %v418
  %v435 = vunpack.c.l.b16 %v419
  %v436 = vunpack.c.h.b16 %v418
  %v437 = vunpack.c.h.b16 %v419
  %v438 = vunpack.c.l.b16 %v420
  %v439 = vunpack.c.l.b16 %v421
  %v440 = vunpack.c.h.b16 %v420
  %v441 = vunpack.c.h.b16 %v421
  %v442 = vunpack.c.l.b16 %v422
  %v443 = vunpack.c.l.b16 %v423
  %v444 = vunpack.c.h.b16 %v422
  %v445 = vunpack.c.h.b16 %v423
  %v446 = vunpack.c.l.b16 %v424
  %v447 = vunpack.c.l.b16 %v425
  %v448 = vunpack.c.h.b16 %v424
  %v449 = vunpack.c.h.b16 %v425
  %v450 = vpack.c.b16 %v435, %v434
  %v451 = vpack.c.b16 %v437, %v436
  %v452 = vpack.c.b16 %v439, %v438
  %v453 = vpack.c.b16 %v441, %v440
  %v454 = vpack.c.b16 %v443, %v442
  %v455 = vpack.c.b16 %v445, %v444
  %v456 = vpack.c.b16 %v447, %v446
  %v457 = vpack.c.b16 %v449, %v448
  %466 = vst [vmem:[%s56] sm:$0xff] %v450
  %467 = vst [vmem:[%s56 + $0x8] sm:$0xff] %v451
  %468 = vst [vmem:[%s56 + $0x10] sm:$0xff] %v452
  %469 = vst [vmem:[%s56 + $0x18] sm:$0xff] %v453
  %470 = vst [vmem:[%s56 + $0x20] sm:$0xff] %v454
  %471 = vst [vmem:[%s56 + $0x28] sm:$0xff] %v455
  %472 = vst [vmem:[%s56 + $0x30] sm:$0xff] %v456
  %473 = vst [vmem:[%s56 + $0x38] sm:$0xff] %v457
  %v482 = vunpack.c.l.b16 %v88
  %v483 = vunpack.c.l.b16 %v89
  %v484 = vunpack.c.l.b16 %v90
  %v485 = vunpack.c.l.b16 %v91
  %v486 = vunpack.c.l.b16 %v92
  %v487 = vunpack.c.l.b16 %v93
  %v488 = vunpack.c.l.b16 %v94
  %v489 = vunpack.c.l.b16 %v95
  %v490 = vpack.c.b16 %v483, %v482
  %v491 = vpack.c.b16 %v485, %v484
  %v492 = vpack.c.b16 %v487, %v486
  %v493 = vpack.c.b16 %v489, %v488
  %vm494 = vcmask 523264
  %v496 = vsel %vm494, %v490, 0
  %v499 = vsel %vm494, %v491, 0
  %v502 = vsel %vm494, %v492, 0
  %v505 = vsel %vm494, %v493, 0
  %507 = vmatprep.subr.bf16.mxu0 %v419
  %508 = vmatpush1.bf16.msra.mxu0 %v418
  %509 = vmatprep.subr.bf16.mxu0 %v421
  %510 = vmatpush1.bf16.msra.mxu0 %v420
  %511 = vmatprep.subr.bf16.mxu0 %v423
  %512 = vmatpush1.bf16.msra.mxu0 %v422
  %513 = vmatprep.subr.bf16.mxu0 %v425
  %514 = vmatpush1.bf16.msra.mxu0 %v424
  %515 = vmatprep.subr.bf16.mxu0 0
  %516 = vmatpush1.bf16.msra.mxu0 0
  %517 = vmatprep.subr.bf16.mxu0 0
  %518 = vmatpush1.bf16.msra.mxu0 0
  %519 = vmatprep.subr.bf16.mxu0 0
  %520 = vmatpush1.bf16.msra.mxu0 0
  %521 = vmatprep.subr.bf16.mxu0 0
  %522 = vmatpush1.bf16.msra.mxu0 0
  %523 = vmatprep.subr.bf16.mxu0 0
  %524 = vmatpush1.bf16.msra.mxu0 0
  %525 = vmatprep.subr.bf16.mxu0 0
  %526 = vmatpush1.bf16.msra.mxu0 0
  %527 = vmatprep.subr.bf16.mxu0 0
  %528 = vmatpush1.bf16.msra.mxu0 0
  %529 = vmatprep.subr.bf16.mxu0 0
  %530 = vmatpush1.bf16.msra.mxu0 0
  %531 = vmatprep.subr.bf16.mxu0 0
  %532 = vmatpush1.bf16.msra.mxu0 0
  %533 = vmatprep.subr.bf16.mxu0 0
  %534 = vmatpush1.bf16.msra.mxu0 0
  %535 = vmatprep.subr.bf16.mxu0 0
  %536 = vmatpush1.bf16.msra.mxu0 0
  %537 = vmatprep.subr.bf16.mxu0 0
  %538 = vmatpush1.bf16.msra.mxu0 0
  %539 = vmatprep.mubr.bf16.mxu0 0
  %540 = vmatmul.mubr.bf16.gmra.mrb[0].mxu0 %v496
  %v541 = vpop.f32.mrb[0].mxu0
  %v542 = vadd.f32 0.0, %v541
  %v543 = vpop.f32.mrb[0].mxu0
  %v544 = vadd.f32 0.0, %v543
  %v545 = vpop.f32.mrb[0].mxu0
  %v546 = vadd.f32 0.0, %v545
  %v547 = vpop.f32.mrb[0].mxu0
  %v548 = vadd.f32 0.0, %v547
  %549 = vmatprep.mubr.bf16.mxu0 0
  %550 = vmatmul.mubr.bf16.gmra.mrb[0].mxu0 %v499
  %v551 = vpop.f32.mrb[0].mxu0
  %v552 = vadd.f32 0.0, %v551
  %v553 = vpop.f32.mrb[0].mxu0
  %v554 = vadd.f32 0.0, %v553
  %v555 = vpop.f32.mrb[0].mxu0
  %v556 = vadd.f32 0.0, %v555
  %v557 = vpop.f32.mrb[0].mxu0
  %v558 = vadd.f32 0.0, %v557
  %559 = vmatprep.mubr.bf16.mxu0 0
  %560 = vmatmul.mubr.bf16.gmra.mrb[0].mxu0 %v502
  %v561 = vpop.f32.mrb[0].mxu0
  %v562 = vadd.f32 0.0, %v561
  %v563 = vpop.f32.mrb[0].mxu0
  %v564 = vadd.f32 0.0, %v563
  %v565 = vpop.f32.mrb[0].mxu0
  %v566 = vadd.f32 0.0, %v565
  %v567 = vpop.f32.mrb[0].mxu0
  %v568 = vadd.f32 0.0, %v567
  %569 = vmatprep.mubr.bf16.mxu0 0
  %570 = vmatmul.mubr.bf16.gmra.mrb[0].mxu0 %v505
  %v571 = vpop.f32.mrb[0].mxu0
  %v572 = vadd.f32 0.0, %v571
  %v573 = vpop.f32.mrb[0].mxu0
  %v574 = vadd.f32 0.0, %v573
  %v575 = vpop.f32.mrb[0].mxu0
  %v576 = vadd.f32 0.0, %v575
  %v577 = vpop.f32.mrb[0].mxu0
  %v578 = vadd.f32 0.0, %v577
  %579 = vdwg.mxu0
  %v580 = vmul.f32 %v542, %v542
  %v581 = vmul.f32 %v546, %v546
  %v582 = vmul.f32 %v552, %v552
  %v583 = vmul.f32 %v556, %v556
  %v584 = vmul.f32 %v562, %v562
  %v585 = vmul.f32 %v566, %v566
  %v586 = vmul.f32 %v572, %v572
  %v587 = vmul.f32 %v576, %v576
  %v588 = vadd.f32 %v542, %v544
  %v589 = vadd.f32 %v546, %v548
  %v590 = vadd.f32 %v552, %v554
  %v591 = vadd.f32 %v556, %v558
  %v592 = vadd.f32 %v562, %v564
  %v593 = vadd.f32 %v566, %v568
  %v594 = vadd.f32 %v572, %v574
  %v595 = vadd.f32 %v576, %v578
  %v596 = vmul.f32 %v544, %v544
  %v597 = vmul.f32 %v548, %v548
  %v598 = vmul.f32 %v554, %v554
  %v599 = vmul.f32 %v558, %v558
  %v600 = vmul.f32 %v564, %v564
  %v601 = vmul.f32 %v568, %v568
  %v602 = vmul.f32 %v574, %v574
  %v603 = vmul.f32 %v578, %v578
  %v604 = vadd.f32 %v580, %v596
  %v605 = vadd.f32 %v581, %v597
  %v606 = vadd.f32 %v582, %v598
  %v607 = vadd.f32 %v583, %v599
  %v608 = vadd.f32 %v584, %v600
  %v609 = vadd.f32 %v585, %v601
  %v610 = vadd.f32 %v586, %v602
  %v611 = vadd.f32 %v587, %v603
  %v612 = vadd.f32 %v588, 0.0
  %v613 = vadd.f32 %v589, 0.0
  %v614 = vadd.f32 %v590, 0.0
  %v615 = vadd.f32 %v591, 0.0
  %v616 = vadd.f32 %v592, 0.0
  %v617 = vadd.f32 %v593, 0.0
  %v618 = vadd.f32 %v594, 0.0
  %v619 = vadd.f32 %v595, 0.0
  %v620 = vadd.f32 %v604, 0.0
  %v621 = vadd.f32 %v605, 0.0
  %v622 = vadd.f32 %v606, 0.0
  %v623 = vadd.f32 %v607, 0.0
  %v624 = vadd.f32 %v608, 0.0
  %v625 = vadd.f32 %v609, 0.0
  %v626 = vadd.f32 %v610, 0.0
  %v627 = vadd.f32 %v611, 0.0
  %s628 = scalar_lea.vmem %s48, 96
  %v629 = vld [vmem:[%s628] sm:$0xff]
  %v630 = vld [vmem:[%s628 + $0x8] sm:$0xff]
  %v631 = vld [vmem:[%s628 + $0x10] sm:$0xff]
  %v632 = vld [vmem:[%s628 + $0x18] sm:$0xff]
  %v633 = vld [vmem:[%s628 + $0x20] sm:$0xff]
  %v634 = vld [vmem:[%s628 + $0x28] sm:$0xff]
  %v635 = vld [vmem:[%s628 + $0x30] sm:$0xff]
  %v636 = vld [vmem:[%s628 + $0x38] sm:$0xff]
  %v637 = vld [vmem:[%s628 + $0x40] sm:$0xff]
  %v638 = vld [vmem:[%s628 + $0x48] sm:$0xff]
  %v639 = vld [vmem:[%s628 + $0x50] sm:$0xff]
  %v640 = vld [vmem:[%s628 + $0x58] sm:$0xff]
  %v653 = vunpack.c.l.b16 %v629
  %v654 = vunpack.c.h.b16 %v629
  %v655 = vunpack.c.l.b16 %v630
  %v656 = vunpack.c.h.b16 %v630
  %v657 = vunpack.c.l.b16 %v631
  %v658 = vunpack.c.h.b16 %v631
  %v659 = vunpack.c.l.b16 %v632
  %v660 = vunpack.c.h.b16 %v632
  %v661 = vunpack.c.l.b16 %v633
  %v662 = vunpack.c.h.b16 %v633
  %v663 = vunpack.c.l.b16 %v634
  %v664 = vunpack.c.h.b16 %v634
  %v665 = vunpack.c.l.b16 %v635
  %v666 = vunpack.c.h.b16 %v635
  %v667 = vunpack.c.l.b16 %v636
  %v668 = vunpack.c.h.b16 %v636
  %v669 = vunpack.c.l.b16 %v637
  %v670 = vunpack.c.h.b16 %v637
  %v671 = vunpack.c.l.b16 %v638
  %v672 = vunpack.c.h.b16 %v638
  %v673 = vunpack.c.l.b16 %v639
  %v674 = vunpack.c.h.b16 %v639
  %v675 = vunpack.c.l.b16 %v640
  %v676 = vunpack.c.h.b16 %v640
  %v677 = vpack.c.b16 %v655, %v653
  %v678 = vpack.c.b16 %v656, %v654
  %v679 = vpack.c.b16 %v659, %v657
  %v680 = vpack.c.b16 %v660, %v658
  %v681 = vpack.c.b16 %v663, %v661
  %v682 = vpack.c.b16 %v664, %v662
  %v683 = vpack.c.b16 %v667, %v665
  %v684 = vpack.c.b16 %v668, %v666
  %v685 = vpack.c.b16 %v671, %v669
  %v686 = vpack.c.b16 %v672, %v670
  %v687 = vpack.c.b16 %v675, %v673
  %v688 = vpack.c.b16 %v676, %v674
  %701 = vmatprep.subr.bf16.mxu0 %v678
  %702 = vmatpush1.bf16.msra.mxu0 %v677
  %703 = vmatprep.subr.bf16.mxu0 %v680
  %704 = vmatpush1.bf16.msra.mxu0 %v679
  %705 = vmatprep.subr.bf16.mxu0 %v682
  %706 = vmatpush1.bf16.msra.mxu0 %v681
  %707 = vmatprep.subr.bf16.mxu0 %v684
  %708 = vmatpush1.bf16.msra.mxu0 %v683
  %709 = vmatprep.subr.bf16.mxu0 %v686
  %710 = vmatpush1.bf16.msra.mxu0 %v685
  %711 = vmatprep.subr.bf16.mxu0 %v688
  %712 = vmatpush1.bf16.msra.mxu0 %v687
  %713 = vmatprep.subr.bf16.mxu0 0
  %714 = vmatpush1.bf16.msra.mxu0 0
  %715 = vmatprep.subr.bf16.mxu0 0
  %716 = vmatpush1.bf16.msra.mxu0 0
  %717 = vmatprep.subr.bf16.mxu0 0
  %718 = vmatpush1.bf16.msra.mxu0 0
  %719 = vmatprep.subr.bf16.mxu0 0
  %720 = vmatpush1.bf16.msra.mxu0 0
  %721 = vmatprep.subr.bf16.mxu0 0
  %722 = vmatpush1.bf16.msra.mxu0 0
  %723 = vmatprep.subr.bf16.mxu0 0
  %724 = vmatpush1.bf16.msra.mxu0 0
  %725 = vmatprep.subr.bf16.mxu0 0
  %726 = vmatpush1.bf16.msra.mxu0 0
  %727 = vmatprep.subr.bf16.mxu0 0
  %728 = vmatpush1.bf16.msra.mxu0 0
  %729 = vmatprep.subr.bf16.mxu0 0
  %730 = vmatpush1.bf16.msra.mxu0 0
  %731 = vmatprep.subr.bf16.mxu0 0
  %732 = vmatpush1.bf16.msra.mxu0 0
  %733 = vmatprep.mubr.bf16.mxu0 0
  %734 = vmatmul.mubr.bf16.gmra.mrb[0].mxu0 %v206
  %v735 = vpop.f32.mrb[0].mxu0
  %v736 = vadd.f32 0.0, %v735
  %v737 = vpop.f32.mrb[0].mxu0
  %v738 = vadd.f32 0.0, %v737
  %v739 = vpop.f32.mrb[0].mxu0
  %v740 = vadd.f32 0.0, %v739
  %v741 = vpop.f32.mrb[0].mxu0
  %v742 = vadd.f32 0.0, %v741
  %743 = vmatprep.mubr.bf16.mxu0 0
  %744 = vmatmul.mubr.bf16.gmra.mrb[0].mxu0 %v209
  %v745 = vpop.f32.mrb[0].mxu0
  %v746 = vadd.f32 0.0, %v745
  %v747 = vpop.f32.mrb[0].mxu0
  %v748 = vadd.f32 0.0, %v747
  %v749 = vpop.f32.mrb[0].mxu0
  %v750 = vadd.f32 0.0, %v749
  %v751 = vpop.f32.mrb[0].mxu0
  %v752 = vadd.f32 0.0, %v751
  %753 = vmatprep.mubr.bf16.mxu0 0
  %754 = vmatmul.mubr.bf16.gmra.mrb[0].mxu0 %v212
  %v755 = vpop.f32.mrb[0].mxu0
  %v756 = vadd.f32 0.0, %v755
  %v757 = vpop.f32.mrb[0].mxu0
  %v758 = vadd.f32 0.0, %v757
  %v759 = vpop.f32.mrb[0].mxu0
  %v760 = vadd.f32 0.0, %v759
  %v761 = vpop.f32.mrb[0].mxu0
  %v762 = vadd.f32 0.0, %v761
  %763 = vmatprep.mubr.bf16.mxu0 0
  %764 = vmatmul.mubr.bf16.gmra.mrb[0].mxu0 %v215
  %v765 = vpop.f32.mrb[0].mxu0
  %v766 = vadd.f32 0.0, %v765
  %v767 = vpop.f32.mrb[0].mxu0
  %v768 = vadd.f32 0.0, %v767
  %v769 = vpop.f32.mrb[0].mxu0
  %v770 = vadd.f32 0.0, %v769
  %v771 = vpop.f32.mrb[0].mxu0
  %v772 = vadd.f32 0.0, %v771
  %773 = vdwg.mxu0
  %v774 = vmul.f32 %v736, %v293
  %v775 = vmul.f32 %v738, %v293
  %v776 = vmul.f32 %v740, %v298
  %v777 = vmul.f32 %v742, %v298
  %v778 = vmul.f32 %v746, %v303
  %v779 = vmul.f32 %v748, %v303
  %v780 = vmul.f32 %v750, %v308
  %v781 = vmul.f32 %v752, %v308
  %v782 = vmul.f32 %v756, %v313
  %v783 = vmul.f32 %v758, %v313
  %v784 = vmul.f32 %v760, %v318
  %v785 = vmul.f32 %v762, %v318
  %v786 = vmul.f32 %v766, %v323
  %v787 = vmul.f32 %v768, %v323
  %v788 = vmul.f32 %v770, %v328
  %v789 = vmul.f32 %v772, %v328
  %v790 = vadd.f32 %v774, %v349
  %v791 = vadd.f32 %v775, %v349
  %v792 = vadd.f32 %v776, %v354
  %v793 = vadd.f32 %v777, %v354
  %v794 = vadd.f32 %v778, %v359
  %v795 = vadd.f32 %v779, %v359
  %v796 = vadd.f32 %v780, %v364
  %v797 = vadd.f32 %v781, %v364
  %v798 = vadd.f32 %v782, %v369
  %v799 = vadd.f32 %v783, %v369
  %v800 = vadd.f32 %v784, %v374
  %v801 = vadd.f32 %v785, %v374
  %v802 = vadd.f32 %v786, %v379
  %v803 = vadd.f32 %v787, %v379
  %v804 = vadd.f32 %v788, %v384
  %v805 = vadd.f32 %v789, %v384
  %v806 = vmax.f32 %v790, 0.0
  %v807 = vmax.f32 %v791, 0.0
  %v808 = vmax.f32 %v792, 0.0
  %v809 = vmax.f32 %v793, 0.0
  %v810 = vmax.f32 %v794, 0.0
  %v811 = vmax.f32 %v795, 0.0
  %v812 = vmax.f32 %v796, 0.0
  %v813 = vmax.f32 %v797, 0.0
  %v814 = vmax.f32 %v798, 0.0
  %v815 = vmax.f32 %v799, 0.0
  %v816 = vmax.f32 %v800, 0.0
  %v817 = vmax.f32 %v801, 0.0
  %v818 = vmax.f32 %v802, 0.0
  %v819 = vmax.f32 %v803, 0.0
  %v820 = vmax.f32 %v804, 0.0
  %v821 = vmax.f32 %v805, 0.0
  %v822 = vpack.c.bf16 %v808, %v806
  %v823 = vpack.c.bf16 %v809, %v807
  %v824 = vpack.c.bf16 %v812, %v810
  %v825 = vpack.c.bf16 %v813, %v811
  %v826 = vpack.c.bf16 %v816, %v814
  %v827 = vpack.c.bf16 %v817, %v815
  %v828 = vpack.c.bf16 %v820, %v818
  %v829 = vpack.c.bf16 %v821, %v819
  %v838 = vunpack.c.l.b16 %v822
  %v839 = vunpack.c.l.b16 %v823
  %v840 = vunpack.c.h.b16 %v822
  %v841 = vunpack.c.h.b16 %v823
  %v842 = vunpack.c.l.b16 %v824
  %v843 = vunpack.c.l.b16 %v825
  %v844 = vunpack.c.h.b16 %v824
  %v845 = vunpack.c.h.b16 %v825
  %v846 = vunpack.c.l.b16 %v826
  %v847 = vunpack.c.l.b16 %v827
  %v848 = vunpack.c.h.b16 %v826
  %v849 = vunpack.c.h.b16 %v827
  %v850 = vunpack.c.l.b16 %v828
  %v851 = vunpack.c.l.b16 %v829
  %v852 = vunpack.c.h.b16 %v828
  %v853 = vunpack.c.h.b16 %v829
  %v854 = vpack.c.b16 %v839, %v838
  %v855 = vpack.c.b16 %v841, %v840
  %v856 = vpack.c.b16 %v843, %v842
  %v857 = vpack.c.b16 %v845, %v844
  %v858 = vpack.c.b16 %v847, %v846
  %v859 = vpack.c.b16 %v849, %v848
  %v860 = vpack.c.b16 %v851, %v850
  %v861 = vpack.c.b16 %v853, %v852
  %s870 = scalar_lea.vmem %s56, 64
  %871 = vst [vmem:[%s870] sm:$0xff] %v854
  %872 = vst [vmem:[%s870 + $0x8] sm:$0xff] %v855
  %873 = vst [vmem:[%s870 + $0x10] sm:$0xff] %v856
  %874 = vst [vmem:[%s870 + $0x18] sm:$0xff] %v857
  %875 = vst [vmem:[%s870 + $0x20] sm:$0xff] %v858
  %876 = vst [vmem:[%s870 + $0x28] sm:$0xff] %v859
  %877 = vst [vmem:[%s870 + $0x30] sm:$0xff] %v860
  %878 = vst [vmem:[%s870 + $0x38] sm:$0xff] %v861
  %879 = vmatprep.subr.bf16.mxu0 %v823
  %880 = vmatpush1.bf16.msra.mxu0 %v822
  %881 = vmatprep.subr.bf16.mxu0 %v825
  %882 = vmatpush1.bf16.msra.mxu0 %v824
  %883 = vmatprep.subr.bf16.mxu0 %v827
  %884 = vmatpush1.bf16.msra.mxu0 %v826
  %885 = vmatprep.subr.bf16.mxu0 %v829
  %886 = vmatpush1.bf16.msra.mxu0 %v828
  %887 = vmatprep.subr.bf16.mxu0 0
  %888 = vmatpush1.bf16.msra.mxu0 0
  %889 = vmatprep.subr.bf16.mxu0 0
  %890 = vmatpush1.bf16.msra.mxu0 0
  %891 = vmatprep.subr.bf16.mxu0 0
  %892 = vmatpush1.bf16.msra.mxu0 0
  %893 = vmatprep.subr.bf16.mxu0 0
  %894 = vmatpush1.bf16.msra.mxu0 0
  %895 = vmatprep.subr.bf16.mxu0 0
  %896 = vmatpush1.bf16.msra.mxu0 0
  %897 = vmatprep.subr.bf16.mxu0 0
  %898 = vmatpush1.bf16.msra.mxu0 0
  %899 = vmatprep.subr.bf16.mxu0 0
  %900 = vmatpush1.bf16.msra.mxu0 0
  %901 = vmatprep.subr.bf16.mxu0 0
  %902 = vmatpush1.bf16.msra.mxu0 0
  %903 = vmatprep.subr.bf16.mxu0 0
  %904 = vmatpush1.bf16.msra.mxu0 0
  %905 = vmatprep.subr.bf16.mxu0 0
  %906 = vmatpush1.bf16.msra.mxu0 0
  %907 = vmatprep.subr.bf16.mxu0 0
  %908 = vmatpush1.bf16.msra.mxu0 0
  %909 = vmatprep.subr.bf16.mxu0 0
  %910 = vmatpush1.bf16.msra.mxu0 0
  %911 = vmatprep.mubr.bf16.mxu0 0
  %912 = vmatmul.mubr.bf16.gmra.mrb[0].mxu0 %v496
  %v913 = vpop.f32.mrb[0].mxu0
  %v914 = vadd.f32 0.0, %v913
  %v915 = vpop.f32.mrb[0].mxu0
  %v916 = vadd.f32 0.0, %v915
  %v917 = vpop.f32.mrb[0].mxu0
  %v918 = vadd.f32 0.0, %v917
  %v919 = vpop.f32.mrb[0].mxu0
  %v920 = vadd.f32 0.0, %v919
  %921 = vmatprep.mubr.bf16.mxu0 0
  %922 = vmatmul.mubr.bf16.gmra.mrb[0].mxu0 %v499
  %v923 = vpop.f32.mrb[0].mxu0
  %v924 = vadd.f32 0.0, %v923
  %v925 = vpop.f32.mrb[0].mxu0
  %v926 = vadd.f32 0.0, %v925
  %v927 = vpop.f32.mrb[0].mxu0
  %v928 = vadd.f32 0.0, %v927
  %v929 = vpop.f32.mrb[0].mxu0
  %v930 = vadd.f32 0.0, %v929
  %931 = vmatprep.mubr.bf16.mxu0 0
  %932 = vmatmul.mubr.bf16.gmra.mrb[0].mxu0 %v502
  %v933 = vpop.f32.mrb[0].mxu0
  %v934 = vadd.f32 0.0, %v933
  %v935 = vpop.f32.mrb[0].mxu0
  %v936 = vadd.f32 0.0, %v935
  %v937 = vpop.f32.mrb[0].mxu0
  %v938 = vadd.f32 0.0, %v937
  %v939 = vpop.f32.mrb[0].mxu0
  %v940 = vadd.f32 0.0, %v939
  %941 = vmatprep.mubr.bf16.mxu0 0
  %942 = vmatmul.mubr.bf16.gmra.mrb[0].mxu0 %v505
  %v943 = vpop.f32.mrb[0].mxu0
  %v944 = vadd.f32 0.0, %v943
  %v945 = vpop.f32.mrb[0].mxu0
  %v946 = vadd.f32 0.0, %v945
  %v947 = vpop.f32.mrb[0].mxu0
  %v948 = vadd.f32 0.0, %v947
  %v949 = vpop.f32.mrb[0].mxu0
  %v950 = vadd.f32 0.0, %v949
  %951 = vdwg.mxu0
  %v952 = vmul.f32 %v914, %v914
  %v953 = vmul.f32 %v918, %v918
  %v954 = vmul.f32 %v924, %v924
  %v955 = vmul.f32 %v928, %v928
  %v956 = vmul.f32 %v934, %v934
  %v957 = vmul.f32 %v938, %v938
  %v958 = vmul.f32 %v944, %v944
  %v959 = vmul.f32 %v948, %v948
  %v960 = vadd.f32 %v914, %v916
  %v961 = vadd.f32 %v918, %v920
  %v962 = vadd.f32 %v924, %v926
  %v963 = vadd.f32 %v928, %v930
  %v964 = vadd.f32 %v934, %v936
  %v965 = vadd.f32 %v938, %v940
  %v966 = vadd.f32 %v944, %v946
  %v967 = vadd.f32 %v948, %v950
  %v968 = vmul.f32 %v916, %v916
  %v969 = vmul.f32 %v920, %v920
  %v970 = vmul.f32 %v926, %v926
  %v971 = vmul.f32 %v930, %v930
  %v972 = vmul.f32 %v936, %v936
  %v973 = vmul.f32 %v940, %v940
  %v974 = vmul.f32 %v946, %v946
  %v975 = vmul.f32 %v950, %v950
  %v976 = vadd.f32 %v952, %v968
  %v977 = vadd.f32 %v953, %v969
  %v978 = vadd.f32 %v954, %v970
  %v979 = vadd.f32 %v955, %v971
  %v980 = vadd.f32 %v956, %v972
  %v981 = vadd.f32 %v957, %v973
  %v982 = vadd.f32 %v958, %v974
  %v983 = vadd.f32 %v959, %v975
  %v984 = vadd.f32 %v612, %v960
  %v985 = vadd.f32 %v613, %v961
  %v986 = vadd.f32 %v614, %v962
  %v987 = vadd.f32 %v615, %v963
  %v988 = vadd.f32 %v616, %v964
  %v989 = vadd.f32 %v617, %v965
  %v990 = vadd.f32 %v618, %v966
  %v991 = vadd.f32 %v619, %v967
  %v992 = vadd.f32 %v620, %v976
  %v993 = vadd.f32 %v621, %v977
  %v994 = vadd.f32 %v622, %v978
  %v995 = vadd.f32 %v623, %v979
  %v996 = vadd.f32 %v624, %v980
  %v997 = vadd.f32 %v625, %v981
  %v998 = vadd.f32 %v626, %v982
  %v999 = vadd.f32 %v627, %v983
  %v1000 = vld [vmem:[%s6] sm:$0xff]
  %v1001 = vld [vmem:[%s6 + $0x8] sm:$0xff]
  %v1002 = vld [vmem:[%s6 + $0x10] sm:$0xff]
  %v1003 = vld [vmem:[%s6 + $0x18] sm:$0xff]
  %v1004 = vld [vmem:[%s6 + $0x20] sm:$0xff]
  %v1005 = vld [vmem:[%s6 + $0x28] sm:$0xff]
  %v1006 = vld [vmem:[%s6 + $0x30] sm:$0xff]
  %v1007 = vld [vmem:[%s6 + $0x38] sm:$0xff]
  %v1008 = vadd.f32 %v1000, %v984
  %v1009 = vadd.f32 %v1001, %v985
  %v1010 = vadd.f32 %v1002, %v986
  %v1011 = vadd.f32 %v1003, %v987
  %v1012 = vadd.f32 %v1004, %v988
  %v1013 = vadd.f32 %v1005, %v989
  %v1014 = vadd.f32 %v1006, %v990
  %v1015 = vadd.f32 %v1007, %v991
  %1016 = vst [vmem:[%s6] sm:$0xff] %v1008
  %1017 = vst [vmem:[%s6 + $0x8] sm:$0xff] %v1009
  %1018 = vst [vmem:[%s6 + $0x10] sm:$0xff] %v1010
  %1019 = vst [vmem:[%s6 + $0x18] sm:$0xff] %v1011
  %1020 = vst [vmem:[%s6 + $0x20] sm:$0xff] %v1012
  %1021 = vst [vmem:[%s6 + $0x28] sm:$0xff] %v1013
  %1022 = vst [vmem:[%s6 + $0x30] sm:$0xff] %v1014
  %1023 = vst [vmem:[%s6 + $0x38] sm:$0xff] %v1015
  %v1024 = vld [vmem:[%s7] sm:$0xff]
  %v1025 = vld [vmem:[%s7 + $0x8] sm:$0xff]
  %v1026 = vld [vmem:[%s7 + $0x10] sm:$0xff]
  %v1027 = vld [vmem:[%s7 + $0x18] sm:$0xff]
  %v1028 = vld [vmem:[%s7 + $0x20] sm:$0xff]
  %v1029 = vld [vmem:[%s7 + $0x28] sm:$0xff]
  %v1030 = vld [vmem:[%s7 + $0x30] sm:$0xff]
  %v1031 = vld [vmem:[%s7 + $0x38] sm:$0xff]
  %v1032 = vadd.f32 %v1024, %v992
  %v1033 = vadd.f32 %v1025, %v993
  %v1034 = vadd.f32 %v1026, %v994
  %v1035 = vadd.f32 %v1027, %v995
  %v1036 = vadd.f32 %v1028, %v996
  %v1037 = vadd.f32 %v1029, %v997
  %v1038 = vadd.f32 %v1030, %v998
  %v1039 = vadd.f32 %v1031, %v999
  %1040 = vst [vmem:[%s7] sm:$0xff] %v1032
  %1041 = vst [vmem:[%s7 + $0x8] sm:$0xff] %v1033
  %1042 = vst [vmem:[%s7 + $0x10] sm:$0xff] %v1034
  %1043 = vst [vmem:[%s7 + $0x18] sm:$0xff] %v1035
  %1044 = vst [vmem:[%s7 + $0x20] sm:$0xff] %v1036
  %1045 = vst [vmem:[%s7 + $0x28] sm:$0xff] %v1037
  %1046 = vst [vmem:[%s7 + $0x30] sm:$0xff] %v1038
  %1047 = vst [vmem:[%s7 + $0x38] sm:$0xff] %v1039
  %s1048 = sadd.s32 0, 0
  %s1049 = smul.u32 2, %s1048
  %p1050 = scmp.lt.s32.totalorder %s1049, 1
  %s1051 = scalar_select %p1050, %s1049, 1
  %s1052 = smul.addr %s1051, 4
  %s1053 = scalar_lea.vmem %s5, %s1052
  // Predicated region
  $region26: #{resnet18_autoencoder_forward.7} parent=0 // pred_check
    _
  $region27: #{resnet18_autoencoder_forward.7} parent=0 // pred_check_branch
    %1055 = sbr.rel (0) target = $region29
  $region28: #{resnet18_autoencoder_forward.7} parent=0 // pred_region
    %s1056 = sadd.s32 0, 0
    %s1057 = smul.u32 2, %s1056
  $region29: #{resnet18_autoencoder_forward.7} parent=0 // pred_fallthru
    _
  // Predicated region
  $region30: #{resnet18_autoencoder_forward.7} parent=0 // pred_check
    _
  $region31: #{resnet18_autoencoder_forward.7} parent=0 // pred_check_branch
    %1059 = sbr.rel (0) target = $region33
  $region32: #{resnet18_autoencoder_forward.7} parent=0 // pred_region
    _
  $region33: #{resnet18_autoencoder_forward.7} parent=0 // pred_fallthru
    _
  // Predicated region
  $region34: #{resnet18_autoencoder_forward.7} parent=0 // pred_check
    _
  $region35: #{resnet18_autoencoder_forward.7} parent=0 // pred_check_branch
    %1061 = sbr.rel (0) target = $region37
  $region36: #{resnet18_autoencoder_forward.7} parent=0 // pred_region
    _
  $region37: #{resnet18_autoencoder_forward.7} parent=0 // pred_fallthru
    _
  // Predicated region
  $region38: #{resnet18_autoencoder_forward.7} parent=0 // pred_check
    _
  $region39: #{resnet18_autoencoder_forward.7} parent=0 // pred_check_branch
    %1063 = sbr.rel (0) target = $region41
  $region40: #{resnet18_autoencoder_forward.7} parent=0 // pred_region
    %s1064 = sadd.s32 0, 0
    %s1065 = smul.u32 2, %s1064
    %p1066 = scmp.lt.s32.totalorder %s1065, 1
    %s1067 = scalar_select %p1066, %s1065, 1
    %s1068 = smul.addr %s1067, 4
    %s1069 = scalar_lea.vmem %s5, %s1068
  $region41: #{resnet18_autoencoder_forward.7} parent=0 // pred_fallthru
    _
  // Predicated region
  $region42: #{resnet18_autoencoder_forward.7} parent=0 // pred_check
    _
  $region43: #{resnet18_autoencoder_forward.7} parent=0 // pred_check_branch
    %1071 = sbr.rel (0) target = $region45
  $region44: #{resnet18_autoencoder_forward.7} parent=0 // pred_region
    _
  $region45: #{resnet18_autoencoder_forward.7} parent=0 // pred_fallthru
    _
  // Predicated region
  $region46: #{resnet18_autoencoder_forward.7} parent=0 // pred_check
    _
  $region47: #{resnet18_autoencoder_forward.7} parent=0 // pred_check_branch
    %1073 = sbr.rel (0) target = $region49
  $region48: #{resnet18_autoencoder_forward.7} parent=0 // pred_region
    _
  $region49: #{resnet18_autoencoder_forward.7} parent=0 // pred_fallthru
    _

// kernel: resnet18_autoencoder_forward.6
$region0: #{resnet18_autoencoder_forward.6}
  #allocation0 [shape = 'u32[]', space=smem, size = 0x4, offset = 0x4, fixed_abs, tag = 'smem constant byte address 0x4 - core index']
  #allocation1 [shape = 'u32[144,128]{1,0:T(1,128)}', space=vmem, size = 0x12000, scoped, tag = 'internal scratch']
  %s0 = inlined_call_operand.vmem [shape: bf16[2,128,256], index: 0, kind: input, shape index: {}]
  %s1 = inlined_call_operand.vmem [shape: bf16[96,128], index: 1, kind: input, shape index: {}]
  %s2 = inlined_call_operand.vmem [shape: f32[96,1], index: 2, kind: input, shape index: {}]
  %s3 = inlined_call_operand.vmem [shape: f32[96,1], index: 3, kind: input, shape index: {}]
  %s4 = inlined_call_operand.vmem [shape: bf16[64,96], index: 4, kind: input, shape index: {}]
  %s5 = inlined_call_operand.vmem [shape: bf16[2,96,256], index: 5, kind: output, shape index: {0}]
  %s6 = inlined_call_operand.vmem [shape: f32[1,64,128], index: 6, kind: output, shape index: {1}]
  %s7 = inlined_call_operand.vmem [shape: f32[1,64,128], index: 7, kind: output, shape index: {2}]
  %8 = xla_tuple %s5, %s6, %s7
  %s9 = sld [smem:[#allocation0]]
  $region50: #{resnet18_autoencoder_forward.6} parent=0
    _
  %s11 = ssub.s32 1, %s9
  %s12 = scalar_select 0, %s11, %s9
  // Predicated region
  $region2: #{resnet18_autoencoder_forward.6} parent=0 // pred_check
    _
  $region3: #{resnet18_autoencoder_forward.6} parent=0 // pred_check_branch
    %14 = sbr.rel (0) target = $region5
  $region4: #{resnet18_autoencoder_forward.6} parent=0 // pred_region
    %s15 = sadd.s32 0, 0
    %s16 = smul.u32 2, %s15
    %p17 = scmp.lt.s32.totalorder %s16, 1
    %s18 = scalar_select %p17, %s16, 1
    %s19 = smul.addr %s18, 4
    %s20 = scalar_lea.vmem %s0, %s19
    %s21 = sadd.s32 0, 0
    %s22 = smul.u32 2, %s21
  $region5: #{resnet18_autoencoder_forward.6} parent=0 // pred_fallthru
    _
  // Predicated region
  $region6: #{resnet18_autoencoder_forward.6} parent=0 // pred_check
    _
  $region7: #{resnet18_autoencoder_forward.6} parent=0 // pred_check_branch
    %24 = sbr.rel (0) target = $region9
  $region8: #{resnet18_autoencoder_forward.6} parent=0 // pred_region
    _
  $region9: #{resnet18_autoencoder_forward.6} parent=0 // pred_fallthru
    _
  // Predicated region
  $region10: #{resnet18_autoencoder_forward.6} parent=0 // pred_check
    _
  $region11: #{resnet18_autoencoder_forward.6} parent=0 // pred_check_branch
    %26 = sbr.rel (0) target = $region13
  $region12: #{resnet18_autoencoder_forward.6} parent=0 // pred_region
    _
  $region13: #{resnet18_autoencoder_forward.6} parent=0 // pred_fallthru
    _
  // Predicated region
  $region14: #{resnet18_autoencoder_forward.6} parent=0 // pred_check
    _
  $region15: #{resnet18_autoencoder_forward.6} parent=0 // pred_check_branch
    %28 = sbr.rel (0) target = $region17
  $region16: #{resnet18_autoencoder_forward.6} parent=0 // pred_region
    _
  $region17: #{resnet18_autoencoder_forward.6} parent=0 // pred_fallthru
    _
  // Predicated region
  $region18: #{resnet18_autoencoder_forward.6} parent=0 // pred_check
    _
  $region19: #{resnet18_autoencoder_forward.6} parent=0 // pred_check_branch
    %30 = sbr.rel (0) target = $region21
  $region20: #{resnet18_autoencoder_forward.6} parent=0 // pred_region
    _
  $region21: #{resnet18_autoencoder_forward.6} parent=0 // pred_fallthru
    _
  %s31 = sadd.s32 0, 0
  %s32 = smul.u32 2, %s31
  %p33 = scmp.lt.s32.totalorder %s32, 1
  %s34 = scalar_select %p33, %s32, 1
  %s35 = smul.addr %s34, 4
  %s36 = scalar_lea.vmem %s0, %s35
  %s37 = sadd.s32 0, 0
  %s38 = smul.u32 2, %s37
  %p39 = scmp.lt.s32.totalorder %s38, 1
  %s40 = scalar_select %p39, %s38, 1
  %s41 = smul.addr %s40, 4
  %s42 = scalar_lea.vmem %s5, %s41
  %s43 = sadd.s32 0, 0
  %s44 = smul.u32 2, %s43
  %p45 = scmp.lt.s32.totalorder %s44, 1
  %s46 = scalar_select %p45, %s44, 1
  %s47 = smul.addr %s46, 4
  %s48 = scalar_lea.vmem %s0, %s47
  %s49 = sadd.s32 0, 0
  %s50 = smul.u32 2, %s49
  %s51 = sadd.s32 0, 0
  %s52 = smul.u32 2, %s51
  %p53 = scmp.lt.s32.totalorder %s52, 1
  %s54 = scalar_select %p53, %s52, 1
  %s55 = smul.addr %s54, 4
  %s56 = scalar_lea.vmem %s5, %s55
  %s57 = sadd.s32 0, 0
  %s58 = smul.u32 2, %s57
  %p60 = scmp.eq.s32.totalorder 0, 0
  // Predicated region
  $region22: #{resnet18_autoencoder_forward.6} parent=0 // pred_check
    %p61 = pneg %p60
  $region23: #{resnet18_autoencoder_forward.6} parent=0 // pred_check_branch
    %63 = sbr.rel (%p61) target = $region25
  $region24: #{resnet18_autoencoder_forward.6} parent=0 // pred_region
    %64 = vst [vmem:[%s6] sm:$0xff] 0.0
    %65 = vst [vmem:[%s6 + $0x8] sm:$0xff] 0.0
    %66 = vst [vmem:[%s6 + $0x10] sm:$0xff] 0.0
    %67 = vst [vmem:[%s6 + $0x18] sm:$0xff] 0.0
    %68 = vst [vmem:[%s6 + $0x20] sm:$0xff] 0.0
    %69 = vst [vmem:[%s6 + $0x28] sm:$0xff] 0.0
    %70 = vst [vmem:[%s6 + $0x30] sm:$0xff] 0.0
    %71 = vst [vmem:[%s6 + $0x38] sm:$0xff] 0.0
    %72 = vst [vmem:[%s7] sm:$0xff] 0.0
    %73 = vst [vmem:[%s7 + $0x8] sm:$0xff] 0.0
    %74 = vst [vmem:[%s7 + $0x10] sm:$0xff] 0.0
    %75 = vst [vmem:[%s7 + $0x18] sm:$0xff] 0.0
    %76 = vst [vmem:[%s7 + $0x20] sm:$0xff] 0.0
    %77 = vst [vmem:[%s7 + $0x28] sm:$0xff] 0.0
    %78 = vst [vmem:[%s7 + $0x30] sm:$0xff] 0.0
    %79 = vst [vmem:[%s7 + $0x38] sm:$0xff] 0.0
  $region25: #{resnet18_autoencoder_forward.6} parent=0 // pred_fallthru
    _
  %v80 = vld [vmem:[%s1] sm:$0xf]
  %v81 = vld [vmem:[%s1 + $0x4] sm:$0xf]
  %v82 = vld [vmem:[%s1 + $0x8] sm:$0xf]
  %v83 = vld [vmem:[%s1 + $0xc] sm:$0xf]
  %v84 = vld [vmem:[%s1 + $0x10] sm:$0xf]
  %v85 = vld [vmem:[%s1 + $0x14] sm:$0xf]
  %v86 = vld [vmem:[%s1 + $0x18] sm:$0xf]
  %v87 = vld [vmem:[%s1 + $0x1c] sm:$0xf]
  %v88 = vld [vmem:[%s1 + $0x20] sm:$0xf]
  %v89 = vld [vmem:[%s1 + $0x24] sm:$0xf]
  %v90 = vld [vmem:[%s1 + $0x28] sm:$0xf]
  %v91 = vld [vmem:[%s1 + $0x2c] sm:$0xf]
  %v92 = vld [vmem:[%s4] sm:$0xf]
  %v93 = vld [vmem:[%s4 + $0x4] sm:$0xf]
  %v94 = vld [vmem:[%s4 + $0x8] sm:$0xf]
  %v95 = vld [vmem:[%s4 + $0xc] sm:$0xf]
  %v96 = vld [vmem:[%s4 + $0x10] sm:$0xf]
  %v97 = vld [vmem:[%s4 + $0x14] sm:$0xf]
  %v98 = vld [vmem:[%s4 + $0x18] sm:$0xf]
  %v99 = vld [vmem:[%s4 + $0x1c] sm:$0xf]
  %v100 = vld [vmem:[%s2] sm:$0xff]
  %v101 = vld [vmem:[%s2 + $0x8] sm:$0xff]
  %v102 = vld [vmem:[%s2 + $0x10] sm:$0xff]
  %v103 = vld [vmem:[%s2 + $0x18] sm:$0xff]
  %v104 = vld [vmem:[%s2 + $0x20] sm:$0xff]
  %v105 = vld [vmem:[%s2 + $0x28] sm:$0xff]
  %v106 = vld [vmem:[%s2 + $0x30] sm:$0xff]
  %v107 = vld [vmem:[%s2 + $0x38] sm:$0xff]
  %v108 = vld [vmem:[%s2 + $0x40] sm:$0xff]
  %v109 = vld [vmem:[%s2 + $0x48] sm:$0xff]
  %v110 = vld [vmem:[%s2 + $0x50] sm:$0xff]
  %v111 = vld [vmem:[%s2 + $0x58] sm:$0xff]
  %v112 = vld [vmem:[%s3] sm:$0xff]
  %v113 = vld [vmem:[%s3 + $0x8] sm:$0xff]
  %v114 = vld [vmem:[%s3 + $0x10] sm:$0xff]
  %v115 = vld [vmem:[%s3 + $0x18] sm:$0xff]
  %v116 = vld [vmem:[%s3 + $0x20] sm:$0xff]
  %v117 = vld [vmem:[%s3 + $0x28] sm:$0xff]
  %v118 = vld [vmem:[%s3 + $0x30] sm:$0xff]
  %v119 = vld [vmem:[%s3 + $0x38] sm:$0xff]
  %v120 = vld [vmem:[%s3 + $0x40] sm:$0xff]
  %v121 = vld [vmem:[%s3 + $0x48] sm:$0xff]
  %v122 = vld [vmem:[%s3 + $0x50] sm:$0xff]
  %v123 = vld [vmem:[%s3 + $0x58] sm:$0xff]
  %v124 = vld [vmem:[%s48] sm:$0xff]
  %v125 = vld [vmem:[%s48 + $0x8] sm:$0xff]
  %v126 = vld [vmem:[%s48 + $0x10] sm:$0xff]
  %v127 = vld [vmem:[%s48 + $0x18] sm:$0xff]
  %v128 = vld [vmem:[%s48 + $0x20] sm:$0xff]
  %v129 = vld [vmem:[%s48 + $0x28] sm:$0xff]
  %v130 = vld [vmem:[%s48 + $0x30] sm:$0xff]
  %v131 = vld [vmem:[%s48 + $0x38] sm:$0xff]
  %v132 = vld [vmem:[%s48 + $0x40] sm:$0xff]
  %v133 = vld [vmem:[%s48 + $0x48] sm:$0xff]
  %v134 = vld [vmem:[%s48 + $0x50] sm:$0xff]
  %v135 = vld [vmem:[%s48 + $0x58] sm:$0xff]
  %v136 = vld [vmem:[%s48 + $0x60] sm:$0xff]
  %v137 = vld [vmem:[%s48 + $0x68] sm:$0xff]
  %v138 = vld [vmem:[%s48 + $0x70] sm:$0xff]
  %v139 = vld [vmem:[%s48 + $0x78] sm:$0xff]
  %v152 = vunpack.c.l.b16 %v80
  %v153 = vunpack.c.l.b16 %v81
  %v154 = vunpack.c.l.b16 %v82
  %v155 = vunpack.c.l.b16 %v83
  %v156 = vunpack.c.l.b16 %v84
  %v157 = vunpack.c.l.b16 %v85
  %v158 = vunpack.c.l.b16 %v86
  %v159 = vunpack.c.l.b16 %v87
  %v160 = vunpack.c.l.b16 %v88
  %v161 = vunpack.c.l.b16 %v89
  %v162 = vunpack.c.l.b16 %v90
  %v163 = vunpack.c.l.b16 %v91
  %v164 = vpack.c.b16 %v153, %v152
  %v165 = vpack.c.b16 %v155, %v154
  %v166 = vpack.c.b16 %v157, %v156
  %v167 = vpack.c.b16 %v159, %v158
  %v168 = vpack.c.b16 %v161, %v160
  %v169 = vpack.c.b16 %v163, %v162
  %v192 = vunpack.c.l.b16 %v124
  %v193 = vunpack.c.h.b16 %v124
  %v194 = vunpack.c.l.b16 %v125
  %v195 = vunpack.c.h.b16 %v125
  %v196 = vunpack.c.l.b16 %v126
  %v197 = vunpack.c.h.b16 %v126
  %v198 = vunpack.c.l.b16 %v127
  %v199 = vunpack.c.h.b16 %v127
  %v200 = vunpack.c.l.b16 %v128
  %v201 = vunpack.c.h.b16 %v128
  %v202 = vunpack.c.l.b16 %v129
  %v203 = vunpack.c.h.b16 %v129
  %v204 = vunpack.c.l.b16 %v130
  %v205 = vunpack.c.h.b16 %v130
  %v206 = vunpack.c.l.b16 %v131
  %v207 = vunpack.c.h.b16 %v131
  %v208 = vunpack.c.l.b16 %v132
  %v209 = vunpack.c.h.b16 %v132
  %v210 = vunpack.c.l.b16 %v133
  %v211 = vunpack.c.h.b16 %v133
  %v212 = vunpack.c.l.b16 %v134
  %v213 = vunpack.c.h.b16 %v134
  %v214 = vunpack.c.l.b16 %v135
  %v215 = vunpack.c.h.b16 %v135
  %v216 = vunpack.c.l.b16 %v136
  %v217 = vunpack.c.h.b16 %v136
  %v218 = vunpack.c.l.b16 %v137
  %v219 = vunpack.c.h.b16 %v137
  %v220 = vunpack.c.l.b16 %v138
  %v221 = vunpack.c.h.b16 %v138
  %v222 = vunpack.c.l.b16 %v139
  %v223 = vunpack.c.h.b16 %v139
  %v224 = vpack.c.b16 %v194, %v192
  %v225 = vpack.c.b16 %v195, %v193
  %v226 = vpack.c.b16 %v198, %v196
  %v227 = vpack.c.b16 %v199, %v197
  %v228 = vpack.c.b16 %v202, %v200
  %v229 = vpack.c.b16 %v203, %v201
  %v230 = vpack.c.b16 %v206, %v204
  %v231 = vpack.c.b16 %v207, %v205
  %v232 = vpack.c.b16 %v210, %v208
  %v233 = vpack.c.b16 %v211, %v209
  %v234 = vpack.c.b16 %v214, %v212
  %v235 = vpack.c.b16 %v215, %v213
  %v236 = vpack.c.b16 %v218, %v216
  %v237 = vpack.c.b16 %v219, %v217
  %v238 = vpack.c.b16 %v222, %v220
  %v239 = vpack.c.b16 %v223, %v221
  %256 = vmatprep.subr.bf16.mxu0 %v225
  %257 = vmatpush1.bf16.msra.mxu0 %v224
  %258 = vmatprep.subr.bf16.mxu0 %v227
  %259 = vmatpush1.bf16.msra.mxu0 %v226
  %260 = vmatprep.subr.bf16.mxu0 %v229
  %261 = vmatpush1.bf16.msra.mxu0 %v228
  %262 = vmatprep.subr.bf16.mxu0 %v231
  %263 = vmatpush1.bf16.msra.mxu0 %v230
  %264 = vmatprep.subr.bf16.mxu0 %v233
  %265 = vmatpush1.bf16.msra.mxu0 %v232
  %266 = vmatprep.subr.bf16.mxu0 %v235
  %267 = vmatpush1.bf16.msra.mxu0 %v234
  %268 = vmatprep.subr.bf16.mxu0 %v237
  %269 = vmatpush1.bf16.msra.mxu0 %v236
  %270 = vmatprep.subr.bf16.mxu0 %v239
  %271 = vmatpush1.bf16.msra.mxu0 %v238
  %272 = vmatprep.subr.bf16.mxu0 0
  %273 = vmatpush1.bf16.msra.mxu0 0
  %274 = vmatprep.subr.bf16.mxu0 0
  %275 = vmatpush1.bf16.msra.mxu0 0
  %276 = vmatprep.subr.bf16.mxu0 0
  %277 = vmatpush1.bf16.msra.mxu0 0
  %278 = vmatprep.subr.bf16.mxu0 0
  %279 = vmatpush1.bf16.msra.mxu0 0
  %280 = vmatprep.subr.bf16.mxu0 0
  %281 = vmatpush1.bf16.msra.mxu0 0
  %282 = vmatprep.subr.bf16.mxu0 0
  %283 = vmatpush1.bf16.msra.mxu0 0
  %284 = vmatprep.subr.bf16.mxu0 0
  %285 = vmatpush1.bf16.msra.mxu0 0
  %286 = vmatprep.subr.bf16.mxu0 0
  %287 = vmatpush1.bf16.msra.mxu0 0
  %288 = vmatprep.mubr.bf16.mxu0 0
  %289 = vmatmul.mubr.bf16.gmra.mrb[0].mxu0 %v164
  %v290 = vpop.f32.mrb[0].mxu0
  %v291 = vadd.f32 0.0, %v290
  %v292 = vpop.f32.mrb[0].mxu0
  %v293 = vadd.f32 0.0, %v292
  %v294 = vpop.f32.mrb[0].mxu0
  %v295 = vadd.f32 0.0, %v294
  %v296 = vpop.f32.mrb[0].mxu0
  %v297 = vadd.f32 0.0, %v296
  %298 = vmatprep.mubr.bf16.mxu0 0
  %299 = vmatmul.mubr.bf16.gmra.mrb[0].mxu0 %v165
  %v300 = vpop.f32.mrb[0].mxu0
  %v301 = vadd.f32 0.0, %v300
  %v302 = vpop.f32.mrb[0].mxu0
  %v303 = vadd.f32 0.0, %v302
  %v304 = vpop.f32.mrb[0].mxu0
  %v305 = vadd.f32 0.0, %v304
  %v306 = vpop.f32.mrb[0].mxu0
  %v307 = vadd.f32 0.0, %v306
  %308 = vmatprep.mubr.bf16.mxu0 0
  %309 = vmatmul.mubr.bf16.gmra.mrb[0].mxu0 %v166
  %v310 = vpop.f32.mrb[0].mxu0
  %v311 = vadd.f32 0.0, %v310
  %v312 = vpop.f32.mrb[0].mxu0
  %v313 = vadd.f32 0.0, %v312
  %v314 = vpop.f32.mrb[0].mxu0
  %v315 = vadd.f32 0.0, %v314
  %v316 = vpop.f32.mrb[0].mxu0
  %v317 = vadd.f32 0.0, %v316
  %318 = vmatprep.mubr.bf16.mxu0 0
  %319 = vmatmul.mubr.bf16.gmra.mrb[0].mxu0 %v167
  %v320 = vpop.f32.mrb[0].mxu0
  %v321 = vadd.f32 0.0, %v320
  %v322 = vpop.f32.mrb[0].mxu0
  %v323 = vadd.f32 0.0, %v322
  %v324 = vpop.f32.mrb[0].mxu0
  %v325 = vadd.f32 0.0, %v324
  %v326 = vpop.f32.mrb[0].mxu0
  %v327 = vadd.f32 0.0, %v326
  %328 = vmatprep.mubr.bf16.mxu0 0
  %329 = vmatmul.mubr.bf16.gmra.mrb[0].mxu0 %v168
  %v330 = vpop.f32.mrb[0].mxu0
  %v331 = vadd.f32 0.0, %v330
  %v332 = vpop.f32.mrb[0].mxu0
  %v333 = vadd.f32 0.0, %v332
  %v334 = vpop.f32.mrb[0].mxu0
  %v335 = vadd.f32 0.0, %v334
  %v336 = vpop.f32.mrb[0].mxu0
  %v337 = vadd.f32 0.0, %v336
  %338 = vmatprep.mubr.bf16.mxu0 0
  %339 = vmatmul.mubr.bf16.gmra.mrb[0].mxu0 %v169
  %v340 = vpop.f32.mrb[0].mxu0
  %v341 = vadd.f32 0.0, %v340
  %v342 = vpop.f32.mrb[0].mxu0
  %v343 = vadd.f32 0.0, %v342
  %v344 = vpop.f32.mrb[0].mxu0
  %v345 = vadd.f32 0.0, %v344
  %v346 = vpop.f32.mrb[0].mxu0
  %v347 = vadd.f32 0.0, %v346
  %348 = vdwg.mxu0
  %350 = vset.pattern.permute.xlu0 0
  %351 = vperm.xlu0 %350, %v100
  %v352 = vpop.permute.xlu0 %351
  %355 = vset.pattern.permute.xlu0 0
  %356 = vperm.xlu0 %355, %v101
  %v357 = vpop.permute.xlu0 %356
  %360 = vset.pattern.permute.xlu0 0
  %361 = vperm.xlu0 %360, %v102
  %v362 = vpop.permute.xlu0 %361
  %365 = vset.pattern.permute.xlu0 0
  %366 = vperm.xlu0 %365, %v103
  %v367 = vpop.permute.xlu0 %366
  %370 = vset.pattern.permute.xlu0 0
  %371 = vperm.xlu0 %370, %v104
  %v372 = vpop.permute.xlu0 %371
  %375 = vset.pattern.permute.xlu0 0
  %376 = vperm.xlu0 %375, %v105
  %v377 = vpop.permute.xlu0 %376
  %380 = vset.pattern.permute.xlu0 0
  %381 = vperm.xlu0 %380, %v106
  %v382 = vpop.permute.xlu0 %381
  %385 = vset.pattern.permute.xlu0 0
  %386 = vperm.xlu0 %385, %v107
  %v387 = vpop.permute.xlu0 %386
  %390 = vset.pattern.permute.xlu0 0
  %391 = vperm.xlu0 %390, %v108
  %v392 = vpop.permute.xlu0 %391
  %395 = vset.pattern.permute.xlu0 0
  %396 = vperm.xlu0 %395, %v109
  %v397 = vpop.permute.xlu0 %396
  %400 = vset.pattern.permute.xlu0 0
  %401 = vperm.xlu0 %400, %v110
  %v402 = vpop.permute.xlu0 %401
  %405 = vset.pattern.permute.xlu0 0
  %406 = vperm.xlu0 %405, %v111
  %v407 = vpop.permute.xlu0 %406
  %v409 = vmul.f32 %v291, %v352
  %v410 = vmul.f32 %v293, %v352
  %v411 = vmul.f32 %v295, %v357
  %v412 = vmul.f32 %v297, %v357
  %v413 = vmul.f32 %v301, %v362
  %v414 = vmul.f32 %v303, %v362
  %v415 = vmul.f32 %v305, %v367
  %v416 = vmul.f32 %v307, %v367
  %v417 = vmul.f32 %v311, %v372
  %v418 = vmul.f32 %v313, %v372
  %v419 = vmul.f32 %v315, %v377
  %v420 = vmul.f32 %v317, %v377
  %v421 = vmul.f32 %v321, %v382
  %v422 = vmul.f32 %v323, %v382
  %v423 = vmul.f32 %v325, %v387
  %v424 = vmul.f32 %v327, %v387
  %v425 = vmul.f32 %v331, %v392
  %v426 = vmul.f32 %v333, %v392
  %v427 = vmul.f32 %v335, %v397
  %v428 = vmul.f32 %v337, %v397
  %v429 = vmul.f32 %v341, %v402
  %v430 = vmul.f32 %v343, %v402
  %v431 = vmul.f32 %v345, %v407
  %v432 = vmul.f32 %v347, %v407
  %434 = vset.pattern.permute.xlu0 0
  %435 = vperm.xlu0 %434, %v112
  %v436 = vpop.permute.xlu0 %435
  %439 = vset.pattern.permute.xlu0 0
  %440 = vperm.xlu0 %439, %v113
  %v441 = vpop.permute.xlu0 %440
  %444 = vset.pattern.permute.xlu0 0
  %445 = vperm.xlu0 %444, %v114
  %v446 = vpop.permute.xlu0 %445
  %449 = vset.pattern.permute.xlu0 0
  %450 = vperm.xlu0 %449, %v115
  %v451 = vpop.permute.xlu0 %450
  %454 = vset.pattern.permute.xlu0 0
  %455 = vperm.xlu0 %454, %v116
  %v456 = vpop.permute.xlu0 %455
  %459 = vset.pattern.permute.xlu0 0
  %460 = vperm.xlu0 %459, %v117
  %v461 = vpop.permute.xlu0 %460
  %464 = vset.pattern.permute.xlu0 0
  %465 = vperm.xlu0 %464, %v118
  %v466 = vpop.permute.xlu0 %465
  %469 = vset.pattern.permute.xlu0 0
  %470 = vperm.xlu0 %469, %v119
  %v471 = vpop.permute.xlu0 %470
  %474 = vset.pattern.permute.xlu0 0
  %475 = vperm.xlu0 %474, %v120
  %v476 = vpop.permute.xlu0 %475
  %479 = vset.pattern.permute.xlu0 0
  %480 = vperm.xlu0 %479, %v121
  %v481 = vpop.permute.xlu0 %480
  %484 = vset.pattern.permute.xlu0 0
  %485 = vperm.xlu0 %484, %v122
  %v486 = vpop.permute.xlu0 %485
  %489 = vset.pattern.permute.xlu0 0
  %490 = vperm.xlu0 %489, %v123
  %v491 = vpop.permute.xlu0 %490
  %v493 = vadd.f32 %v409, %v436
  %v494 = vadd.f32 %v410, %v436
  %v495 = vadd.f32 %v411, %v441
  %v496 = vadd.f32 %v412, %v441
  %v497 = vadd.f32 %v413, %v446
  %v498 = vadd.f32 %v414, %v446
  %v499 = vadd.f32 %v415, %v451
  %v500 = vadd.f32 %v416, %v451
  %v501 = vadd.f32 %v417, %v456
  %v502 = vadd.f32 %v418, %v456
  %v503 = vadd.f32 %v419, %v461
  %v504 = vadd.f32 %v420, %v461
  %v505 = vadd.f32 %v421, %v466
  %v506 = vadd.f32 %v422, %v466
  %v507 = vadd.f32 %v423, %v471
  %v508 = vadd.f32 %v424, %v471
  %v509 = vadd.f32 %v425, %v476
  %v510 = vadd.f32 %v426, %v476
  %v511 = vadd.f32 %v427, %v481
  %v512 = vadd.f32 %v428, %v481
  %v513 = vadd.f32 %v429, %v486
  %v514 = vadd.f32 %v430, %v486
  %v515 = vadd.f32 %v431, %v491
  %v516 = vadd.f32 %v432, %v491
  %v517 = vmax.f32 %v493, 0.0
  %v518 = vmax.f32 %v494, 0.0
  %v519 = vmax.f32 %v495, 0.0
  %v520 = vmax.f32 %v496, 0.0
  %v521 = vmax.f32 %v497, 0.0
  %v522 = vmax.f32 %v498, 0.0
  %v523 = vmax.f32 %v499, 0.0
  %v524 = vmax.f32 %v500, 0.0
  %v525 = vmax.f32 %v501, 0.0
  %v526 = vmax.f32 %v502, 0.0
  %v527 = vmax.f32 %v503, 0.0
  %v528 = vmax.f32 %v504, 0.0
  %v529 = vmax.f32 %v505, 0.0
  %v530 = vmax.f32 %v506, 0.0
  %v531 = vmax.f32 %v507, 0.0
  %v532 = vmax.f32 %v508, 0.0
  %v533 = vmax.f32 %v509, 0.0
  %v534 = vmax.f32 %v510, 0.0
  %v535 = vmax.f32 %v511, 0.0
  %v536 = vmax.f32 %v512, 0.0
  %v537 = vmax.f32 %v513, 0.0
  %v538 = vmax.f32 %v514, 0.0
  %v539 = vmax.f32 %v515, 0.0
  %v540 = vmax.f32 %v516, 0.0
  %v541 = vpack.c.bf16 %v519, %v517
  %v542 = vpack.c.bf16 %v520, %v518
  %v543 = vpack.c.bf16 %v523, %v521
  %v544 = vpack.c.bf16 %v524, %v522
  %v545 = vpack.c.bf16 %v527, %v525
  %v546 = vpack.c.bf16 %v528, %v526
  %v547 = vpack.c.bf16 %v531, %v529
  %v548 = vpack.c.bf16 %v532, %v530
  %v549 = vpack.c.bf16 %v535, %v533
  %v550 = vpack.c.bf16 %v536, %v534
  %v551 = vpack.c.bf16 %v539, %v537
  %v552 = vpack.c.bf16 %v540, %v538
  %v565 = vunpack.c.l.b16 %v541
  %v566 = vunpack.c.l.b16 %v542
  %v567 = vunpack.c.h.b16 %v541
  %v568 = vunpack.c.h.b16 %v542
  %v569 = vunpack.c.l.b16 %v543
  %v570 = vunpack.c.l.b16 %v544
  %v571 = vunpack.c.h.b16 %v543
  %v572 = vunpack.c.h.b16 %v544
  %v573 = vunpack.c.l.b16 %v545
  %v574 = vunpack.c.l.b16 %v546
  %v575 = vunpack.c.h.b16 %v545
  %v576 = vunpack.c.h.b16 %v546
  %v577 = vunpack.c.l.b16 %v547
  %v578 = vunpack.c.l.b16 %v548
  %v579 = vunpack.c.h.b16 %v547
  %v580 = vunpack.c.h.b16 %v548
  %v581 = vunpack.c.l.b16 %v549
  %v582 = vunpack.c.l.b16 %v550
  %v583 = vunpack.c.h.b16 %v549
  %v584 = vunpack.c.h.b16 %v550
  %v585 = vunpack.c.l.b16 %v551
  %v586 = vunpack.c.l.b16 %v552
  %v587 = vunpack.c.h.b16 %v551
  %v588 = vunpack.c.h.b16 %v552
  %v589 = vpack.c.b16 %v566, %v565
  %v590 = vpack.c.b16 %v568, %v567
  %v591 = vpack.c.b16 %v570, %v569
  %v592 = vpack.c.b16 %v572, %v571
  %v593 = vpack.c.b16 %v574, %v573
  %v594 = vpack.c.b16 %v576, %v575
  %v595 = vpack.c.b16 %v578, %v577
  %v596 = vpack.c.b16 %v580, %v579
  %v597 = vpack.c.b16 %v582, %v581
  %v598 = vpack.c.b16 %v584, %v583
  %v599 = vpack.c.b16 %v586, %v585
  %v600 = vpack.c.b16 %v588, %v587
  %613 = vst [vmem:[%s56] sm:$0xff] %v589
  %614 = vst [vmem:[%s56 + $0x8] sm:$0xff] %v590
  %615 = vst [vmem:[%s56 + $0x10] sm:$0xff] %v591
  %616 = vst [vmem:[%s56 + $0x18] sm:$0xff] %v592
  %617 = vst [vmem:[%s56 + $0x20] sm:$0xff] %v593
  %618 = vst [vmem:[%s56 + $0x28] sm:$0xff] %v594
  %619 = vst [vmem:[%s56 + $0x30] sm:$0xff] %v595
  %620 = vst [vmem:[%s56 + $0x38] sm:$0xff] %v596
  %621 = vst [vmem:[%s56 + $0x40] sm:$0xff] %v597
  %622 = vst [vmem:[%s56 + $0x48] sm:$0xff] %v598
  %623 = vst [vmem:[%s56 + $0x50] sm:$0xff] %v599
  %624 = vst [vmem:[%s56 + $0x58] sm:$0xff] %v600
  %v633 = vunpack.c.l.b16 %v92
  %v634 = vunpack.c.l.b16 %v93
  %v635 = vunpack.c.l.b16 %v94
  %v636 = vunpack.c.l.b16 %v95
  %v637 = vunpack.c.l.b16 %v96
  %v638 = vunpack.c.l.b16 %v97
  %v639 = vunpack.c.l.b16 %v98
  %v640 = vunpack.c.l.b16 %v99
  %v641 = vpack.c.b16 %v634, %v633
  %v642 = vpack.c.b16 %v636, %v635
  %v643 = vpack.c.b16 %v638, %v637
  %v644 = vpack.c.b16 %v640, %v639
  %vm645 = vcmask 785408
  %v647 = vsel %vm645, %v641, 0
  %v650 = vsel %vm645, %v642, 0
  %v653 = vsel %vm645, %v643, 0
  %v656 = vsel %vm645, %v644, 0
  %658 = vmatprep.subr.bf16.mxu0 %v542
  %659 = vmatpush1.bf16.msra.mxu0 %v541
  %660 = vmatprep.subr.bf16.mxu0 %v544
  %661 = vmatpush1.bf16.msra.mxu0 %v543
  %662 = vmatprep.subr.bf16.mxu0 %v546
  %663 = vmatpush1.bf16.msra.mxu0 %v545
  %664 = vmatprep.subr.bf16.mxu0 %v548
  %665 = vmatpush1.bf16.msra.mxu0 %v547
  %666 = vmatprep.subr.bf16.mxu0 %v550
  %667 = vmatpush1.bf16.msra.mxu0 %v549
  %668 = vmatprep.subr.bf16.mxu0 %v552
  %669 = vmatpush1.bf16.msra.mxu0 %v551
  %670 = vmatprep.subr.bf16.mxu0 0
  %671 = vmatpush1.bf16.msra.mxu0 0
  %672 = vmatprep.subr.bf16.mxu0 0
  %673 = vmatpush1.bf16.msra.mxu0 0
  %674 = vmatprep.subr.bf16.mxu0 0
  %675 = vmatpush1.bf16.msra.mxu0 0
  %676 = vmatprep.subr.bf16.mxu0 0
  %677 = vmatpush1.bf16.msra.mxu0 0
  %678 = vmatprep.subr.bf16.mxu0 0
  %679 = vmatpush1.bf16.msra.mxu0 0
  %680 = vmatprep.subr.bf16.mxu0 0
  %681 = vmatpush1.bf16.msra.mxu0 0
  %682 = vmatprep.subr.bf16.mxu0 0
  %683 = vmatpush1.bf16.msra.mxu0 0
  %684 = vmatprep.subr.bf16.mxu0 0
  %685 = vmatpush1.bf16.msra.mxu0 0
  %686 = vmatprep.subr.bf16.mxu0 0
  %687 = vmatpush1.bf16.msra.mxu0 0
  %688 = vmatprep.subr.bf16.mxu0 0
  %689 = vmatpush1.bf16.msra.mxu0 0
  %690 = vmatprep.mubr.bf16.mxu0 0
  %691 = vmatmul.mubr.bf16.gmra.mrb[0].mxu0 %v647
  %v692 = vpop.f32.mrb[0].mxu0
  %v693 = vadd.f32 0.0, %v692
  %v694 = vpop.f32.mrb[0].mxu0
  %v695 = vadd.f32 0.0, %v694
  %v696 = vpop.f32.mrb[0].mxu0
  %v697 = vadd.f32 0.0, %v696
  %v698 = vpop.f32.mrb[0].mxu0
  %v699 = vadd.f32 0.0, %v698
  %700 = vmatprep.mubr.bf16.mxu0 0
  %701 = vmatmul.mubr.bf16.gmra.mrb[0].mxu0 %v650
  %v702 = vpop.f32.mrb[0].mxu0
  %v703 = vadd.f32 0.0, %v702
  %v704 = vpop.f32.mrb[0].mxu0
  %v705 = vadd.f32 0.0, %v704
  %v706 = vpop.f32.mrb[0].mxu0
  %v707 = vadd.f32 0.0, %v706
  %v708 = vpop.f32.mrb[0].mxu0
  %v709 = vadd.f32 0.0, %v708
  %710 = vmatprep.mubr.bf16.mxu0 0
  %711 = vmatmul.mubr.bf16.gmra.mrb[0].mxu0 %v653
  %v712 = vpop.f32.mrb[0].mxu0
  %v713 = vadd.f32 0.0, %v712
  %v714 = vpop.f32.mrb[0].mxu0
  %v715 = vadd.f32 0.0, %v714
  %v716 = vpop.f32.mrb[0].mxu0
  %v717 = vadd.f32 0.0, %v716
  %v718 = vpop.f32.mrb[0].mxu0
  %v719 = vadd.f32 0.0, %v718
  %720 = vmatprep.mubr.bf16.mxu0 0
  %721 = vmatmul.mubr.bf16.gmra.mrb[0].mxu0 %v656
  %v722 = vpop.f32.mrb[0].mxu0
  %v723 = vadd.f32 0.0, %v722
  %v724 = vpop.f32.mrb[0].mxu0
  %v725 = vadd.f32 0.0, %v724
  %v726 = vpop.f32.mrb[0].mxu0
  %v727 = vadd.f32 0.0, %v726
  %v728 = vpop.f32.mrb[0].mxu0
  %v729 = vadd.f32 0.0, %v728
  %730 = vdwg.mxu0
  %v731 = vmul.f32 %v693, %v693
  %v732 = vmul.f32 %v697, %v697
  %v733 = vmul.f32 %v703, %v703
  %v734 = vmul.f32 %v707, %v707
  %v735 = vmul.f32 %v713, %v713
  %v736 = vmul.f32 %v717, %v717
  %v737 = vmul.f32 %v723, %v723
  %v738 = vmul.f32 %v727, %v727
  %v739 = vadd.f32 %v693, %v695
  %v740 = vadd.f32 %v697, %v699
  %v741 = vadd.f32 %v703, %v705
  %v742 = vadd.f32 %v707, %v709
  %v743 = vadd.f32 %v713, %v715
  %v744 = vadd.f32 %v717, %v719
  %v745 = vadd.f32 %v723, %v725
  %v746 = vadd.f32 %v727, %v729
  %v747 = vmul.f32 %v695, %v695
  %v748 = vmul.f32 %v699, %v699
  %v749 = vmul.f32 %v705, %v705
  %v750 = vmul.f32 %v709, %v709
  %v751 = vmul.f32 %v715, %v715
  %v752 = vmul.f32 %v719, %v719
  %v753 = vmul.f32 %v725, %v725
  %v754 = vmul.f32 %v729, %v729
  %v755 = vadd.f32 %v731, %v747
  %v756 = vadd.f32 %v732, %v748
  %v757 = vadd.f32 %v733, %v749
  %v758 = vadd.f32 %v734, %v750
  %v759 = vadd.f32 %v735, %v751
  %v760 = vadd.f32 %v736, %v752
  %v761 = vadd.f32 %v737, %v753
  %v762 = vadd.f32 %v738, %v754
  %v763 = vadd.f32 %v739, 0.0
  %v764 = vadd.f32 %v740, 0.0
  %v765 = vadd.f32 %v741, 0.0
  %v766 = vadd.f32 %v742, 0.0
  %v767 = vadd.f32 %v743, 0.0
  %v768 = vadd.f32 %v744, 0.0
  %v769 = vadd.f32 %v745, 0.0
  %v770 = vadd.f32 %v746, 0.0
  %v771 = vadd.f32 %v755, 0.0
  %v772 = vadd.f32 %v756, 0.0
  %v773 = vadd.f32 %v757, 0.0
  %v774 = vadd.f32 %v758, 0.0
  %v775 = vadd.f32 %v759, 0.0
  %v776 = vadd.f32 %v760, 0.0
  %v777 = vadd.f32 %v761, 0.0
  %v778 = vadd.f32 %v762, 0.0
  %s779 = scalar_lea.vmem %s48, 128
  %v780 = vld [vmem:[%s779] sm:$0xff]
  %v781 = vld [vmem:[%s779 + $0x8] sm:$0xff]
  %v782 = vld [vmem:[%s779 + $0x10] sm:$0xff]
  %v783 = vld [vmem:[%s779 + $0x18] sm:$0xff]
  %v784 = vld [vmem:[%s779 + $0x20] sm:$0xff]
  %v785 = vld [vmem:[%s779 + $0x28] sm:$0xff]
  %v786 = vld [vmem:[%s779 + $0x30] sm:$0xff]
  %v787 = vld [vmem:[%s779 + $0x38] sm:$0xff]
  %v788 = vld [vmem:[%s779 + $0x40] sm:$0xff]
  %v789 = vld [vmem:[%s779 + $0x48] sm:$0xff]
  %v790 = vld [vmem:[%s779 + $0x50] sm:$0xff]
  %v791 = vld [vmem:[%s779 + $0x58] sm:$0xff]
  %v792 = vld [vmem:[%s779 + $0x60] sm:$0xff]
  %v793 = vld [vmem:[%s779 + $0x68] sm:$0xff]
  %v794 = vld [vmem:[%s779 + $0x70] sm:$0xff]
  %v795 = vld [vmem:[%s779 + $0x78] sm:$0xff]
  %v812 = vunpack.c.l.b16 %v780
  %v813 = vunpack.c.h.b16 %v780
  %v814 = vunpack.c.l.b16 %v781
  %v815 = vunpack.c.h.b16 %v781
  %v816 = vunpack.c.l.b16 %v782
  %v817 = vunpack.c.h.b16 %v782
  %v818 = vunpack.c.l.b16 %v783
  %v819 = vunpack.c.h.b16 %v783
  %v820 = vunpack.c.l.b16 %v784
  %v821 = vunpack.c.h.b16 %v784
  %v822 = vunpack.c.l.b16 %v785
  %v823 = vunpack.c.h.b16 %v785
  %v824 = vunpack.c.l.b16 %v786
  %v825 = vunpack.c.h.b16 %v786
  %v826 = vunpack.c.l.b16 %v787
  %v827 = vunpack.c.h.b16 %v787
  %v828 = vunpack.c.l.b16 %v788
  %v829 = vunpack.c.h.b16 %v788
  %v830 = vunpack.c.l.b16 %v789
  %v831 = vunpack.c.h.b16 %v789
  %v832 = vunpack.c.l.b16 %v790
  %v833 = vunpack.c.h.b16 %v790
  %v834 = vunpack.c.l.b16 %v791
  %v835 = vunpack.c.h.b16 %v791
  %v836 = vunpack.c.l.b16 %v792
  %v837 = vunpack.c.h.b16 %v792
  %v838 = vunpack.c.l.b16 %v793
  %v839 = vunpack.c.h.b16 %v793
  %v840 = vunpack.c.l.b16 %v794
  %v841 = vunpack.c.h.b16 %v794
  %v842 = vunpack.c.l.b16 %v795
  %v843 = vunpack.c.h.b16 %v795
  %v844 = vpack.c.b16 %v814, %v812
  %v845 = vpack.c.b16 %v815, %v813
  %v846 = vpack.c.b16 %v818, %v816
  %v847 = vpack.c.b16 %v819, %v817
  %v848 = vpack.c.b16 %v822, %v820
  %v849 = vpack.c.b16 %v823, %v821
  %v850 = vpack.c.b16 %v826, %v824
  %v851 = vpack.c.b16 %v827, %v825
  %v852 = vpack.c.b16 %v830, %v828
  %v853 = vpack.c.b16 %v831, %v829
  %v854 = vpack.c.b16 %v834, %v832
  %v855 = vpack.c.b16 %v835, %v833
  %v856 = vpack.c.b16 %v838, %v836
  %v857 = vpack.c.b16 %v839, %v837
  %v858 = vpack.c.b16 %v842, %v840
  %v859 = vpack.c.b16 %v843, %v841
  %876 = vmatprep.subr.bf16.mxu0 %v845
  %877 = vmatpush1.bf16.msra.mxu0 %v844
  %878 = vmatprep.subr.bf16.mxu0 %v847
  %879 = vmatpush1.bf16.msra.mxu0 %v846
  %880 = vmatprep.subr.bf16.mxu0 %v849
  %881 = vmatpush1.bf16.msra.mxu0 %v848
  %882 = vmatprep.subr.bf16.mxu0 %v851
  %883 = vmatpush1.bf16.msra.mxu0 %v850
  %884 = vmatprep.subr.bf16.mxu0 %v853
  %885 = vmatpush1.bf16.msra.mxu0 %v852
  %886 = vmatprep.subr.bf16.mxu0 %v855
  %887 = vmatpush1.bf16.msra.mxu0 %v854
  %888 = vmatprep.subr.bf16.mxu0 %v857
  %889 = vmatpush1.bf16.msra.mxu0 %v856
  %890 = vmatprep.subr.bf16.mxu0 %v859
  %891 = vmatpush1.bf16.msra.mxu0 %v858
  %892 = vmatprep.subr.bf16.mxu0 0
  %893 = vmatpush1.bf16.msra.mxu0 0
  %894 = vmatprep.subr.bf16.mxu0 0
  %895 = vmatpush1.bf16.msra.mxu0 0
  %896 = vmatprep.subr.bf16.mxu0 0
  %897 = vmatpush1.bf16.msra.mxu0 0
  %898 = vmatprep.subr.bf16.mxu0 0
  %899 = vmatpush1.bf16.msra.mxu0 0
  %900 = vmatprep.subr.bf16.mxu0 0
  %901 = vmatpush1.bf16.msra.mxu0 0
  %902 = vmatprep.subr.bf16.mxu0 0
  %903 = vmatpush1.bf16.msra.mxu0 0
  %904 = vmatprep.subr.bf16.mxu0 0
  %905 = vmatpush1.bf16.msra.mxu0 0
  %906 = vmatprep.subr.bf16.mxu0 0
  %907 = vmatpush1.bf16.msra.mxu0 0
  %908 = vmatprep.mubr.bf16.mxu0 0
  %909 = vmatmul.mubr.bf16.gmra.mrb[0].mxu0 %v164
  %v910 = vpop.f32.mrb[0].mxu0
  %v911 = vadd.f32 0.0, %v910
  %v912 = vpop.f32.mrb[0].mxu0
  %v913 = vadd.f32 0.0, %v912
  %v914 = vpop.f32.mrb[0].mxu0
  %v915 = vadd.f32 0.0, %v914
  %v916 = vpop.f32.mrb[0].mxu0
  %v917 = vadd.f32 0.0, %v916
  %918 = vmatprep.mubr.bf16.mxu0 0
  %919 = vmatmul.mubr.bf16.gmra.mrb[0].mxu0 %v165
  %v920 = vpop.f32.mrb[0].mxu0
  %v921 = vadd.f32 0.0, %v920
  %v922 = vpop.f32.mrb[0].mxu0
  %v923 = vadd.f32 0.0, %v922
  %v924 = vpop.f32.mrb[0].mxu0
  %v925 = vadd.f32 0.0, %v924
  %v926 = vpop.f32.mrb[0].mxu0
  %v927 = vadd.f32 0.0, %v926
  %928 = vmatprep.mubr.bf16.mxu0 0
  %929 = vmatmul.mubr.bf16.gmra.mrb[0].mxu0 %v166
  %v930 = vpop.f32.mrb[0].mxu0
  %v931 = vadd.f32 0.0, %v930
  %v932 = vpop.f32.mrb[0].mxu0
  %v933 = vadd.f32 0.0, %v932
  %v934 = vpop.f32.mrb[0].mxu0
  %v935 = vadd.f32 0.0, %v934
  %v936 = vpop.f32.mrb[0].mxu0
  %v937 = vadd.f32 0.0, %v936
  %938 = vmatprep.mubr.bf16.mxu0 0
  %939 = vmatmul.mubr.bf16.gmra.mrb[0].mxu0 %v167
  %v940 = vpop.f32.mrb[0].mxu0
  %v941 = vadd.f32 0.0, %v940
  %v942 = vpop.f32.mrb[0].mxu0
  %v943 = vadd.f32 0.0, %v942
  %v944 = vpop.f32.mrb[0].mxu0
  %v945 = vadd.f32 0.0, %v944
  %v946 = vpop.f32.mrb[0].mxu0
  %v947 = vadd.f32 0.0, %v946
  %948 = vmatprep.mubr.bf16.mxu0 0
  %949 = vmatmul.mubr.bf16.gmra.mrb[0].mxu0 %v168
  %v950 = vpop.f32.mrb[0].mxu0
  %v951 = vadd.f32 0.0, %v950
  %v952 = vpop.f32.mrb[0].mxu0
  %v953 = vadd.f32 0.0, %v952
  %v954 = vpop.f32.mrb[0].mxu0
  %v955 = vadd.f32 0.0, %v954
  %v956 = vpop.f32.mrb[0].mxu0
  %v957 = vadd.f32 0.0, %v956
  %958 = vmatprep.mubr.bf16.mxu0 0
  %959 = vmatmul.mubr.bf16.gmra.mrb[0].mxu0 %v169
  %v960 = vpop.f32.mrb[0].mxu0
  %v961 = vadd.f32 0.0, %v960
  %v962 = vpop.f32.mrb[0].mxu0
  %v963 = vadd.f32 0.0, %v962
  %v964 = vpop.f32.mrb[0].mxu0
  %v965 = vadd.f32 0.0, %v964
  %v966 = vpop.f32.mrb[0].mxu0
  %v967 = vadd.f32 0.0, %v966
  %968 = vdwg.mxu0
  %v969 = vmul.f32 %v911, %v352
  %v970 = vmul.f32 %v913, %v352
  %v971 = vmul.f32 %v915, %v357
  %v972 = vmul.f32 %v917, %v357
  %v973 = vmul.f32 %v921, %v362
  %v974 = vmul.f32 %v923, %v362
  %v975 = vmul.f32 %v925, %v367
  %v976 = vmul.f32 %v927, %v367
  %v977 = vmul.f32 %v931, %v372
  %v978 = vmul.f32 %v933, %v372
  %v979 = vmul.f32 %v935, %v377
  %v980 = vmul.f32 %v937, %v377
  %v981 = vmul.f32 %v941, %v382
  %v982 = vmul.f32 %v943, %v382
  %v983 = vmul.f32 %v945, %v387
  %v984 = vmul.f32 %v947, %v387
  %v985 = vmul.f32 %v951, %v392
  %v986 = vmul.f32 %v953, %v392
  %v987 = vmul.f32 %v955, %v397
  %v988 = vmul.f32 %v957, %v397
  %v989 = vmul.f32 %v961, %v402
  %v990 = vmul.f32 %v963, %v402
  %v991 = vmul.f32 %v965, %v407
  %v992 = vmul.f32 %v967, %v407
  %v993 = vadd.f32 %v969, %v436
  %v994 = vadd.f32 %v970, %v436
  %v995 = vadd.f32 %v971, %v441
  %v996 = vadd.f32 %v972, %v441
  %v997 = vadd.f32 %v973, %v446
  %v998 = vadd.f32 %v974, %v446
  %v999 = vadd.f32 %v975, %v451
  %v1000 = vadd.f32 %v976, %v451
  %v1001 = vadd.f32 %v977, %v456
  %v1002 = vadd.f32 %v978, %v456
  %v1003 = vadd.f32 %v979, %v461
  %v1004 = vadd.f32 %v980, %v461
  %v1005 = vadd.f32 %v981, %v466
  %v1006 = vadd.f32 %v982, %v466
  %v1007 = vadd.f32 %v983, %v471
  %v1008 = vadd.f32 %v984, %v471
  %v1009 = vadd.f32 %v985, %v476
  %v1010 = vadd.f32 %v986, %v476
  %v1011 = vadd.f32 %v987, %v481
  %v1012 = vadd.f32 %v988, %v481
  %v1013 = vadd.f32 %v989, %v486
  %v1014 = vadd.f32 %v990, %v486
  %v1015 = vadd.f32 %v991, %v491
  %v1016 = vadd.f32 %v992, %v491
  %v1017 = vmax.f32 %v993, 0.0
  %v1018 = vmax.f32 %v994, 0.0
  %v1019 = vmax.f32 %v995, 0.0
  %v1020 = vmax.f32 %v996, 0.0
  %v1021 = vmax.f32 %v997, 0.0
  %v1022 = vmax.f32 %v998, 0.0
  %v1023 = vmax.f32 %v999, 0.0
  %v1024 = vmax.f32 %v1000, 0.0
  %v1025 = vmax.f32 %v1001, 0.0
  %v1026 = vmax.f32 %v1002, 0.0
  %v1027 = vmax.f32 %v1003, 0.0
  %v1028 = vmax.f32 %v1004, 0.0
  %v1029 = vmax.f32 %v1005, 0.0
  %v1030 = vmax.f32 %v1006, 0.0
  %v1031 = vmax.f32 %v1007, 0.0
  %v1032 = vmax.f32 %v1008, 0.0
  %v1033 = vmax.f32 %v1009, 0.0
  %v1034 = vmax.f32 %v1010, 0.0
  %v1035 = vmax.f32 %v1011, 0.0
  %v1036 = vmax.f32 %v1012, 0.0
  %v1037 = vmax.f32 %v1013, 0.0
  %v1038 = vmax.f32 %v1014, 0.0
  %v1039 = vmax.f32 %v1015, 0.0
  %v1040 = vmax.f32 %v1016, 0.0
  %v1041 = vpack.c.bf16 %v1019, %v1017
  %v1042 = vpack.c.bf16 %v1020, %v1018
  %v1043 = vpack.c.bf16 %v1023, %v1021
  %v1044 = vpack.c.bf16 %v1024, %v1022
  %v1045 = vpack.c.bf16 %v1027, %v1025
  %v1046 = vpack.c.bf16 %v1028, %v1026
  %v1047 = vpack.c.bf16 %v1031, %v1029
  %v1048 = vpack.c.bf16 %v1032, %v1030
  %v1049 = vpack.c.bf16 %v1035, %v1033
  %v1050 = vpack.c.bf16 %v1036, %v1034
  %v1051 = vpack.c.bf16 %v1039, %v1037
  %v1052 = vpack.c.bf16 %v1040, %v1038
  %v1065 = vunpack.c.l.b16 %v1041
  %v1066 = vunpack.c.l.b16 %v1042
  %v1067 = vunpack.c.h.b16 %v1041
  %v1068 = vunpack.c.h.b16 %v1042
  %v1069 = vunpack.c.l.b16 %v1043
  %v1070 = vunpack.c.l.b16 %v1044
  %v1071 = vunpack.c.h.b16 %v1043
  %v1072 = vunpack.c.h.b16 %v1044
  %v1073 = vunpack.c.l.b16 %v1045
  %v1074 = vunpack.c.l.b16 %v1046
  %v1075 = vunpack.c.h.b16 %v1045
  %v1076 = vunpack.c.h.b16 %v1046
  %v1077 = vunpack.c.l.b16 %v1047
  %v1078 = vunpack.c.l.b16 %v1048
  %v1079 = vunpack.c.h.b16 %v1047
  %v1080 = vunpack.c.h.b16 %v1048
  %v1081 = vunpack.c.l.b16 %v1049
  %v1082 = vunpack.c.l.b16 %v1050
  %v1083 = vunpack.c.h.b16 %v1049
  %v1084 = vunpack.c.h.b16 %v1050
  %v1085 = vunpack.c.l.b16 %v1051
  %v1086 = vunpack.c.l.b16 %v1052
  %v1087 = vunpack.c.h.b16 %v1051
  %v1088 = vunpack.c.h.b16 %v1052
  %v1089 = vpack.c.b16 %v1066, %v1065
  %v1090 = vpack.c.b16 %v1068, %v1067
  %v1091 = vpack.c.b16 %v1070, %v1069
  %v1092 = vpack.c.b16 %v1072, %v1071
  %v1093 = vpack.c.b16 %v1074, %v1073
  %v1094 = vpack.c.b16 %v1076, %v1075
  %v1095 = vpack.c.b16 %v1078, %v1077
  %v1096 = vpack.c.b16 %v1080, %v1079
  %v1097 = vpack.c.b16 %v1082, %v1081
  %v1098 = vpack.c.b16 %v1084, %v1083
  %v1099 = vpack.c.b16 %v1086, %v1085
  %v1100 = vpack.c.b16 %v1088, %v1087
  %s1113 = scalar_lea.vmem %s56, 96
  %1114 = vst [vmem:[%s1113] sm:$0xff] %v1089
  %1115 = vst [vmem:[%s1113 + $0x8] sm:$0xff] %v1090
  %1116 = vst [vmem:[%s1113 + $0x10] sm:$0xff] %v1091
  %1117 = vst [vmem:[%s1113 + $0x18] sm:$0xff] %v1092
  %1118 = vst [vmem:[%s1113 + $0x20] sm:$0xff] %v1093
  %1119 = vst [vmem:[%s1113 + $0x28] sm:$0xff] %v1094
  %1120 = vst [vmem:[%s1113 + $0x30] sm:$0xff] %v1095
  %1121 = vst [vmem:[%s1113 + $0x38] sm:$0xff] %v1096
  %1122 = vst [vmem:[%s1113 + $0x40] sm:$0xff] %v1097
  %1123 = vst [vmem:[%s1113 + $0x48] sm:$0xff] %v1098
  %1124 = vst [vmem:[%s1113 + $0x50] sm:$0xff] %v1099
  %1125 = vst [vmem:[%s1113 + $0x58] sm:$0xff] %v1100
  %1126 = vmatprep.subr.bf16.mxu0 %v1042
  %1127 = vmatpush1.bf16.msra.mxu0 %v1041
  %1128 = vmatprep.subr.bf16.mxu0 %v1044
  %1129 = vmatpush1.bf16.msra.mxu0 %v1043
  %1130 = vmatprep.subr.bf16.mxu0 %v1046
  %1131 = vmatpush1.bf16.msra.mxu0 %v1045
  %1132 = vmatprep.subr.bf16.mxu0 %v1048
  %1133 = vmatpush1.bf16.msra.mxu0 %v1047
  %1134 = vmatprep.subr.bf16.mxu0 %v1050
  %1135 = vmatpush1.bf16.msra.mxu0 %v1049
  %1136 = vmatprep.subr.bf16.mxu0 %v1052
  %1137 = vmatpush1.bf16.msra.mxu0 %v1051
  %1138 = vmatprep.subr.bf16.mxu0 0
  %1139 = vmatpush1.bf16.msra.mxu0 0
  %1140 = vmatprep.subr.bf16.mxu0 0
  %1141 = vmatpush1.bf16.msra.mxu0 0
  %1142 = vmatprep.subr.bf16.mxu0 0
  %1143 = vmatpush1.bf16.msra.mxu0 0
  %1144 = vmatprep.subr.bf16.mxu0 0
  %1145 = vmatpush1.bf16.msra.mxu0 0
  %1146 = vmatprep.subr.bf16.mxu0 0
  %1147 = vmatpush1.bf16.msra.mxu0 0
  %1148 = vmatprep.subr.bf16.mxu0 0
  %1149 = vmatpush1.bf16.msra.mxu0 0
  %1150 = vmatprep.subr.bf16.mxu0 0
  %1151 = vmatpush1.bf16.msra.mxu0 0
  %1152 = vmatprep.subr.bf16.mxu0 0
  %1153 = vmatpush1.bf16.msra.mxu0 0
  %1154 = vmatprep.subr.bf16.mxu0 0
  %1155 = vmatpush1.bf16.msra.mxu0 0
  %1156 = vmatprep.subr.bf16.mxu0 0
  %1157 = vmatpush1.bf16.msra.mxu0 0
  %1158 = vmatprep.mubr.bf16.mxu0 0
  %1159 = vmatmul.mubr.bf16.gmra.mrb[0].mxu0 %v647
  %v1160 = vpop.f32.mrb[0].mxu0
  %v1161 = vadd.f32 0.0, %v1160
  %v1162 = vpop.f32.mrb[0].mxu0
  %v1163 = vadd.f32 0.0, %v1162
  %v1164 = vpop.f32.mrb[0].mxu0
  %v1165 = vadd.f32 0.0, %v1164
  %v1166 = vpop.f32.mrb[0].mxu0
  %v1167 = vadd.f32 0.0, %v1166
  %1168 = vmatprep.mubr.bf16.mxu0 0
  %1169 = vmatmul.mubr.bf16.gmra.mrb[0].mxu0 %v650
  %v1170 = vpop.f32.mrb[0].mxu0
  %v1171 = vadd.f32 0.0, %v1170
  %v1172 = vpop.f32.mrb[0].mxu0
  %v1173 = vadd.f32 0.0, %v1172
  %v1174 = vpop.f32.mrb[0].mxu0
  %v1175 = vadd.f32 0.0, %v1174
  %v1176 = vpop.f32.mrb[0].mxu0
  %v1177 = vadd.f32 0.0, %v1176
  %1178 = vmatprep.mubr.bf16.mxu0 0
  %1179 = vmatmul.mubr.bf16.gmra.mrb[0].mxu0 %v653
  %v1180 = vpop.f32.mrb[0].mxu0
  %v1181 = vadd.f32 0.0, %v1180
  %v1182 = vpop.f32.mrb[0].mxu0
  %v1183 = vadd.f32 0.0, %v1182
  %v1184 = vpop.f32.mrb[0].mxu0
  %v1185 = vadd.f32 0.0, %v1184
  %v1186 = vpop.f32.mrb[0].mxu0
  %v1187 = vadd.f32 0.0, %v1186
  %1188 = vmatprep.mubr.bf16.mxu0 0
  %1189 = vmatmul.mubr.bf16.gmra.mrb[0].mxu0 %v656
  %v1190 = vpop.f32.mrb[0].mxu0
  %v1191 = vadd.f32 0.0, %v1190
  %v1192 = vpop.f32.mrb[0].mxu0
  %v1193 = vadd.f32 0.0, %v1192
  %v1194 = vpop.f32.mrb[0].mxu0
  %v1195 = vadd.f32 0.0, %v1194
  %v1196 = vpop.f32.mrb[0].mxu0
  %v1197 = vadd.f32 0.0, %v1196
  %1198 = vdwg.mxu0
  %v1199 = vmul.f32 %v1161, %v1161
  %v1200 = vmul.f32 %v1165, %v1165
  %v1201 = vmul.f32 %v1171, %v1171
  %v1202 = vmul.f32 %v1175, %v1175
  %v1203 = vmul.f32 %v1181, %v1181
  %v1204 = vmul.f32 %v1185, %v1185
  %v1205 = vmul.f32 %v1191, %v1191
  %v1206 = vmul.f32 %v1195, %v1195
  %v1207 = vadd.f32 %v1161, %v1163
  %v1208 = vadd.f32 %v1165, %v1167
  %v1209 = vadd.f32 %v1171, %v1173
  %v1210 = vadd.f32 %v1175, %v1177
  %v1211 = vadd.f32 %v1181, %v1183
  %v1212 = vadd.f32 %v1185, %v1187
  %v1213 = vadd.f32 %v1191, %v1193
  %v1214 = vadd.f32 %v1195, %v1197
  %v1215 = vmul.f32 %v1163, %v1163
  %v1216 = vmul.f32 %v1167, %v1167
  %v1217 = vmul.f32 %v1173, %v1173
  %v1218 = vmul.f32 %v1177, %v1177
  %v1219 = vmul.f32 %v1183, %v1183
  %v1220 = vmul.f32 %v1187, %v1187
  %v1221 = vmul.f32 %v1193, %v1193
  %v1222 = vmul.f32 %v1197, %v1197
  %v1223 = vadd.f32 %v1199, %v1215
  %v1224 = vadd.f32 %v1200, %v1216
  %v1225 = vadd.f32 %v1201, %v1217
  %v1226 = vadd.f32 %v1202, %v1218
  %v1227 = vadd.f32 %v1203, %v1219
  %v1228 = vadd.f32 %v1204, %v1220
  %v1229 = vadd.f32 %v1205, %v1221
  %v1230 = vadd.f32 %v1206, %v1222
  %v1231 = vadd.f32 %v763, %v1207
  %v1232 = vadd.f32 %v764, %v1208
  %v1233 = vadd.f32 %v765, %v1209
  %v1234 = vadd.f32 %v766, %v1210
  %v1235 = vadd.f32 %v767, %v1211
  %v1236 = vadd.f32 %v768, %v1212
  %v1237 = vadd.f32 %v769, %v1213
  %v1238 = vadd.f32 %v770, %v1214
  %v1239 = vadd.f32 %v771, %v1223
  %v1240 = vadd.f32 %v772, %v1224
  %v1241 = vadd.f32 %v773, %v1225
  %v1242 = vadd.f32 %v774, %v1226
  %v1243 = vadd.f32 %v775, %v1227
  %v1244 = vadd.f32 %v776, %v1228
  %v1245 = vadd.f32 %v777, %v1229
  %v1246 = vadd.f32 %v778, %v1230
  %v1247 = vld [vmem:[%s6] sm:$0xff]
  %v1248 = vld [vmem:[%s6 + $0x8] sm:$0xff]
  %v1249 = vld [vmem:[%s6 + $0x10] sm:$0xff]
  %v1250 = vld [vmem:[%s6 + $0x18] sm:$0xff]
  %v1251 = vld [vmem:[%s6 + $0x20] sm:$0xff]
  %v1252 = vld [vmem:[%s6 + $0x28] sm:$0xff]
  %v1253 = vld [vmem:[%s6 + $0x30] sm:$0xff]
  %v1254 = vld [vmem:[%s6 + $0x38] sm:$0xff]
  %v1255 = vadd.f32 %v1247, %v1231
  %v1256 = vadd.f32 %v1248, %v1232
  %v1257 = vadd.f32 %v1249, %v1233
  %v1258 = vadd.f32 %v1250, %v1234
  %v1259 = vadd.f32 %v1251, %v1235
  %v1260 = vadd.f32 %v1252, %v1236
  %v1261 = vadd.f32 %v1253, %v1237
  %v1262 = vadd.f32 %v1254, %v1238
  %1263 = vst [vmem:[%s6] sm:$0xff] %v1255
  %1264 = vst [vmem:[%s6 + $0x8] sm:$0xff] %v1256
  %1265 = vst [vmem:[%s6 + $0x10] sm:$0xff] %v1257
  %1266 = vst [vmem:[%s6 + $0x18] sm:$0xff] %v1258
  %1267 = vst [vmem:[%s6 + $0x20] sm:$0xff] %v1259
  %1268 = vst [vmem:[%s6 + $0x28] sm:$0xff] %v1260
  %1269 = vst [vmem:[%s6 + $0x30] sm:$0xff] %v1261
  %1270 = vst [vmem:[%s6 + $0x38] sm:$0xff] %v1262
  %v1271 = vld [vmem:[%s7] sm:$0xff]
  %v1272 = vld [vmem:[%s7 + $0x8] sm:$0xff]
  %v1273 = vld [vmem:[%s7 + $0x10] sm:$0xff]
  %v1274 = vld [vmem:[%s7 + $0x18] sm:$0xff]
  %v1275 = vld [vmem:[%s7 + $0x20] sm:$0xff]
  %v1276 = vld [vmem:[%s7 + $0x28] sm:$0xff]
  %v1277 = vld [vmem:[%s7 + $0x30] sm:$0xff]
  %v1278 = vld [vmem:[%s7 + $0x38] sm:$0xff]
  %v1279 = vadd.f32 %v1271, %v1239
  %v1280 = vadd.f32 %v1272, %v1240
  %v1281 = vadd.f32 %v1273, %v1241
  %v1282 = vadd.f32 %v1274, %v1242
  %v1283 = vadd.f32 %v1275, %v1243
  %v1284 = vadd.f32 %v1276, %v1244
  %v1285 = vadd.f32 %v1277, %v1245
  %v1286 = vadd.f32 %v1278, %v1246
  %1287 = vst [vmem:[%s7] sm:$0xff] %v1279
  %1288 = vst [vmem:[%s7 + $0x8] sm:$0xff] %v1280
  %1289 = vst [vmem:[%s7 + $0x10] sm:$0xff] %v1281
  %1290 = vst [vmem:[%s7 + $0x18] sm:$0xff] %v1282
  %1291 = vst [vmem:[%s7 + $0x20] sm:$0xff] %v1283
  %1292 = vst [vmem:[%s7 + $0x28] sm:$0xff] %v1284
  %1293 = vst [vmem:[%s7 + $0x30] sm:$0xff] %v1285
  %1294 = vst [vmem:[%s7 + $0x38] sm:$0xff] %v1286
  %s1295 = sadd.s32 0, 0
  %s1296 = smul.u32 2, %s1295
  %p1297 = scmp.lt.s32.totalorder %s1296, 1
  %s1298 = scalar_select %p1297, %s1296, 1
  %s1299 = smul.addr %s1298, 4
  %s1300 = scalar_lea.vmem %s5, %s1299
  // Predicated region
  $region26: #{resnet18_autoencoder_forward.6} parent=0 // pred_check
    _
  $region27: #{resnet18_autoencoder_forward.6} parent=0 // pred_check_branch
    %1302 = sbr.rel (0) target = $region29
  $region28: #{resnet18_autoencoder_forward.6} parent=0 // pred_region
    %s1303 = sadd.s32 0, 0
    %s1304 = smul.u32 2, %s1303
  $region29: #{resnet18_autoencoder_forward.6} parent=0 // pred_fallthru
    _
  // Predicated region
  $region30: #{resnet18_autoencoder_forward.6} parent=0 // pred_check
    _
  $region31: #{resnet18_autoencoder_forward.6} parent=0 // pred_check_branch
    %1306 = sbr.rel (0) target = $region33
  $region32: #{resnet18_autoencoder_forward.6} parent=0 // pred_region
    _
  $region33: #{resnet18_autoencoder_forward.6} parent=0 // pred_fallthru
    _
  // Predicated region
  $region34: #{resnet18_autoencoder_forward.6} parent=0 // pred_check
    _
  $region35: #{resnet18_autoencoder_forward.6} parent=0 // pred_check_branch
    %1308 = sbr.rel (0) target = $region37
  $region36: #{resnet18_autoencoder_forward.6} parent=0 // pred_region
    _
  $region37: #{resnet18_autoencoder_forward.6} parent=0 // pred_fallthru
    _
  // Predicated region
  $region38: #{resnet18_autoencoder_forward.6} parent=0 // pred_check
    _
  $region39: #{resnet18_autoencoder_forward.6} parent=0 // pred_check_branch
    %1310 = sbr.rel (0) target = $region41
  $region40: #{resnet18_autoencoder_forward.6} parent=0 // pred_region
    %s1311 = sadd.s32 0, 0
    %s1312 = smul.u32 2, %s1311
    %p1313 = scmp.lt.s32.totalorder %s1312, 1
    %s1314 = scalar_select %p1313, %s1312, 1
    %s1315 = smul.addr %s1314, 4
    %s1316 = scalar_lea.vmem %s5, %s1315
  $region41: #{resnet18_autoencoder_forward.6} parent=0 // pred_fallthru
    _
  // Predicated region
  $region42: #{resnet18_autoencoder_forward.6} parent=0 // pred_check
    _
  $region43: #{resnet18_autoencoder_forward.6} parent=0 // pred_check_branch
    %1318 = sbr.rel (0) target = $region45
  $region44: #{resnet18_autoencoder_forward.6} parent=0 // pred_region
    _
  $region45: #{resnet18_autoencoder_forward.6} parent=0 // pred_fallthru
    _
  // Predicated region
  $region46: #{resnet18_autoencoder_forward.6} parent=0 // pred_check
    _
  $region47: #{resnet18_autoencoder_forward.6} parent=0 // pred_check_branch
    %1320 = sbr.rel (0) target = $region49
  $region48: #{resnet18_autoencoder_forward.6} parent=0 // pred_region
    _
  $region49: #{resnet18_autoencoder_forward.6} parent=0 // pred_fallthru
    _

// kernel: resnet18_autoencoder_forward.8
$region0: #{resnet18_autoencoder_forward.8}
  #allocation0 [shape = 'u32[]', space=smem, size = 0x4, offset = 0x4, fixed_abs, tag = 'smem constant byte address 0x4 - core index']
  #allocation1 [shape = 'u32[144,128]{1,0:T(1,128)}', space=vmem, size = 0x12000, scoped, tag = 'internal scratch']
  %s0 = inlined_call_operand.vmem [shape: bf16[2,64,256], index: 0, kind: input, shape index: {}]
  %s1 = inlined_call_operand.vmem [shape: bf16[64,64], index: 1, kind: input, shape index: {}]
  %s2 = inlined_call_operand.vmem [shape: f32[64,1], index: 2, kind: input, shape index: {}]
  %s3 = inlined_call_operand.vmem [shape: f32[64,1], index: 3, kind: input, shape index: {}]
  %s4 = inlined_call_operand.vmem [shape: bf16[96,64], index: 4, kind: input, shape index: {}]
  %s5 = inlined_call_operand.vmem [shape: bf16[2,64,256], index: 5, kind: output, shape index: {0}]
  %s6 = inlined_call_operand.vmem [shape: f32[1,96,128], index: 6, kind: output, shape index: {1}]
  %s7 = inlined_call_operand.vmem [shape: f32[1,96,128], index: 7, kind: output, shape index: {2}]
  %8 = xla_tuple %s5, %s6, %s7
  %s9 = sld [smem:[#allocation0]]
  $region50: #{resnet18_autoencoder_forward.8} parent=0
    _
  %s11 = ssub.s32 1, %s9
  %s12 = scalar_select 0, %s11, %s9
  // Predicated region
  $region2: #{resnet18_autoencoder_forward.8} parent=0 // pred_check
    _
  $region3: #{resnet18_autoencoder_forward.8} parent=0 // pred_check_branch
    %14 = sbr.rel (0) target = $region5
  $region4: #{resnet18_autoencoder_forward.8} parent=0 // pred_region
    %s15 = sadd.s32 0, 0
    %s16 = smul.u32 2, %s15
    %p17 = scmp.lt.s32.totalorder %s16, 1
    %s18 = scalar_select %p17, %s16, 1
    %s19 = smul.addr %s18, 4
    %s20 = scalar_lea.vmem %s0, %s19
    %s21 = sadd.s32 0, 0
    %s22 = smul.u32 2, %s21
  $region5: #{resnet18_autoencoder_forward.8} parent=0 // pred_fallthru
    _
  // Predicated region
  $region6: #{resnet18_autoencoder_forward.8} parent=0 // pred_check
    _
  $region7: #{resnet18_autoencoder_forward.8} parent=0 // pred_check_branch
    %24 = sbr.rel (0) target = $region9
  $region8: #{resnet18_autoencoder_forward.8} parent=0 // pred_region
    _
  $region9: #{resnet18_autoencoder_forward.8} parent=0 // pred_fallthru
    _
  // Predicated region
  $region10: #{resnet18_autoencoder_forward.8} parent=0 // pred_check
    _
  $region11: #{resnet18_autoencoder_forward.8} parent=0 // pred_check_branch
    %26 = sbr.rel (0) target = $region13
  $region12: #{resnet18_autoencoder_forward.8} parent=0 // pred_region
    _
  $region13: #{resnet18_autoencoder_forward.8} parent=0 // pred_fallthru
    _
  // Predicated region
  $region14: #{resnet18_autoencoder_forward.8} parent=0 // pred_check
    _
  $region15: #{resnet18_autoencoder_forward.8} parent=0 // pred_check_branch
    %28 = sbr.rel (0) target = $region17
  $region16: #{resnet18_autoencoder_forward.8} parent=0 // pred_region
    _
  $region17: #{resnet18_autoencoder_forward.8} parent=0 // pred_fallthru
    _
  // Predicated region
  $region18: #{resnet18_autoencoder_forward.8} parent=0 // pred_check
    _
  $region19: #{resnet18_autoencoder_forward.8} parent=0 // pred_check_branch
    %30 = sbr.rel (0) target = $region21
  $region20: #{resnet18_autoencoder_forward.8} parent=0 // pred_region
    _
  $region21: #{resnet18_autoencoder_forward.8} parent=0 // pred_fallthru
    _
  %s31 = sadd.s32 0, 0
  %s32 = smul.u32 2, %s31
  %p33 = scmp.lt.s32.totalorder %s32, 1
  %s34 = scalar_select %p33, %s32, 1
  %s35 = smul.addr %s34, 4
  %s36 = scalar_lea.vmem %s0, %s35
  %s37 = sadd.s32 0, 0
  %s38 = smul.u32 2, %s37
  %p39 = scmp.lt.s32.totalorder %s38, 1
  %s40 = scalar_select %p39, %s38, 1
  %s41 = smul.addr %s40, 4
  %s42 = scalar_lea.vmem %s5, %s41
  %s43 = sadd.s32 0, 0
  %s44 = smul.u32 2, %s43
  %p45 = scmp.lt.s32.totalorder %s44, 1
  %s46 = scalar_select %p45, %s44, 1
  %s47 = smul.addr %s46, 4
  %s48 = scalar_lea.vmem %s0, %s47
  %s49 = sadd.s32 0, 0
  %s50 = smul.u32 2, %s49
  %s51 = sadd.s32 0, 0
  %s52 = smul.u32 2, %s51
  %p53 = scmp.lt.s32.totalorder %s52, 1
  %s54 = scalar_select %p53, %s52, 1
  %s55 = smul.addr %s54, 4
  %s56 = scalar_lea.vmem %s5, %s55
  %s57 = sadd.s32 0, 0
  %s58 = smul.u32 2, %s57
  %p60 = scmp.eq.s32.totalorder 0, 0
  // Predicated region
  $region22: #{resnet18_autoencoder_forward.8} parent=0 // pred_check
    %p61 = pneg %p60
  $region23: #{resnet18_autoencoder_forward.8} parent=0 // pred_check_branch
    %63 = sbr.rel (%p61) target = $region25
  $region24: #{resnet18_autoencoder_forward.8} parent=0 // pred_region
    %64 = vst [vmem:[%s6] sm:$0xff] 0.0
    %65 = vst [vmem:[%s6 + $0x8] sm:$0xff] 0.0
    %66 = vst [vmem:[%s6 + $0x10] sm:$0xff] 0.0
    %67 = vst [vmem:[%s6 + $0x18] sm:$0xff] 0.0
    %68 = vst [vmem:[%s6 + $0x20] sm:$0xff] 0.0
    %69 = vst [vmem:[%s6 + $0x28] sm:$0xff] 0.0
    %70 = vst [vmem:[%s6 + $0x30] sm:$0xff] 0.0
    %71 = vst [vmem:[%s6 + $0x38] sm:$0xff] 0.0
    %72 = vst [vmem:[%s6 + $0x40] sm:$0xff] 0.0
    %73 = vst [vmem:[%s6 + $0x48] sm:$0xff] 0.0
    %74 = vst [vmem:[%s6 + $0x50] sm:$0xff] 0.0
    %75 = vst [vmem:[%s6 + $0x58] sm:$0xff] 0.0
    %76 = vst [vmem:[%s7] sm:$0xff] 0.0
    %77 = vst [vmem:[%s7 + $0x8] sm:$0xff] 0.0
    %78 = vst [vmem:[%s7 + $0x10] sm:$0xff] 0.0
    %79 = vst [vmem:[%s7 + $0x18] sm:$0xff] 0.0
    %80 = vst [vmem:[%s7 + $0x20] sm:$0xff] 0.0
    %81 = vst [vmem:[%s7 + $0x28] sm:$0xff] 0.0
    %82 = vst [vmem:[%s7 + $0x30] sm:$0xff] 0.0
    %83 = vst [vmem:[%s7 + $0x38] sm:$0xff] 0.0
    %84 = vst [vmem:[%s7 + $0x40] sm:$0xff] 0.0
    %85 = vst [vmem:[%s7 + $0x48] sm:$0xff] 0.0
    %86 = vst [vmem:[%s7 + $0x50] sm:$0xff] 0.0
    %87 = vst [vmem:[%s7 + $0x58] sm:$0xff] 0.0
  $region25: #{resnet18_autoencoder_forward.8} parent=0 // pred_fallthru
    _
  %v88 = vld [vmem:[%s1] sm:$0xf]
  %v89 = vld [vmem:[%s1 + $0x4] sm:$0xf]
  %v90 = vld [vmem:[%s1 + $0x8] sm:$0xf]
  %v91 = vld [vmem:[%s1 + $0xc] sm:$0xf]
  %v92 = vld [vmem:[%s1 + $0x10] sm:$0xf]
  %v93 = vld [vmem:[%s1 + $0x14] sm:$0xf]
  %v94 = vld [vmem:[%s1 + $0x18] sm:$0xf]
  %v95 = vld [vmem:[%s1 + $0x1c] sm:$0xf]
  %v96 = vld [vmem:[%s4] sm:$0xf]
  %v97 = vld [vmem:[%s4 + $0x4] sm:$0xf]
  %v98 = vld [vmem:[%s4 + $0x8] sm:$0xf]
  %v99 = vld [vmem:[%s4 + $0xc] sm:$0xf]
  %v100 = vld [vmem:[%s4 + $0x10] sm:$0xf]
  %v101 = vld [vmem:[%s4 + $0x14] sm:$0xf]
  %v102 = vld [vmem:[%s4 + $0x18] sm:$0xf]
  %v103 = vld [vmem:[%s4 + $0x1c] sm:$0xf]
  %v104 = vld [vmem:[%s4 + $0x20] sm:$0xf]
  %v105 = vld [vmem:[%s4 + $0x24] sm:$0xf]
  %v106 = vld [vmem:[%s4 + $0x28] sm:$0xf]
  %v107 = vld [vmem:[%s4 + $0x2c] sm:$0xf]
  %v108 = vld [vmem:[%s2] sm:$0xff]
  %v109 = vld [vmem:[%s2 + $0x8] sm:$0xff]
  %v110 = vld [vmem:[%s2 + $0x10] sm:$0xff]
  %v111 = vld [vmem:[%s2 + $0x18] sm:$0xff]
  %v112 = vld [vmem:[%s2 + $0x20] sm:$0xff]
  %v113 = vld [vmem:[%s2 + $0x28] sm:$0xff]
  %v114 = vld [vmem:[%s2 + $0x30] sm:$0xff]
  %v115 = vld [vmem:[%s2 + $0x38] sm:$0xff]
  %v116 = vld [vmem:[%s3] sm:$0xff]
  %v117 = vld [vmem:[%s3 + $0x8] sm:$0xff]
  %v118 = vld [vmem:[%s3 + $0x10] sm:$0xff]
  %v119 = vld [vmem:[%s3 + $0x18] sm:$0xff]
  %v120 = vld [vmem:[%s3 + $0x20] sm:$0xff]
  %v121 = vld [vmem:[%s3 + $0x28] sm:$0xff]
  %v122 = vld [vmem:[%s3 + $0x30] sm:$0xff]
  %v123 = vld [vmem:[%s3 + $0x38] sm:$0xff]
  %v124 = vld [vmem:[%s48] sm:$0xff]
  %v125 = vld [vmem:[%s48 + $0x8] sm:$0xff]
  %v126 = vld [vmem:[%s48 + $0x10] sm:$0xff]
  %v127 = vld [vmem:[%s48 + $0x18] sm:$0xff]
  %v128 = vld [vmem:[%s48 + $0x20] sm:$0xff]
  %v129 = vld [vmem:[%s48 + $0x28] sm:$0xff]
  %v130 = vld [vmem:[%s48 + $0x30] sm:$0xff]
  %v131 = vld [vmem:[%s48 + $0x38] sm:$0xff]
  %v140 = vunpack.c.l.b16 %v88
  %v141 = vunpack.c.l.b16 %v89
  %v142 = vunpack.c.l.b16 %v90
  %v143 = vunpack.c.l.b16 %v91
  %v144 = vunpack.c.l.b16 %v92
  %v145 = vunpack.c.l.b16 %v93
  %v146 = vunpack.c.l.b16 %v94
  %v147 = vunpack.c.l.b16 %v95
  %v148 = vpack.c.b16 %v141, %v140
  %v149 = vpack.c.b16 %v143, %v142
  %v150 = vpack.c.b16 %v145, %v144
  %v151 = vpack.c.b16 %v147, %v146
  %v160 = vunpack.c.l.b16 %v124
  %v161 = vunpack.c.h.b16 %v124
  %v162 = vunpack.c.l.b16 %v125
  %v163 = vunpack.c.h.b16 %v125
  %v164 = vunpack.c.l.b16 %v126
  %v165 = vunpack.c.h.b16 %v126
  %v166 = vunpack.c.l.b16 %v127
  %v167 = vunpack.c.h.b16 %v127
  %v168 = vunpack.c.l.b16 %v128
  %v169 = vunpack.c.h.b16 %v128
  %v170 = vunpack.c.l.b16 %v129
  %v171 = vunpack.c.h.b16 %v129
  %v172 = vunpack.c.l.b16 %v130
  %v173 = vunpack.c.h.b16 %v130
  %v174 = vunpack.c.l.b16 %v131
  %v175 = vunpack.c.h.b16 %v131
  %v176 = vpack.c.b16 %v162, %v160
  %v177 = vpack.c.b16 %v163, %v161
  %v178 = vpack.c.b16 %v166, %v164
  %v179 = vpack.c.b16 %v167, %v165
  %v180 = vpack.c.b16 %v170, %v168
  %v181 = vpack.c.b16 %v171, %v169
  %v182 = vpack.c.b16 %v174, %v172
  %v183 = vpack.c.b16 %v175, %v173
  %vm192 = vcmask 523264
  %v194 = vsel %vm192, %v148, 0
  %v197 = vsel %vm192, %v149, 0
  %v200 = vsel %vm192, %v150, 0
  %v203 = vsel %vm192, %v151, 0
  %205 = vmatprep.subr.bf16.mxu0 %v177
  %206 = vmatpush1.bf16.msra.mxu0 %v176
  %207 = vmatprep.subr.bf16.mxu0 %v179
  %208 = vmatpush1.bf16.msra.mxu0 %v178
  %209 = vmatprep.subr.bf16.mxu0 %v181
  %210 = vmatpush1.bf16.msra.mxu0 %v180
  %211 = vmatprep.subr.bf16.mxu0 %v183
  %212 = vmatpush1.bf16.msra.mxu0 %v182
  %213 = vmatprep.subr.bf16.mxu0 0
  %214 = vmatpush1.bf16.msra.mxu0 0
  %215 = vmatprep.subr.bf16.mxu0 0
  %216 = vmatpush1.bf16.msra.mxu0 0
  %217 = vmatprep.subr.bf16.mxu0 0
  %218 = vmatpush1.bf16.msra.mxu0 0
  %219 = vmatprep.subr.bf16.mxu0 0
  %220 = vmatpush1.bf16.msra.mxu0 0
  %221 = vmatprep.subr.bf16.mxu0 0
  %222 = vmatpush1.bf16.msra.mxu0 0
  %223 = vmatprep.subr.bf16.mxu0 0
  %224 = vmatpush1.bf16.msra.mxu0 0
  %225 = vmatprep.subr.bf16.mxu0 0
  %226 = vmatpush1.bf16.msra.mxu0 0
  %227 = vmatprep.subr.bf16.mxu0 0
  %228 = vmatpush1.bf16.msra.mxu0 0
  %229 = vmatprep.subr.bf16.mxu0 0
  %230 = vmatpush1.bf16.msra.mxu0 0
  %231 = vmatprep.subr.bf16.mxu0 0
  %232 = vmatpush1.bf16.msra.mxu0 0
  %233 = vmatprep.subr.bf16.mxu0 0
  %234 = vmatpush1.bf16.msra.mxu0 0
  %235 = vmatprep.subr.bf16.mxu0 0
  %236 = vmatpush1.bf16.msra.mxu0 0
  %237 = vmatprep.mubr.bf16.mxu0 0
  %238 = vmatmul.mubr.bf16.gmra.mrb[0].mxu0 %v194
  %v239 = vpop.f32.mrb[0].mxu0
  %v240 = vadd.f32 0.0, %v239
  %v241 = vpop.f32.mrb[0].mxu0
  %v242 = vadd.f32 0.0, %v241
  %v243 = vpop.f32.mrb[0].mxu0
  %v244 = vadd.f32 0.0, %v243
  %v245 = vpop.f32.mrb[0].mxu0
  %v246 = vadd.f32 0.0, %v245
  %247 = vmatprep.mubr.bf16.mxu0 0
  %248 = vmatmul.mubr.bf16.gmra.mrb[0].mxu0 %v197
  %v249 = vpop.f32.mrb[0].mxu0
  %v250 = vadd.f32 0.0, %v249
  %v251 = vpop.f32.mrb[0].mxu0
  %v252 = vadd.f32 0.0, %v251
  %v253 = vpop.f32.mrb[0].mxu0
  %v254 = vadd.f32 0.0, %v253
  %v255 = vpop.f32.mrb[0].mxu0
  %v256 = vadd.f32 0.0, %v255
  %257 = vmatprep.mubr.bf16.mxu0 0
  %258 = vmatmul.mubr.bf16.gmra.mrb[0].mxu0 %v200
  %v259 = vpop.f32.mrb[0].mxu0
  %v260 = vadd.f32 0.0, %v259
  %v261 = vpop.f32.mrb[0].mxu0
  %v262 = vadd.f32 0.0, %v261
  %v263 = vpop.f32.mrb[0].mxu0
  %v264 = vadd.f32 0.0, %v263
  %v265 = vpop.f32.mrb[0].mxu0
  %v266 = vadd.f32 0.0, %v265
  %267 = vmatprep.mubr.bf16.mxu0 0
  %268 = vmatmul.mubr.bf16.gmra.mrb[0].mxu0 %v203
  %v269 = vpop.f32.mrb[0].mxu0
  %v270 = vadd.f32 0.0, %v269
  %v271 = vpop.f32.mrb[0].mxu0
  %v272 = vadd.f32 0.0, %v271
  %v273 = vpop.f32.mrb[0].mxu0
  %v274 = vadd.f32 0.0, %v273
  %v275 = vpop.f32.mrb[0].mxu0
  %v276 = vadd.f32 0.0, %v275
  %277 = vdwg.mxu0
  %279 = vset.pattern.permute.xlu0 0
  %280 = vperm.xlu0 %279, %v108
  %v281 = vpop.permute.xlu0 %280
  %284 = vset.pattern.permute.xlu0 0
  %285 = vperm.xlu0 %284, %v109
  %v286 = vpop.permute.xlu0 %285
  %289 = vset.pattern.permute.xlu0 0
  %290 = vperm.xlu0 %289, %v110
  %v291 = vpop.permute.xlu0 %290
  %294 = vset.pattern.permute.xlu0 0
  %295 = vperm.xlu0 %294, %v111
  %v296 = vpop.permute.xlu0 %295
  %299 = vset.pattern.permute.xlu0 0
  %300 = vperm.xlu0 %299, %v112
  %v301 = vpop.permute.xlu0 %300
  %304 = vset.pattern.permute.xlu0 0
  %305 = vperm.xlu0 %304, %v113
  %v306 = vpop.permute.xlu0 %305
  %309 = vset.pattern.permute.xlu0 0
  %310 = vperm.xlu0 %309, %v114
  %v311 = vpop.permute.xlu0 %310
  %314 = vset.pattern.permute.xlu0 0
  %315 = vperm.xlu0 %314, %v115
  %v316 = vpop.permute.xlu0 %315
  %v318 = vmul.f32 %v240, %v281
  %v319 = vmul.f32 %v242, %v281
  %v320 = vmul.f32 %v244, %v286
  %v321 = vmul.f32 %v246, %v286
  %v322 = vmul.f32 %v250, %v291
  %v323 = vmul.f32 %v252, %v291
  %v324 = vmul.f32 %v254, %v296
  %v325 = vmul.f32 %v256, %v296
  %v326 = vmul.f32 %v260, %v301
  %v327 = vmul.f32 %v262, %v301
  %v328 = vmul.f32 %v264, %v306
  %v329 = vmul.f32 %v266, %v306
  %v330 = vmul.f32 %v270, %v311
  %v331 = vmul.f32 %v272, %v311
  %v332 = vmul.f32 %v274, %v316
  %v333 = vmul.f32 %v276, %v316
  %335 = vset.pattern.permute.xlu0 0
  %336 = vperm.xlu0 %335, %v116
  %v337 = vpop.permute.xlu0 %336
  %340 = vset.pattern.permute.xlu0 0
  %341 = vperm.xlu0 %340, %v117
  %v342 = vpop.permute.xlu0 %341
  %345 = vset.pattern.permute.xlu0 0
  %346 = vperm.xlu0 %345, %v118
  %v347 = vpop.permute.xlu0 %346
  %350 = vset.pattern.permute.xlu0 0
  %351 = vperm.xlu0 %350, %v119
  %v352 = vpop.permute.xlu0 %351
  %355 = vset.pattern.permute.xlu0 0
  %356 = vperm.xlu0 %355, %v120
  %v357 = vpop.permute.xlu0 %356
  %360 = vset.pattern.permute.xlu0 0
  %361 = vperm.xlu0 %360, %v121
  %v362 = vpop.permute.xlu0 %361
  %365 = vset.pattern.permute.xlu0 0
  %366 = vperm.xlu0 %365, %v122
  %v367 = vpop.permute.xlu0 %366
  %370 = vset.pattern.permute.xlu0 0
  %371 = vperm.xlu0 %370, %v123
  %v372 = vpop.permute.xlu0 %371
  %v374 = vadd.f32 %v318, %v337
  %v375 = vadd.f32 %v319, %v337
  %v376 = vadd.f32 %v320, %v342
  %v377 = vadd.f32 %v321, %v342
  %v378 = vadd.f32 %v322, %v347
  %v379 = vadd.f32 %v323, %v347
  %v380 = vadd.f32 %v324, %v352
  %v381 = vadd.f32 %v325, %v352
  %v382 = vadd.f32 %v326, %v357
  %v383 = vadd.f32 %v327, %v357
  %v384 = vadd.f32 %v328, %v362
  %v385 = vadd.f32 %v329, %v362
  %v386 = vadd.f32 %v330, %v367
  %v387 = vadd.f32 %v331, %v367
  %v388 = vadd.f32 %v332, %v372
  %v389 = vadd.f32 %v333, %v372
  %v390 = vmax.f32 %v374, 0.0
  %v391 = vmax.f32 %v375, 0.0
  %v392 = vmax.f32 %v376, 0.0
  %v393 = vmax.f32 %v377, 0.0
  %v394 = vmax.f32 %v378, 0.0
  %v395 = vmax.f32 %v379, 0.0
  %v396 = vmax.f32 %v380, 0.0
  %v397 = vmax.f32 %v381, 0.0
  %v398 = vmax.f32 %v382, 0.0
  %v399 = vmax.f32 %v383, 0.0
  %v400 = vmax.f32 %v384, 0.0
  %v401 = vmax.f32 %v385, 0.0
  %v402 = vmax.f32 %v386, 0.0
  %v403 = vmax.f32 %v387, 0.0
  %v404 = vmax.f32 %v388, 0.0
  %v405 = vmax.f32 %v389, 0.0
  %v406 = vpack.c.bf16 %v392, %v390
  %v407 = vpack.c.bf16 %v393, %v391
  %v408 = vpack.c.bf16 %v396, %v394
  %v409 = vpack.c.bf16 %v397, %v395
  %v410 = vpack.c.bf16 %v400, %v398
  %v411 = vpack.c.bf16 %v401, %v399
  %v412 = vpack.c.bf16 %v404, %v402
  %v413 = vpack.c.bf16 %v405, %v403
  %v422 = vunpack.c.l.b16 %v406
  %v423 = vunpack.c.l.b16 %v407
  %v424 = vunpack.c.h.b16 %v406
  %v425 = vunpack.c.h.b16 %v407
  %v426 = vunpack.c.l.b16 %v408
  %v427 = vunpack.c.l.b16 %v409
  %v428 = vunpack.c.h.b16 %v408
  %v429 = vunpack.c.h.b16 %v409
  %v430 = vunpack.c.l.b16 %v410
  %v431 = vunpack.c.l.b16 %v411
  %v432 = vunpack.c.h.b16 %v410
  %v433 = vunpack.c.h.b16 %v411
  %v434 = vunpack.c.l.b16 %v412
  %v435 = vunpack.c.l.b16 %v413
  %v436 = vunpack.c.h.b16 %v412
  %v437 = vunpack.c.h.b16 %v413
  %v438 = vpack.c.b16 %v423, %v422
  %v439 = vpack.c.b16 %v425, %v424
  %v440 = vpack.c.b16 %v427, %v426
  %v441 = vpack.c.b16 %v429, %v428
  %v442 = vpack.c.b16 %v431, %v430
  %v443 = vpack.c.b16 %v433, %v432
  %v444 = vpack.c.b16 %v435, %v434
  %v445 = vpack.c.b16 %v437, %v436
  %454 = vst [vmem:[%s56] sm:$0xff] %v438
  %455 = vst [vmem:[%s56 + $0x8] sm:$0xff] %v439
  %456 = vst [vmem:[%s56 + $0x10] sm:$0xff] %v440
  %457 = vst [vmem:[%s56 + $0x18] sm:$0xff] %v441
  %458 = vst [vmem:[%s56 + $0x20] sm:$0xff] %v442
  %459 = vst [vmem:[%s56 + $0x28] sm:$0xff] %v443
  %460 = vst [vmem:[%s56 + $0x30] sm:$0xff] %v444
  %461 = vst [vmem:[%s56 + $0x38] sm:$0xff] %v445
  %v474 = vunpack.c.l.b16 %v96
  %v475 = vunpack.c.l.b16 %v97
  %v476 = vunpack.c.l.b16 %v98
  %v477 = vunpack.c.l.b16 %v99
  %v478 = vunpack.c.l.b16 %v100
  %v479 = vunpack.c.l.b16 %v101
  %v480 = vunpack.c.l.b16 %v102
  %v481 = vunpack.c.l.b16 %v103
  %v482 = vunpack.c.l.b16 %v104
  %v483 = vunpack.c.l.b16 %v105
  %v484 = vunpack.c.l.b16 %v106
  %v485 = vunpack.c.l.b16 %v107
  %v486 = vpack.c.b16 %v475, %v474
  %v487 = vpack.c.b16 %v477, %v476
  %v488 = vpack.c.b16 %v479, %v478
  %v489 = vpack.c.b16 %v481, %v480
  %v490 = vpack.c.b16 %v483, %v482
  %v491 = vpack.c.b16 %v485, %v484
  %v493 = vsel %vm192, %v486, 0
  %v496 = vsel %vm192, %v487, 0
  %v499 = vsel %vm192, %v488, 0
  %v502 = vsel %vm192, %v489, 0
  %v505 = vsel %vm192, %v490, 0
  %v508 = vsel %vm192, %v491, 0
  %510 = vmatprep.subr.bf16.mxu0 %v407
  %511 = vmatpush1.bf16.msra.mxu0 %v406
  %512 = vmatprep.subr.bf16.mxu0 %v409
  %513 = vmatpush1.bf16.msra.mxu0 %v408
  %514 = vmatprep.subr.bf16.mxu0 %v411
  %515 = vmatpush1.bf16.msra.mxu0 %v410
  %516 = vmatprep.subr.bf16.mxu0 %v413
  %517 = vmatpush1.bf16.msra.mxu0 %v412
  %518 = vmatprep.subr.bf16.mxu0 0
  %519 = vmatpush1.bf16.msra.mxu0 0
  %520 = vmatprep.subr.bf16.mxu0 0
  %521 = vmatpush1.bf16.msra.mxu0 0
  %522 = vmatprep.subr.bf16.mxu0 0
  %523 = vmatpush1.bf16.msra.mxu0 0
  %524 = vmatprep.subr.bf16.mxu0 0
  %525 = vmatpush1.bf16.msra.mxu0 0
  %526 = vmatprep.subr.bf16.mxu0 0
  %527 = vmatpush1.bf16.msra.mxu0 0
  %528 = vmatprep.subr.bf16.mxu0 0
  %529 = vmatpush1.bf16.msra.mxu0 0
  %530 = vmatprep.subr.bf16.mxu0 0
  %531 = vmatpush1.bf16.msra.mxu0 0
  %532 = vmatprep.subr.bf16.mxu0 0
  %533 = vmatpush1.bf16.msra.mxu0 0
  %534 = vmatprep.subr.bf16.mxu0 0
  %535 = vmatpush1.bf16.msra.mxu0 0
  %536 = vmatprep.subr.bf16.mxu0 0
  %537 = vmatpush1.bf16.msra.mxu0 0
  %538 = vmatprep.subr.bf16.mxu0 0
  %539 = vmatpush1.bf16.msra.mxu0 0
  %540 = vmatprep.subr.bf16.mxu0 0
  %541 = vmatpush1.bf16.msra.mxu0 0
  %542 = vmatprep.mubr.bf16.mxu0 0
  %543 = vmatmul.mubr.bf16.gmra.mrb[0].mxu0 %v493
  %v544 = vpop.f32.mrb[0].mxu0
  %v545 = vadd.f32 0.0, %v544
  %v546 = vpop.f32.mrb[0].mxu0
  %v547 = vadd.f32 0.0, %v546
  %v548 = vpop.f32.mrb[0].mxu0
  %v549 = vadd.f32 0.0, %v548
  %v550 = vpop.f32.mrb[0].mxu0
  %v551 = vadd.f32 0.0, %v550
  %552 = vmatprep.mubr.bf16.mxu0 0
  %553 = vmatmul.mubr.bf16.gmra.mrb[0].mxu0 %v496
  %v554 = vpop.f32.mrb[0].mxu0
  %v555 = vadd.f32 0.0, %v554
  %v556 = vpop.f32.mrb[0].mxu0
  %v557 = vadd.f32 0.0, %v556
  %v558 = vpop.f32.mrb[0].mxu0
  %v559 = vadd.f32 0.0, %v558
  %v560 = vpop.f32.mrb[0].mxu0
  %v561 = vadd.f32 0.0, %v560
  %562 = vmatprep.mubr.bf16.mxu0 0
  %563 = vmatmul.mubr.bf16.gmra.mrb[0].mxu0 %v499
  %v564 = vpop.f32.mrb[0].mxu0
  %v565 = vadd.f32 0.0, %v564
  %v566 = vpop.f32.mrb[0].mxu0
  %v567 = vadd.f32 0.0, %v566
  %v568 = vpop.f32.mrb[0].mxu0
  %v569 = vadd.f32 0.0, %v568
  %v570 = vpop.f32.mrb[0].mxu0
  %v571 = vadd.f32 0.0, %v570
  %572 = vmatprep.mubr.bf16.mxu0 0
  %573 = vmatmul.mubr.bf16.gmra.mrb[0].mxu0 %v502
  %v574 = vpop.f32.mrb[0].mxu0
  %v575 = vadd.f32 0.0, %v574
  %v576 = vpop.f32.mrb[0].mxu0
  %v577 = vadd.f32 0.0, %v576
  %v578 = vpop.f32.mrb[0].mxu0
  %v579 = vadd.f32 0.0, %v578
  %v580 = vpop.f32.mrb[0].mxu0
  %v581 = vadd.f32 0.0, %v580
  %582 = vmatprep.mubr.bf16.mxu0 0
  %583 = vmatmul.mubr.bf16.gmra.mrb[0].mxu0 %v505
  %v584 = vpop.f32.mrb[0].mxu0
  %v585 = vadd.f32 0.0, %v584
  %v586 = vpop.f32.mrb[0].mxu0
  %v587 = vadd.f32 0.0, %v586
  %v588 = vpop.f32.mrb[0].mxu0
  %v589 = vadd.f32 0.0, %v588
  %v590 = vpop.f32.mrb[0].mxu0
  %v591 = vadd.f32 0.0, %v590
  %592 = vmatprep.mubr.bf16.mxu0 0
  %593 = vmatmul.mubr.bf16.gmra.mrb[0].mxu0 %v508
  %v594 = vpop.f32.mrb[0].mxu0
  %v595 = vadd.f32 0.0, %v594
  %v596 = vpop.f32.mrb[0].mxu0
  %v597 = vadd.f32 0.0, %v596
  %v598 = vpop.f32.mrb[0].mxu0
  %v599 = vadd.f32 0.0, %v598
  %v600 = vpop.f32.mrb[0].mxu0
  %v601 = vadd.f32 0.0, %v600
  %602 = vdwg.mxu0
  %v603 = vmul.f32 %v545, %v545
  %v604 = vmul.f32 %v549, %v549
  %v605 = vmul.f32 %v555, %v555
  %v606 = vmul.f32 %v559, %v559
  %v607 = vmul.f32 %v565, %v565
  %v608 = vmul.f32 %v569, %v569
  %v609 = vmul.f32 %v575, %v575
  %v610 = vmul.f32 %v579, %v579
  %v611 = vmul.f32 %v585, %v585
  %v612 = vmul.f32 %v589, %v589
  %v613 = vmul.f32 %v595, %v595
  %v614 = vmul.f32 %v599, %v599
  %v615 = vadd.f32 %v545, %v547
  %v616 = vadd.f32 %v549, %v551
  %v617 = vadd.f32 %v555, %v557
  %v618 = vadd.f32 %v559, %v561
  %v619 = vadd.f32 %v565, %v567
  %v620 = vadd.f32 %v569, %v571
  %v621 = vadd.f32 %v575, %v577
  %v622 = vadd.f32 %v579, %v581
  %v623 = vadd.f32 %v585, %v587
  %v624 = vadd.f32 %v589, %v591
  %v625 = vadd.f32 %v595, %v597
  %v626 = vadd.f32 %v599, %v601
  %v627 = vmul.f32 %v547, %v547
  %v628 = vmul.f32 %v551, %v551
  %v629 = vmul.f32 %v557, %v557
  %v630 = vmul.f32 %v561, %v561
  %v631 = vmul.f32 %v567, %v567
  %v632 = vmul.f32 %v571, %v571
  %v633 = vmul.f32 %v577, %v577
  %v634 = vmul.f32 %v581, %v581
  %v635 = vmul.f32 %v587, %v587
  %v636 = vmul.f32 %v591, %v591
  %v637 = vmul.f32 %v597, %v597
  %v638 = vmul.f32 %v601, %v601
  %v639 = vadd.f32 %v603, %v627
  %v640 = vadd.f32 %v604, %v628
  %v641 = vadd.f32 %v605, %v629
  %v642 = vadd.f32 %v606, %v630
  %v643 = vadd.f32 %v607, %v631
  %v644 = vadd.f32 %v608, %v632
  %v645 = vadd.f32 %v609, %v633
  %v646 = vadd.f32 %v610, %v634
  %v647 = vadd.f32 %v611, %v635
  %v648 = vadd.f32 %v612, %v636
  %v649 = vadd.f32 %v613, %v637
  %v650 = vadd.f32 %v614, %v638
  %v651 = vadd.f32 %v615, 0.0
  %v652 = vadd.f32 %v616, 0.0
  %v653 = vadd.f32 %v617, 0.0
  %v654 = vadd.f32 %v618, 0.0
  %v655 = vadd.f32 %v619, 0.0
  %v656 = vadd.f32 %v620, 0.0
  %v657 = vadd.f32 %v621, 0.0
  %v658 = vadd.f32 %v622, 0.0
  %v659 = vadd.f32 %v623, 0.0
  %v660 = vadd.f32 %v624, 0.0
  %v661 = vadd.f32 %v625, 0.0
  %v662 = vadd.f32 %v626, 0.0
  %v663 = vadd.f32 %v639, 0.0
  %v664 = vadd.f32 %v640, 0.0
  %v665 = vadd.f32 %v641, 0.0
  %v666 = vadd.f32 %v642, 0.0
  %v667 = vadd.f32 %v643, 0.0
  %v668 = vadd.f32 %v644, 0.0
  %v669 = vadd.f32 %v645, 0.0
  %v670 = vadd.f32 %v646, 0.0
  %v671 = vadd.f32 %v647, 0.0
  %v672 = vadd.f32 %v648, 0.0
  %v673 = vadd.f32 %v649, 0.0
  %v674 = vadd.f32 %v650, 0.0
  %s675 = scalar_lea.vmem %s48, 64
  %v676 = vld [vmem:[%s675] sm:$0xff]
  %v677 = vld [vmem:[%s675 + $0x8] sm:$0xff]
  %v678 = vld [vmem:[%s675 + $0x10] sm:$0xff]
  %v679 = vld [vmem:[%s675 + $0x18] sm:$0xff]
  %v680 = vld [vmem:[%s675 + $0x20] sm:$0xff]
  %v681 = vld [vmem:[%s675 + $0x28] sm:$0xff]
  %v682 = vld [vmem:[%s675 + $0x30] sm:$0xff]
  %v683 = vld [vmem:[%s675 + $0x38] sm:$0xff]
  %v692 = vunpack.c.l.b16 %v676
  %v693 = vunpack.c.h.b16 %v676
  %v694 = vunpack.c.l.b16 %v677
  %v695 = vunpack.c.h.b16 %v677
  %v696 = vunpack.c.l.b16 %v678
  %v697 = vunpack.c.h.b16 %v678
  %v698 = vunpack.c.l.b16 %v679
  %v699 = vunpack.c.h.b16 %v679
  %v700 = vunpack.c.l.b16 %v680
  %v701 = vunpack.c.h.b16 %v680
  %v702 = vunpack.c.l.b16 %v681
  %v703 = vunpack.c.h.b16 %v681
  %v704 = vunpack.c.l.b16 %v682
  %v705 = vunpack.c.h.b16 %v682
  %v706 = vunpack.c.l.b16 %v683
  %v707 = vunpack.c.h.b16 %v683
  %v708 = vpack.c.b16 %v694, %v692
  %v709 = vpack.c.b16 %v695, %v693
  %v710 = vpack.c.b16 %v698, %v696
  %v711 = vpack.c.b16 %v699, %v697
  %v712 = vpack.c.b16 %v702, %v700
  %v713 = vpack.c.b16 %v703, %v701
  %v714 = vpack.c.b16 %v706, %v704
  %v715 = vpack.c.b16 %v707, %v705
  %724 = vmatprep.subr.bf16.mxu0 %v709
  %725 = vmatpush1.bf16.msra.mxu0 %v708
  %726 = vmatprep.subr.bf16.mxu0 %v711
  %727 = vmatpush1.bf16.msra.mxu0 %v710
  %728 = vmatprep.subr.bf16.mxu0 %v713
  %729 = vmatpush1.bf16.msra.mxu0 %v712
  %730 = vmatprep.subr.bf16.mxu0 %v715
  %731 = vmatpush1.bf16.msra.mxu0 %v714
  %732 = vmatprep.subr.bf16.mxu0 0
  %733 = vmatpush1.bf16.msra.mxu0 0
  %734 = vmatprep.subr.bf16.mxu0 0
  %735 = vmatpush1.bf16.msra.mxu0 0
  %736 = vmatprep.subr.bf16.mxu0 0
  %737 = vmatpush1.bf16.msra.mxu0 0
  %738 = vmatprep.subr.bf16.mxu0 0
  %739 = vmatpush1.bf16.msra.mxu0 0
  %740 = vmatprep.subr.bf16.mxu0 0
  %741 = vmatpush1.bf16.msra.mxu0 0
  %742 = vmatprep.subr.bf16.mxu0 0
  %743 = vmatpush1.bf16.msra.mxu0 0
  %744 = vmatprep.subr.bf16.mxu0 0
  %745 = vmatpush1.bf16.msra.mxu0 0
  %746 = vmatprep.subr.bf16.mxu0 0
  %747 = vmatpush1.bf16.msra.mxu0 0
  %748 = vmatprep.subr.bf16.mxu0 0
  %749 = vmatpush1.bf16.msra.mxu0 0
  %750 = vmatprep.subr.bf16.mxu0 0
  %751 = vmatpush1.bf16.msra.mxu0 0
  %752 = vmatprep.subr.bf16.mxu0 0
  %753 = vmatpush1.bf16.msra.mxu0 0
  %754 = vmatprep.subr.bf16.mxu0 0
  %755 = vmatpush1.bf16.msra.mxu0 0
  %756 = vmatprep.mubr.bf16.mxu0 0
  %757 = vmatmul.mubr.bf16.gmra.mrb[0].mxu0 %v194
  %v758 = vpop.f32.mrb[0].mxu0
  %v759 = vadd.f32 0.0, %v758
  %v760 = vpop.f32.mrb[0].mxu0
  %v761 = vadd.f32 0.0, %v760
  %v762 = vpop.f32.mrb[0].mxu0
  %v763 = vadd.f32 0.0, %v762
  %v764 = vpop.f32.mrb[0].mxu0
  %v765 = vadd.f32 0.0, %v764
  %766 = vmatprep.mubr.bf16.mxu0 0
  %767 = vmatmul.mubr.bf16.gmra.mrb[0].mxu0 %v197
  %v768 = vpop.f32.mrb[0].mxu0
  %v769 = vadd.f32 0.0, %v768
  %v770 = vpop.f32.mrb[0].mxu0
  %v771 = vadd.f32 0.0, %v770
  %v772 = vpop.f32.mrb[0].mxu0
  %v773 = vadd.f32 0.0, %v772
  %v774 = vpop.f32.mrb[0].mxu0
  %v775 = vadd.f32 0.0, %v774
  %776 = vmatprep.mubr.bf16.mxu0 0
  %777 = vmatmul.mubr.bf16.gmra.mrb[0].mxu0 %v200
  %v778 = vpop.f32.mrb[0].mxu0
  %v779 = vadd.f32 0.0, %v778
  %v780 = vpop.f32.mrb[0].mxu0
  %v781 = vadd.f32 0.0, %v780
  %v782 = vpop.f32.mrb[0].mxu0
  %v783 = vadd.f32 0.0, %v782
  %v784 = vpop.f32.mrb[0].mxu0
  %v785 = vadd.f32 0.0, %v784
  %786 = vmatprep.mubr.bf16.mxu0 0
  %787 = vmatmul.mubr.bf16.gmra.mrb[0].mxu0 %v203
  %v788 = vpop.f32.mrb[0].mxu0
  %v789 = vadd.f32 0.0, %v788
  %v790 = vpop.f32.mrb[0].mxu0
  %v791 = vadd.f32 0.0, %v790
  %v792 = vpop.f32.mrb[0].mxu0
  %v793 = vadd.f32 0.0, %v792
  %v794 = vpop.f32.mrb[0].mxu0
  %v795 = vadd.f32 0.0, %v794
  %796 = vdwg.mxu0
  %v797 = vmul.f32 %v759, %v281
  %v798 = vmul.f32 %v761, %v281
  %v799 = vmul.f32 %v763, %v286
  %v800 = vmul.f32 %v765, %v286
  %v801 = vmul.f32 %v769, %v291
  %v802 = vmul.f32 %v771, %v291
  %v803 = vmul.f32 %v773, %v296
  %v804 = vmul.f32 %v775, %v296
  %v805 = vmul.f32 %v779, %v301
  %v806 = vmul.f32 %v781, %v301
  %v807 = vmul.f32 %v783, %v306
  %v808 = vmul.f32 %v785, %v306
  %v809 = vmul.f32 %v789, %v311
  %v810 = vmul.f32 %v791, %v311
  %v811 = vmul.f32 %v793, %v316
  %v812 = vmul.f32 %v795, %v316
  %v813 = vadd.f32 %v797, %v337
  %v814 = vadd.f32 %v798, %v337
  %v815 = vadd.f32 %v799, %v342
  %v816 = vadd.f32 %v800, %v342
  %v817 = vadd.f32 %v801, %v347
  %v818 = vadd.f32 %v802, %v347
  %v819 = vadd.f32 %v803, %v352
  %v820 = vadd.f32 %v804, %v352
  %v821 = vadd.f32 %v805, %v357
  %v822 = vadd.f32 %v806, %v357
  %v823 = vadd.f32 %v807, %v362
  %v824 = vadd.f32 %v808, %v362
  %v825 = vadd.f32 %v809, %v367
  %v826 = vadd.f32 %v810, %v367
  %v827 = vadd.f32 %v811, %v372
  %v828 = vadd.f32 %v812, %v372
  %v829 = vmax.f32 %v813, 0.0
  %v830 = vmax.f32 %v814, 0.0
  %v831 = vmax.f32 %v815, 0.0
  %v832 = vmax.f32 %v816, 0.0
  %v833 = vmax.f32 %v817, 0.0
  %v834 = vmax.f32 %v818, 0.0
  %v835 = vmax.f32 %v819, 0.0
  %v836 = vmax.f32 %v820, 0.0
  %v837 = vmax.f32 %v821, 0.0
  %v838 = vmax.f32 %v822, 0.0
  %v839 = vmax.f32 %v823, 0.0
  %v840 = vmax.f32 %v824, 0.0
  %v841 = vmax.f32 %v825, 0.0
  %v842 = vmax.f32 %v826, 0.0
  %v843 = vmax.f32 %v827, 0.0
  %v844 = vmax.f32 %v828, 0.0
  %v845 = vpack.c.bf16 %v831, %v829
  %v846 = vpack.c.bf16 %v832, %v830
  %v847 = vpack.c.bf16 %v835, %v833
  %v848 = vpack.c.bf16 %v836, %v834
  %v849 = vpack.c.bf16 %v839, %v837
  %v850 = vpack.c.bf16 %v840, %v838
  %v851 = vpack.c.bf16 %v843, %v841
  %v852 = vpack.c.bf16 %v844, %v842
  %v861 = vunpack.c.l.b16 %v845
  %v862 = vunpack.c.l.b16 %v846
  %v863 = vunpack.c.h.b16 %v845
  %v864 = vunpack.c.h.b16 %v846
  %v865 = vunpack.c.l.b16 %v847
  %v866 = vunpack.c.l.b16 %v848
  %v867 = vunpack.c.h.b16 %v847
  %v868 = vunpack.c.h.b16 %v848
  %v869 = vunpack.c.l.b16 %v849
  %v870 = vunpack.c.l.b16 %v850
  %v871 = vunpack.c.h.b16 %v849
  %v872 = vunpack.c.h.b16 %v850
  %v873 = vunpack.c.l.b16 %v851
  %v874 = vunpack.c.l.b16 %v852
  %v875 = vunpack.c.h.b16 %v851
  %v876 = vunpack.c.h.b16 %v852
  %v877 = vpack.c.b16 %v862, %v861
  %v878 = vpack.c.b16 %v864, %v863
  %v879 = vpack.c.b16 %v866, %v865
  %v880 = vpack.c.b16 %v868, %v867
  %v881 = vpack.c.b16 %v870, %v869
  %v882 = vpack.c.b16 %v872, %v871
  %v883 = vpack.c.b16 %v874, %v873
  %v884 = vpack.c.b16 %v876, %v875
  %s893 = scalar_lea.vmem %s56, 64
  %894 = vst [vmem:[%s893] sm:$0xff] %v877
  %895 = vst [vmem:[%s893 + $0x8] sm:$0xff] %v878
  %896 = vst [vmem:[%s893 + $0x10] sm:$0xff] %v879
  %897 = vst [vmem:[%s893 + $0x18] sm:$0xff] %v880
  %898 = vst [vmem:[%s893 + $0x20] sm:$0xff] %v881
  %899 = vst [vmem:[%s893 + $0x28] sm:$0xff] %v882
  %900 = vst [vmem:[%s893 + $0x30] sm:$0xff] %v883
  %901 = vst [vmem:[%s893 + $0x38] sm:$0xff] %v884
  %902 = vmatprep.subr.bf16.mxu0 %v846
  %903 = vmatpush1.bf16.msra.mxu0 %v845
  %904 = vmatprep.subr.bf16.mxu0 %v848
  %905 = vmatpush1.bf16.msra.mxu0 %v847
  %906 = vmatprep.subr.bf16.mxu0 %v850
  %907 = vmatpush1.bf16.msra.mxu0 %v849
  %908 = vmatprep.subr.bf16.mxu0 %v852
  %909 = vmatpush1.bf16.msra.mxu0 %v851
  %910 = vmatprep.subr.bf16.mxu0 0
  %911 = vmatpush1.bf16.msra.mxu0 0
  %912 = vmatprep.subr.bf16.mxu0 0
  %913 = vmatpush1.bf16.msra.mxu0 0
  %914 = vmatprep.subr.bf16.mxu0 0
  %915 = vmatpush1.bf16.msra.mxu0 0
  %916 = vmatprep.subr.bf16.mxu0 0
  %917 = vmatpush1.bf16.msra.mxu0 0
  %918 = vmatprep.subr.bf16.mxu0 0
  %919 = vmatpush1.bf16.msra.mxu0 0
  %920 = vmatprep.subr.bf16.mxu0 0
  %921 = vmatpush1.bf16.msra.mxu0 0
  %922 = vmatprep.subr.bf16.mxu0 0
  %923 = vmatpush1.bf16.msra.mxu0 0
  %924 = vmatprep.subr.bf16.mxu0 0
  %925 = vmatpush1.bf16.msra.mxu0 0
  %926 = vmatprep.subr.bf16.mxu0 0
  %927 = vmatpush1.bf16.msra.mxu0 0
  %928 = vmatprep.subr.bf16.mxu0 0
  %929 = vmatpush1.bf16.msra.mxu0 0
  %930 = vmatprep.subr.bf16.mxu0 0
  %931 = vmatpush1.bf16.msra.mxu0 0
  %932 = vmatprep.subr.bf16.mxu0 0
  %933 = vmatpush1.bf16.msra.mxu0 0
  %934 = vmatprep.mubr.bf16.mxu0 0
  %935 = vmatmul.mubr.bf16.gmra.mrb[0].mxu0 %v493
  %v936 = vpop.f32.mrb[0].mxu0
  %v937 = vadd.f32 0.0, %v936
  %v938 = vpop.f32.mrb[0].mxu0
  %v939 = vadd.f32 0.0, %v938
  %v940 = vpop.f32.mrb[0].mxu0
  %v941 = vadd.f32 0.0, %v940
  %v942 = vpop.f32.mrb[0].mxu0
  %v943 = vadd.f32 0.0, %v942
  %944 = vmatprep.mubr.bf16.mxu0 0
  %945 = vmatmul.mubr.bf16.gmra.mrb[0].mxu0 %v496
  %v946 = vpop.f32.mrb[0].mxu0
  %v947 = vadd.f32 0.0, %v946
  %v948 = vpop.f32.mrb[0].mxu0
  %v949 = vadd.f32 0.0, %v948
  %v950 = vpop.f32.mrb[0].mxu0
  %v951 = vadd.f32 0.0, %v950
  %v952 = vpop.f32.mrb[0].mxu0
  %v953 = vadd.f32 0.0, %v952
  %954 = vmatprep.mubr.bf16.mxu0 0
  %955 = vmatmul.mubr.bf16.gmra.mrb[0].mxu0 %v499
  %v956 = vpop.f32.mrb[0].mxu0
  %v957 = vadd.f32 0.0, %v956
  %v958 = vpop.f32.mrb[0].mxu0
  %v959 = vadd.f32 0.0, %v958
  %v960 = vpop.f32.mrb[0].mxu0
  %v961 = vadd.f32 0.0, %v960
  %v962 = vpop.f32.mrb[0].mxu0
  %v963 = vadd.f32 0.0, %v962
  %964 = vmatprep.mubr.bf16.mxu0 0
  %965 = vmatmul.mubr.bf16.gmra.mrb[0].mxu0 %v502
  %v966 = vpop.f32.mrb[0].mxu0
  %v967 = vadd.f32 0.0, %v966
  %v968 = vpop.f32.mrb[0].mxu0
  %v969 = vadd.f32 0.0, %v968
  %v970 = vpop.f32.mrb[0].mxu0
  %v971 = vadd.f32 0.0, %v970
  %v972 = vpop.f32.mrb[0].mxu0
  %v973 = vadd.f32 0.0, %v972
  %974 = vmatprep.mubr.bf16.mxu0 0
  %975 = vmatmul.mubr.bf16.gmra.mrb[0].mxu0 %v505
  %v976 = vpop.f32.mrb[0].mxu0
  %v977 = vadd.f32 0.0, %v976
  %v978 = vpop.f32.mrb[0].mxu0
  %v979 = vadd.f32 0.0, %v978
  %v980 = vpop.f32.mrb[0].mxu0
  %v981 = vadd.f32 0.0, %v980
  %v982 = vpop.f32.mrb[0].mxu0
  %v983 = vadd.f32 0.0, %v982
  %984 = vmatprep.mubr.bf16.mxu0 0
  %985 = vmatmul.mubr.bf16.gmra.mrb[0].mxu0 %v508
  %v986 = vpop.f32.mrb[0].mxu0
  %v987 = vadd.f32 0.0, %v986
  %v988 = vpop.f32.mrb[0].mxu0
  %v989 = vadd.f32 0.0, %v988
  %v990 = vpop.f32.mrb[0].mxu0
  %v991 = vadd.f32 0.0, %v990
  %v992 = vpop.f32.mrb[0].mxu0
  %v993 = vadd.f32 0.0, %v992
  %994 = vdwg.mxu0
  %v995 = vmul.f32 %v937, %v937
  %v996 = vmul.f32 %v941, %v941
  %v997 = vmul.f32 %v947, %v947
  %v998 = vmul.f32 %v951, %v951
  %v999 = vmul.f32 %v957, %v957
  %v1000 = vmul.f32 %v961, %v961
  %v1001 = vmul.f32 %v967, %v967
  %v1002 = vmul.f32 %v971, %v971
  %v1003 = vmul.f32 %v977, %v977
  %v1004 = vmul.f32 %v981, %v981
  %v1005 = vmul.f32 %v987, %v987
  %v1006 = vmul.f32 %v991, %v991
  %v1007 = vadd.f32 %v937, %v939
  %v1008 = vadd.f32 %v941, %v943
  %v1009 = vadd.f32 %v947, %v949
  %v1010 = vadd.f32 %v951, %v953
  %v1011 = vadd.f32 %v957, %v959
  %v1012 = vadd.f32 %v961, %v963
  %v1013 = vadd.f32 %v967, %v969
  %v1014 = vadd.f32 %v971, %v973
  %v1015 = vadd.f32 %v977, %v979
  %v1016 = vadd.f32 %v981, %v983
  %v1017 = vadd.f32 %v987, %v989
  %v1018 = vadd.f32 %v991, %v993
  %v1019 = vmul.f32 %v939, %v939
  %v1020 = vmul.f32 %v943, %v943
  %v1021 = vmul.f32 %v949, %v949
  %v1022 = vmul.f32 %v953, %v953
  %v1023 = vmul.f32 %v959, %v959
  %v1024 = vmul.f32 %v963, %v963
  %v1025 = vmul.f32 %v969, %v969
  %v1026 = vmul.f32 %v973, %v973
  %v1027 = vmul.f32 %v979, %v979
  %v1028 = vmul.f32 %v983, %v983
  %v1029 = vmul.f32 %v989, %v989
  %v1030 = vmul.f32 %v993, %v993
  %v1031 = vadd.f32 %v995, %v1019
  %v1032 = vadd.f32 %v996, %v1020
  %v1033 = vadd.f32 %v997, %v1021
  %v1034 = vadd.f32 %v998, %v1022
  %v1035 = vadd.f32 %v999, %v1023
  %v1036 = vadd.f32 %v1000, %v1024
  %v1037 = vadd.f32 %v1001, %v1025
  %v1038 = vadd.f32 %v1002, %v1026
  %v1039 = vadd.f32 %v1003, %v1027
  %v1040 = vadd.f32 %v1004, %v1028
  %v1041 = vadd.f32 %v1005, %v1029
  %v1042 = vadd.f32 %v1006, %v1030
  %v1043 = vadd.f32 %v651, %v1007
  %v1044 = vadd.f32 %v652, %v1008
  %v1045 = vadd.f32 %v653, %v1009
  %v1046 = vadd.f32 %v654, %v1010
  %v1047 = vadd.f32 %v655, %v1011
  %v1048 = vadd.f32 %v656, %v1012
  %v1049 = vadd.f32 %v657, %v1013
  %v1050 = vadd.f32 %v658, %v1014
  %v1051 = vadd.f32 %v659, %v1015
  %v1052 = vadd.f32 %v660, %v1016
  %v1053 = vadd.f32 %v661, %v1017
  %v1054 = vadd.f32 %v662, %v1018
  %v1055 = vadd.f32 %v663, %v1031
  %v1056 = vadd.f32 %v664, %v1032
  %v1057 = vadd.f32 %v665, %v1033
  %v1058 = vadd.f32 %v666, %v1034
  %v1059 = vadd.f32 %v667, %v1035
  %v1060 = vadd.f32 %v668, %v1036
  %v1061 = vadd.f32 %v669, %v1037
  %v1062 = vadd.f32 %v670, %v1038
  %v1063 = vadd.f32 %v671, %v1039
  %v1064 = vadd.f32 %v672, %v1040
  %v1065 = vadd.f32 %v673, %v1041
  %v1066 = vadd.f32 %v674, %v1042
  %v1067 = vld [vmem:[%s6] sm:$0xff]
  %v1068 = vld [vmem:[%s6 + $0x8] sm:$0xff]
  %v1069 = vld [vmem:[%s6 + $0x10] sm:$0xff]
  %v1070 = vld [vmem:[%s6 + $0x18] sm:$0xff]
  %v1071 = vld [vmem:[%s6 + $0x20] sm:$0xff]
  %v1072 = vld [vmem:[%s6 + $0x28] sm:$0xff]
  %v1073 = vld [vmem:[%s6 + $0x30] sm:$0xff]
  %v1074 = vld [vmem:[%s6 + $0x38] sm:$0xff]
  %v1075 = vld [vmem:[%s6 + $0x40] sm:$0xff]
  %v1076 = vld [vmem:[%s6 + $0x48] sm:$0xff]
  %v1077 = vld [vmem:[%s6 + $0x50] sm:$0xff]
  %v1078 = vld [vmem:[%s6 + $0x58] sm:$0xff]
  %v1079 = vadd.f32 %v1067, %v1043
  %v1080 = vadd.f32 %v1068, %v1044
  %v1081 = vadd.f32 %v1069, %v1045
  %v1082 = vadd.f32 %v1070, %v1046
  %v1083 = vadd.f32 %v1071, %v1047
  %v1084 = vadd.f32 %v1072, %v1048
  %v1085 = vadd.f32 %v1073, %v1049
  %v1086 = vadd.f32 %v1074, %v1050
  %v1087 = vadd.f32 %v1075, %v1051
  %v1088 = vadd.f32 %v1076, %v1052
  %v1089 = vadd.f32 %v1077, %v1053
  %v1090 = vadd.f32 %v1078, %v1054
  %1091 = vst [vmem:[%s6] sm:$0xff] %v1079
  %1092 = vst [vmem:[%s6 + $0x8] sm:$0xff] %v1080
  %1093 = vst [vmem:[%s6 + $0x10] sm:$0xff] %v1081
  %1094 = vst [vmem:[%s6 + $0x18] sm:$0xff] %v1082
  %1095 = vst [vmem:[%s6 + $0x20] sm:$0xff] %v1083
  %1096 = vst [vmem:[%s6 + $0x28] sm:$0xff] %v1084
  %1097 = vst [vmem:[%s6 + $0x30] sm:$0xff] %v1085
  %1098 = vst [vmem:[%s6 + $0x38] sm:$0xff] %v1086
  %1099 = vst [vmem:[%s6 + $0x40] sm:$0xff] %v1087
  %1100 = vst [vmem:[%s6 + $0x48] sm:$0xff] %v1088
  %1101 = vst [vmem:[%s6 + $0x50] sm:$0xff] %v1089
  %1102 = vst [vmem:[%s6 + $0x58] sm:$0xff] %v1090
  %v1103 = vld [vmem:[%s7] sm:$0xff]
  %v1104 = vld [vmem:[%s7 + $0x8] sm:$0xff]
  %v1105 = vld [vmem:[%s7 + $0x10] sm:$0xff]
  %v1106 = vld [vmem:[%s7 + $0x18] sm:$0xff]
  %v1107 = vld [vmem:[%s7 + $0x20] sm:$0xff]
  %v1108 = vld [vmem:[%s7 + $0x28] sm:$0xff]
  %v1109 = vld [vmem:[%s7 + $0x30] sm:$0xff]
  %v1110 = vld [vmem:[%s7 + $0x38] sm:$0xff]
  %v1111 = vld [vmem:[%s7 + $0x40] sm:$0xff]
  %v1112 = vld [vmem:[%s7 + $0x48] sm:$0xff]
  %v1113 = vld [vmem:[%s7 + $0x50] sm:$0xff]
  %v1114 = vld [vmem:[%s7 + $0x58] sm:$0xff]
  %v1115 = vadd.f32 %v1103, %v1055
  %v1116 = vadd.f32 %v1104, %v1056
  %v1117 = vadd.f32 %v1105, %v1057
  %v1118 = vadd.f32 %v1106, %v1058
  %v1119 = vadd.f32 %v1107, %v1059
  %v1120 = vadd.f32 %v1108, %v1060
  %v1121 = vadd.f32 %v1109, %v1061
  %v1122 = vadd.f32 %v1110, %v1062
  %v1123 = vadd.f32 %v1111, %v1063
  %v1124 = vadd.f32 %v1112, %v1064
  %v1125 = vadd.f32 %v1113, %v1065
  %v1126 = vadd.f32 %v1114, %v1066
  %1127 = vst [vmem:[%s7] sm:$0xff] %v1115
  %1128 = vst [vmem:[%s7 + $0x8] sm:$0xff] %v1116
  %1129 = vst [vmem:[%s7 + $0x10] sm:$0xff] %v1117
  %1130 = vst [vmem:[%s7 + $0x18] sm:$0xff] %v1118
  %1131 = vst [vmem:[%s7 + $0x20] sm:$0xff] %v1119
  %1132 = vst [vmem:[%s7 + $0x28] sm:$0xff] %v1120
  %1133 = vst [vmem:[%s7 + $0x30] sm:$0xff] %v1121
  %1134 = vst [vmem:[%s7 + $0x38] sm:$0xff] %v1122
  %1135 = vst [vmem:[%s7 + $0x40] sm:$0xff] %v1123
  %1136 = vst [vmem:[%s7 + $0x48] sm:$0xff] %v1124
  %1137 = vst [vmem:[%s7 + $0x50] sm:$0xff] %v1125
  %1138 = vst [vmem:[%s7 + $0x58] sm:$0xff] %v1126
  %s1139 = sadd.s32 0, 0
  %s1140 = smul.u32 2, %s1139
  %p1141 = scmp.lt.s32.totalorder %s1140, 1
  %s1142 = scalar_select %p1141, %s1140, 1
  %s1143 = smul.addr %s1142, 4
  %s1144 = scalar_lea.vmem %s5, %s1143
  // Predicated region
  $region26: #{resnet18_autoencoder_forward.8} parent=0 // pred_check
    _
  $region27: #{resnet18_autoencoder_forward.8} parent=0 // pred_check_branch
    %1146 = sbr.rel (0) target = $region29
  $region28: #{resnet18_autoencoder_forward.8} parent=0 // pred_region
    %s1147 = sadd.s32 0, 0
    %s1148 = smul.u32 2, %s1147
  $region29: #{resnet18_autoencoder_forward.8} parent=0 // pred_fallthru
    _
  // Predicated region
  $region30: #{resnet18_autoencoder_forward.8} parent=0 // pred_check
    _
  $region31: #{resnet18_autoencoder_forward.8} parent=0 // pred_check_branch
    %1150 = sbr.rel (0) target = $region33
  $region32: #{resnet18_autoencoder_forward.8} parent=0 // pred_region
    _
  $region33: #{resnet18_autoencoder_forward.8} parent=0 // pred_fallthru
    _
  // Predicated region
  $region34: #{resnet18_autoencoder_forward.8} parent=0 // pred_check
    _
  $region35: #{resnet18_autoencoder_forward.8} parent=0 // pred_check_branch
    %1152 = sbr.rel (0) target = $region37
  $region36: #{resnet18_autoencoder_forward.8} parent=0 // pred_region
    _
  $region37: #{resnet18_autoencoder_forward.8} parent=0 // pred_fallthru
    _
  // Predicated region
  $region38: #{resnet18_autoencoder_forward.8} parent=0 // pred_check
    _
  $region39: #{resnet18_autoencoder_forward.8} parent=0 // pred_check_branch
    %1154 = sbr.rel (0) target = $region41
  $region40: #{resnet18_autoencoder_forward.8} parent=0 // pred_region
    %s1155 = sadd.s32 0, 0
    %s1156 = smul.u32 2, %s1155
    %p1157 = scmp.lt.s32.totalorder %s1156, 1
    %s1158 = scalar_select %p1157, %s1156, 1
    %s1159 = smul.addr %s1158, 4
    %s1160 = scalar_lea.vmem %s5, %s1159
  $region41: #{resnet18_autoencoder_forward.8} parent=0 // pred_fallthru
    _
  // Predicated region
  $region42: #{resnet18_autoencoder_forward.8} parent=0 // pred_check
    _
  $region43: #{resnet18_autoencoder_forward.8} parent=0 // pred_check_branch
    %1162 = sbr.rel (0) target = $region45
  $region44: #{resnet18_autoencoder_forward.8} parent=0 // pred_region
    _
  $region45: #{resnet18_autoencoder_forward.8} parent=0 // pred_fallthru
    _
  // Predicated region
  $region46: #{resnet18_autoencoder_forward.8} parent=0 // pred_check
    _
  $region47: #{resnet18_autoencoder_forward.8} parent=0 // pred_check_branch
    %1164 = sbr.rel (0) target = $region49
  $region48: #{resnet18_autoencoder_forward.8} parent=0 // pred_region
    _
  $region49: #{resnet18_autoencoder_forward.8} parent=0 // pred_fallthru
    _

// kernel: resnet18_autoencoder_forward.9
$region0: #{resnet18_autoencoder_forward.9}
  #allocation0 [shape = 'u32[]', space=smem, size = 0x4, offset = 0x4, fixed_abs, tag = 'smem constant byte address 0x4 - core index']
  #allocation1 [shape = 'u32[144,128]{1,0:T(1,128)}', space=vmem, size = 0x12000, scoped, tag = 'internal scratch']
  %s0 = inlined_call_operand.vmem [shape: bf16[2,64,256], index: 0, kind: input, shape index: {}]
  %s1 = inlined_call_operand.vmem [shape: bf16[96,64], index: 1, kind: input, shape index: {}]
  %s2 = inlined_call_operand.vmem [shape: f32[96,1], index: 2, kind: input, shape index: {}]
  %s3 = inlined_call_operand.vmem [shape: f32[96,1], index: 3, kind: input, shape index: {}]
  %s4 = inlined_call_operand.vmem [shape: bf16[128,96], index: 4, kind: input, shape index: {}]
  %s5 = inlined_call_operand.vmem [shape: f32[128,1], index: 5, kind: input, shape index: {}]
  %s6 = inlined_call_operand.vmem [shape: f32[2,128,256], index: 6, kind: output, shape index: {}]
  %s7 = sld [smem:[#allocation0]]
  $region34: #{resnet18_autoencoder_forward.9} parent=0
    _
  %s9 = ssub.s32 1, %s7
  %s10 = scalar_select 0, %s9, %s7
  // Predicated region
  $region2: #{resnet18_autoencoder_forward.9} parent=0 // pred_check
    _
  $region3: #{resnet18_autoencoder_forward.9} parent=0 // pred_check_branch
    %12 = sbr.rel (0) target = $region5
  $region4: #{resnet18_autoencoder_forward.9} parent=0 // pred_region
    %s13 = sadd.s32 0, 0
    %s14 = smul.u32 2, %s13
    %p15 = scmp.lt.s32.totalorder %s14, 1
    %s16 = scalar_select %p15, %s14, 1
    %s17 = smul.addr %s16, 4
    %s18 = scalar_lea.vmem %s0, %s17
    %s19 = sadd.s32 0, 0
    %s20 = smul.u32 2, %s19
  $region5: #{resnet18_autoencoder_forward.9} parent=0 // pred_fallthru
    _
  // Predicated region
  $region6: #{resnet18_autoencoder_forward.9} parent=0 // pred_check
    _
  $region7: #{resnet18_autoencoder_forward.9} parent=0 // pred_check_branch
    %22 = sbr.rel (0) target = $region9
  $region8: #{resnet18_autoencoder_forward.9} parent=0 // pred_region
    _
  $region9: #{resnet18_autoencoder_forward.9} parent=0 // pred_fallthru
    _
  // Predicated region
  $region10: #{resnet18_autoencoder_forward.9} parent=0 // pred_check
    _
  $region11: #{resnet18_autoencoder_forward.9} parent=0 // pred_check_branch
    %24 = sbr.rel (0) target = $region13
  $region12: #{resnet18_autoencoder_forward.9} parent=0 // pred_region
    _
  $region13: #{resnet18_autoencoder_forward.9} parent=0 // pred_fallthru
    _
  // Predicated region
  $region14: #{resnet18_autoencoder_forward.9} parent=0 // pred_check
    _
  $region15: #{resnet18_autoencoder_forward.9} parent=0 // pred_check_branch
    %26 = sbr.rel (0) target = $region17
  $region16: #{resnet18_autoencoder_forward.9} parent=0 // pred_region
    _
  $region17: #{resnet18_autoencoder_forward.9} parent=0 // pred_fallthru
    _
  // Predicated region
  $region18: #{resnet18_autoencoder_forward.9} parent=0 // pred_check
    _
  $region19: #{resnet18_autoencoder_forward.9} parent=0 // pred_check_branch
    %28 = sbr.rel (0) target = $region21
  $region20: #{resnet18_autoencoder_forward.9} parent=0 // pred_region
    _
  $region21: #{resnet18_autoencoder_forward.9} parent=0 // pred_fallthru
    _
  // Predicated region
  $region22: #{resnet18_autoencoder_forward.9} parent=0 // pred_check
    _
  $region23: #{resnet18_autoencoder_forward.9} parent=0 // pred_check_branch
    %30 = sbr.rel (0) target = $region25
  $region24: #{resnet18_autoencoder_forward.9} parent=0 // pred_region
    _
  $region25: #{resnet18_autoencoder_forward.9} parent=0 // pred_fallthru
    _
  %s31 = sadd.s32 0, 0
  %s32 = smul.u32 2, %s31
  %p33 = scmp.lt.s32.totalorder %s32, 1
  %s34 = scalar_select %p33, %s32, 1
  %s35 = smul.addr %s34, 4
  %s36 = scalar_lea.vmem %s0, %s35
  %s37 = sadd.s32 0, 0
  %s38 = smul.u32 2, %s37
  %p39 = scmp.lt.s32.totalorder %s38, 1
  %s40 = scalar_select %p39, %s38, 1
  %s41 = smul.addr %s40, 8
  %s42 = scalar_lea.vmem %s6, %s41
  %s43 = sadd.s32 0, 0
  %s44 = smul.u32 2, %s43
  %p45 = scmp.lt.s32.totalorder %s44, 1
  %s46 = scalar_select %p45, %s44, 1
  %s47 = smul.addr %s46, 4
  %s48 = scalar_lea.vmem %s0, %s47
  %s49 = sadd.s32 0, 0
  %s50 = smul.u32 2, %s49
  %s51 = sadd.s32 0, 0
  %s52 = smul.u32 2, %s51
  %p53 = scmp.lt.s32.totalorder %s52, 1
  %s54 = scalar_select %p53, %s52, 1
  %s55 = smul.addr %s54, 8
  %s56 = scalar_lea.vmem %s6, %s55
  %s57 = sadd.s32 0, 0
  %s58 = smul.u32 2, %s57
  %v60 = vld [vmem:[%s1] sm:$0xf]
  %v61 = vld [vmem:[%s1 + $0x4] sm:$0xf]
  %v62 = vld [vmem:[%s1 + $0x8] sm:$0xf]
  %v63 = vld [vmem:[%s1 + $0xc] sm:$0xf]
  %v64 = vld [vmem:[%s1 + $0x10] sm:$0xf]
  %v65 = vld [vmem:[%s1 + $0x14] sm:$0xf]
  %v66 = vld [vmem:[%s1 + $0x18] sm:$0xf]
  %v67 = vld [vmem:[%s1 + $0x1c] sm:$0xf]
  %v68 = vld [vmem:[%s1 + $0x20] sm:$0xf]
  %v69 = vld [vmem:[%s1 + $0x24] sm:$0xf]
  %v70 = vld [vmem:[%s1 + $0x28] sm:$0xf]
  %v71 = vld [vmem:[%s1 + $0x2c] sm:$0xf]
  %v72 = vld [vmem:[%s4] sm:$0xf]
  %v73 = vld [vmem:[%s4 + $0x4] sm:$0xf]
  %v74 = vld [vmem:[%s4 + $0x8] sm:$0xf]
  %v75 = vld [vmem:[%s4 + $0xc] sm:$0xf]
  %v76 = vld [vmem:[%s4 + $0x10] sm:$0xf]
  %v77 = vld [vmem:[%s4 + $0x14] sm:$0xf]
  %v78 = vld [vmem:[%s4 + $0x18] sm:$0xf]
  %v79 = vld [vmem:[%s4 + $0x1c] sm:$0xf]
  %v80 = vld [vmem:[%s4 + $0x20] sm:$0xf]
  %v81 = vld [vmem:[%s4 + $0x24] sm:$0xf]
  %v82 = vld [vmem:[%s4 + $0x28] sm:$0xf]
  %v83 = vld [vmem:[%s4 + $0x2c] sm:$0xf]
  %v84 = vld [vmem:[%s4 + $0x30] sm:$0xf]
  %v85 = vld [vmem:[%s4 + $0x34] sm:$0xf]
  %v86 = vld [vmem:[%s4 + $0x38] sm:$0xf]
  %v87 = vld [vmem:[%s4 + $0x3c] sm:$0xf]
  %v88 = vld [vmem:[%s2] sm:$0xff]
  %v89 = vld [vmem:[%s2 + $0x8] sm:$0xff]
  %v90 = vld [vmem:[%s2 + $0x10] sm:$0xff]
  %v91 = vld [vmem:[%s2 + $0x18] sm:$0xff]
  %v92 = vld [vmem:[%s2 + $0x20] sm:$0xff]
  %v93 = vld [vmem:[%s2 + $0x28] sm:$0xff]
  %v94 = vld [vmem:[%s2 + $0x30] sm:$0xff]
  %v95 = vld [vmem:[%s2 + $0x38] sm:$0xff]
  %v96 = vld [vmem:[%s2 + $0x40] sm:$0xff]
  %v97 = vld [vmem:[%s2 + $0x48] sm:$0xff]
  %v98 = vld [vmem:[%s2 + $0x50] sm:$0xff]
  %v99 = vld [vmem:[%s2 + $0x58] sm:$0xff]
  %v100 = vld [vmem:[%s3] sm:$0xff]
  %v101 = vld [vmem:[%s3 + $0x8] sm:$0xff]
  %v102 = vld [vmem:[%s3 + $0x10] sm:$0xff]
  %v103 = vld [vmem:[%s3 + $0x18] sm:$0xff]
  %v104 = vld [vmem:[%s3 + $0x20] sm:$0xff]
  %v105 = vld [vmem:[%s3 + $0x28] sm:$0xff]
  %v106 = vld [vmem:[%s3 + $0x30] sm:$0xff]
  %v107 = vld [vmem:[%s3 + $0x38] sm:$0xff]
  %v108 = vld [vmem:[%s3 + $0x40] sm:$0xff]
  %v109 = vld [vmem:[%s3 + $0x48] sm:$0xff]
  %v110 = vld [vmem:[%s3 + $0x50] sm:$0xff]
  %v111 = vld [vmem:[%s3 + $0x58] sm:$0xff]
  %v112 = vld [vmem:[%s5] sm:$0xff]
  %v113 = vld [vmem:[%s5 + $0x8] sm:$0xff]
  %v114 = vld [vmem:[%s5 + $0x10] sm:$0xff]
  %v115 = vld [vmem:[%s5 + $0x18] sm:$0xff]
  %v116 = vld [vmem:[%s5 + $0x20] sm:$0xff]
  %v117 = vld [vmem:[%s5 + $0x28] sm:$0xff]
  %v118 = vld [vmem:[%s5 + $0x30] sm:$0xff]
  %v119 = vld [vmem:[%s5 + $0x38] sm:$0xff]
  %v120 = vld [vmem:[%s5 + $0x40] sm:$0xff]
  %v121 = vld [vmem:[%s5 + $0x48] sm:$0xff]
  %v122 = vld [vmem:[%s5 + $0x50] sm:$0xff]
  %v123 = vld [vmem:[%s5 + $0x58] sm:$0xff]
  %v124 = vld [vmem:[%s5 + $0x60] sm:$0xff]
  %v125 = vld [vmem:[%s5 + $0x68] sm:$0xff]
  %v126 = vld [vmem:[%s5 + $0x70] sm:$0xff]
  %v127 = vld [vmem:[%s5 + $0x78] sm:$0xff]
  %v128 = vld [vmem:[%s48] sm:$0xff]
  %v129 = vld [vmem:[%s48 + $0x8] sm:$0xff]
  %v130 = vld [vmem:[%s48 + $0x10] sm:$0xff]
  %v131 = vld [vmem:[%s48 + $0x18] sm:$0xff]
  %v132 = vld [vmem:[%s48 + $0x20] sm:$0xff]
  %v133 = vld [vmem:[%s48 + $0x28] sm:$0xff]
  %v134 = vld [vmem:[%s48 + $0x30] sm:$0xff]
  %v135 = vld [vmem:[%s48 + $0x38] sm:$0xff]
  %v148 = vunpack.c.l.b16 %v60
  %v149 = vunpack.c.l.b16 %v61
  %v150 = vunpack.c.l.b16 %v62
  %v151 = vunpack.c.l.b16 %v63
  %v152 = vunpack.c.l.b16 %v64
  %v153 = vunpack.c.l.b16 %v65
  %v154 = vunpack.c.l.b16 %v66
  %v155 = vunpack.c.l.b16 %v67
  %v156 = vunpack.c.l.b16 %v68
  %v157 = vunpack.c.l.b16 %v69
  %v158 = vunpack.c.l.b16 %v70
  %v159 = vunpack.c.l.b16 %v71
  %v160 = vpack.c.b16 %v149, %v148
  %v161 = vpack.c.b16 %v151, %v150
  %v162 = vpack.c.b16 %v153, %v152
  %v163 = vpack.c.b16 %v155, %v154
  %v164 = vpack.c.b16 %v157, %v156
  %v165 = vpack.c.b16 %v159, %v158
  %v174 = vunpack.c.l.b16 %v128
  %v175 = vunpack.c.h.b16 %v128
  %v176 = vunpack.c.l.b16 %v129
  %v177 = vunpack.c.h.b16 %v129
  %v178 = vunpack.c.l.b16 %v130
  %v179 = vunpack.c.h.b16 %v130
  %v180 = vunpack.c.l.b16 %v131
  %v181 = vunpack.c.h.b16 %v131
  %v182 = vunpack.c.l.b16 %v132
  %v183 = vunpack.c.h.b16 %v132
  %v184 = vunpack.c.l.b16 %v133
  %v185 = vunpack.c.h.b16 %v133
  %v186 = vunpack.c.l.b16 %v134
  %v187 = vunpack.c.h.b16 %v134
  %v188 = vunpack.c.l.b16 %v135
  %v189 = vunpack.c.h.b16 %v135
  %v190 = vpack.c.b16 %v176, %v174
  %v191 = vpack.c.b16 %v177, %v175
  %v192 = vpack.c.b16 %v180, %v178
  %v193 = vpack.c.b16 %v181, %v179
  %v194 = vpack.c.b16 %v184, %v182
  %v195 = vpack.c.b16 %v185, %v183
  %v196 = vpack.c.b16 %v188, %v186
  %v197 = vpack.c.b16 %v189, %v187
  %vm206 = vcmask 523264
  %v208 = vsel %vm206, %v160, 0
  %v211 = vsel %vm206, %v161, 0
  %v214 = vsel %vm206, %v162, 0
  %v217 = vsel %vm206, %v163, 0
  %v220 = vsel %vm206, %v164, 0
  %v223 = vsel %vm206, %v165, 0
  %225 = vmatprep.subr.bf16.mxu0 %v191
  %226 = vmatpush1.bf16.msra.mxu0 %v190
  %227 = vmatprep.subr.bf16.mxu0 %v193
  %228 = vmatpush1.bf16.msra.mxu0 %v192
  %229 = vmatprep.subr.bf16.mxu0 %v195
  %230 = vmatpush1.bf16.msra.mxu0 %v194
  %231 = vmatprep.subr.bf16.mxu0 %v197
  %232 = vmatpush1.bf16.msra.mxu0 %v196
  %233 = vmatprep.subr.bf16.mxu0 0
  %234 = vmatpush1.bf16.msra.mxu0 0
  %235 = vmatprep.subr.bf16.mxu0 0
  %236 = vmatpush1.bf16.msra.mxu0 0
  %237 = vmatprep.subr.bf16.mxu0 0
  %238 = vmatpush1.bf16.msra.mxu0 0
  %239 = vmatprep.subr.bf16.mxu0 0
  %240 = vmatpush1.bf16.msra.mxu0 0
  %241 = vmatprep.subr.bf16.mxu0 0
  %242 = vmatpush1.bf16.msra.mxu0 0
  %243 = vmatprep.subr.bf16.mxu0 0
  %244 = vmatpush1.bf16.msra.mxu0 0
  %245 = vmatprep.subr.bf16.mxu0 0
  %246 = vmatpush1.bf16.msra.mxu0 0
  %247 = vmatprep.subr.bf16.mxu0 0
  %248 = vmatpush1.bf16.msra.mxu0 0
  %249 = vmatprep.subr.bf16.mxu0 0
  %250 = vmatpush1.bf16.msra.mxu0 0
  %251 = vmatprep.subr.bf16.mxu0 0
  %252 = vmatpush1.bf16.msra.mxu0 0
  %253 = vmatprep.subr.bf16.mxu0 0
  %254 = vmatpush1.bf16.msra.mxu0 0
  %255 = vmatprep.subr.bf16.mxu0 0
  %256 = vmatpush1.bf16.msra.mxu0 0
  %257 = vmatprep.mubr.bf16.mxu0 0
  %258 = vmatmul.mubr.bf16.gmra.mrb[0].mxu0 %v208
  %v259 = vpop.f32.mrb[0].mxu0
  %v260 = vadd.f32 0.0, %v259
  %v261 = vpop.f32.mrb[0].mxu0
  %v262 = vadd.f32 0.0, %v261
  %v263 = vpop.f32.mrb[0].mxu0
  %v264 = vadd.f32 0.0, %v263
  %v265 = vpop.f32.mrb[0].mxu0
  %v266 = vadd.f32 0.0, %v265
  %267 = vmatprep.mubr.bf16.mxu0 0
  %268 = vmatmul.mubr.bf16.gmra.mrb[0].mxu0 %v211
  %v269 = vpop.f32.mrb[0].mxu0
  %v270 = vadd.f32 0.0, %v269
  %v271 = vpop.f32.mrb[0].mxu0
  %v272 = vadd.f32 0.0, %v271
  %v273 = vpop.f32.mrb[0].mxu0
  %v274 = vadd.f32 0.0, %v273
  %v275 = vpop.f32.mrb[0].mxu0
  %v276 = vadd.f32 0.0, %v275
  %277 = vmatprep.mubr.bf16.mxu0 0
  %278 = vmatmul.mubr.bf16.gmra.mrb[0].mxu0 %v214
  %v279 = vpop.f32.mrb[0].mxu0
  %v280 = vadd.f32 0.0, %v279
  %v281 = vpop.f32.mrb[0].mxu0
  %v282 = vadd.f32 0.0, %v281
  %v283 = vpop.f32.mrb[0].mxu0
  %v284 = vadd.f32 0.0, %v283
  %v285 = vpop.f32.mrb[0].mxu0
  %v286 = vadd.f32 0.0, %v285
  %287 = vmatprep.mubr.bf16.mxu0 0
  %288 = vmatmul.mubr.bf16.gmra.mrb[0].mxu0 %v217
  %v289 = vpop.f32.mrb[0].mxu0
  %v290 = vadd.f32 0.0, %v289
  %v291 = vpop.f32.mrb[0].mxu0
  %v292 = vadd.f32 0.0, %v291
  %v293 = vpop.f32.mrb[0].mxu0
  %v294 = vadd.f32 0.0, %v293
  %v295 = vpop.f32.mrb[0].mxu0
  %v296 = vadd.f32 0.0, %v295
  %297 = vmatprep.mubr.bf16.mxu0 0
  %298 = vmatmul.mubr.bf16.gmra.mrb[0].mxu0 %v220
  %v299 = vpop.f32.mrb[0].mxu0
  %v300 = vadd.f32 0.0, %v299
  %v301 = vpop.f32.mrb[0].mxu0
  %v302 = vadd.f32 0.0, %v301
  %v303 = vpop.f32.mrb[0].mxu0
  %v304 = vadd.f32 0.0, %v303
  %v305 = vpop.f32.mrb[0].mxu0
  %v306 = vadd.f32 0.0, %v305
  %307 = vmatprep.mubr.bf16.mxu0 0
  %308 = vmatmul.mubr.bf16.gmra.mrb[0].mxu0 %v223
  %v309 = vpop.f32.mrb[0].mxu0
  %v310 = vadd.f32 0.0, %v309
  %v311 = vpop.f32.mrb[0].mxu0
  %v312 = vadd.f32 0.0, %v311
  %v313 = vpop.f32.mrb[0].mxu0
  %v314 = vadd.f32 0.0, %v313
  %v315 = vpop.f32.mrb[0].mxu0
  %v316 = vadd.f32 0.0, %v315
  %317 = vdwg.mxu0
  %319 = vset.pattern.permute.xlu0 0
  %320 = vperm.xlu0 %319, %v88
  %v321 = vpop.permute.xlu0 %320
  %324 = vset.pattern.permute.xlu0 0
  %325 = vperm.xlu0 %324, %v89
  %v326 = vpop.permute.xlu0 %325
  %329 = vset.pattern.permute.xlu0 0
  %330 = vperm.xlu0 %329, %v90
  %v331 = vpop.permute.xlu0 %330
  %334 = vset.pattern.permute.xlu0 0
  %335 = vperm.xlu0 %334, %v91
  %v336 = vpop.permute.xlu0 %335
  %339 = vset.pattern.permute.xlu0 0
  %340 = vperm.xlu0 %339, %v92
  %v341 = vpop.permute.xlu0 %340
  %344 = vset.pattern.permute.xlu0 0
  %345 = vperm.xlu0 %344, %v93
  %v346 = vpop.permute.xlu0 %345
  %349 = vset.pattern.permute.xlu0 0
  %350 = vperm.xlu0 %349, %v94
  %v351 = vpop.permute.xlu0 %350
  %354 = vset.pattern.permute.xlu0 0
  %355 = vperm.xlu0 %354, %v95
  %v356 = vpop.permute.xlu0 %355
  %359 = vset.pattern.permute.xlu0 0
  %360 = vperm.xlu0 %359, %v96
  %v361 = vpop.permute.xlu0 %360
  %364 = vset.pattern.permute.xlu0 0
  %365 = vperm.xlu0 %364, %v97
  %v366 = vpop.permute.xlu0 %365
  %369 = vset.pattern.permute.xlu0 0
  %370 = vperm.xlu0 %369, %v98
  %v371 = vpop.permute.xlu0 %370
  %374 = vset.pattern.permute.xlu0 0
  %375 = vperm.xlu0 %374, %v99
  %v376 = vpop.permute.xlu0 %375
  %v378 = vmul.f32 %v260, %v321
  %v379 = vmul.f32 %v262, %v321
  %v380 = vmul.f32 %v264, %v326
  %v381 = vmul.f32 %v266, %v326
  %v382 = vmul.f32 %v270, %v331
  %v383 = vmul.f32 %v272, %v331
  %v384 = vmul.f32 %v274, %v336
  %v385 = vmul.f32 %v276, %v336
  %v386 = vmul.f32 %v280, %v341
  %v387 = vmul.f32 %v282, %v341
  %v388 = vmul.f32 %v284, %v346
  %v389 = vmul.f32 %v286, %v346
  %v390 = vmul.f32 %v290, %v351
  %v391 = vmul.f32 %v292, %v351
  %v392 = vmul.f32 %v294, %v356
  %v393 = vmul.f32 %v296, %v356
  %v394 = vmul.f32 %v300, %v361
  %v395 = vmul.f32 %v302, %v361
  %v396 = vmul.f32 %v304, %v366
  %v397 = vmul.f32 %v306, %v366
  %v398 = vmul.f32 %v310, %v371
  %v399 = vmul.f32 %v312, %v371
  %v400 = vmul.f32 %v314, %v376
  %v401 = vmul.f32 %v316, %v376
  %403 = vset.pattern.permute.xlu0 0
  %404 = vperm.xlu0 %403, %v100
  %v405 = vpop.permute.xlu0 %404
  %408 = vset.pattern.permute.xlu0 0
  %409 = vperm.xlu0 %408, %v101
  %v410 = vpop.permute.xlu0 %409
  %413 = vset.pattern.permute.xlu0 0
  %414 = vperm.xlu0 %413, %v102
  %v415 = vpop.permute.xlu0 %414
  %418 = vset.pattern.permute.xlu0 0
  %419 = vperm.xlu0 %418, %v103
  %v420 = vpop.permute.xlu0 %419
  %423 = vset.pattern.permute.xlu0 0
  %424 = vperm.xlu0 %423, %v104
  %v425 = vpop.permute.xlu0 %424
  %428 = vset.pattern.permute.xlu0 0
  %429 = vperm.xlu0 %428, %v105
  %v430 = vpop.permute.xlu0 %429
  %433 = vset.pattern.permute.xlu0 0
  %434 = vperm.xlu0 %433, %v106
  %v435 = vpop.permute.xlu0 %434
  %438 = vset.pattern.permute.xlu0 0
  %439 = vperm.xlu0 %438, %v107
  %v440 = vpop.permute.xlu0 %439
  %443 = vset.pattern.permute.xlu0 0
  %444 = vperm.xlu0 %443, %v108
  %v445 = vpop.permute.xlu0 %444
  %448 = vset.pattern.permute.xlu0 0
  %449 = vperm.xlu0 %448, %v109
  %v450 = vpop.permute.xlu0 %449
  %453 = vset.pattern.permute.xlu0 0
  %454 = vperm.xlu0 %453, %v110
  %v455 = vpop.permute.xlu0 %454
  %458 = vset.pattern.permute.xlu0 0
  %459 = vperm.xlu0 %458, %v111
  %v460 = vpop.permute.xlu0 %459
  %v462 = vadd.f32 %v378, %v405
  %v463 = vadd.f32 %v379, %v405
  %v464 = vadd.f32 %v380, %v410
  %v465 = vadd.f32 %v381, %v410
  %v466 = vadd.f32 %v382, %v415
  %v467 = vadd.f32 %v383, %v415
  %v468 = vadd.f32 %v384, %v420
  %v469 = vadd.f32 %v385, %v420
  %v470 = vadd.f32 %v386, %v425
  %v471 = vadd.f32 %v387, %v425
  %v472 = vadd.f32 %v388, %v430
  %v473 = vadd.f32 %v389, %v430
  %v474 = vadd.f32 %v390, %v435
  %v475 = vadd.f32 %v391, %v435
  %v476 = vadd.f32 %v392, %v440
  %v477 = vadd.f32 %v393, %v440
  %v478 = vadd.f32 %v394, %v445
  %v479 = vadd.f32 %v395, %v445
  %v480 = vadd.f32 %v396, %v450
  %v481 = vadd.f32 %v397, %v450
  %v482 = vadd.f32 %v398, %v455
  %v483 = vadd.f32 %v399, %v455
  %v484 = vadd.f32 %v400, %v460
  %v485 = vadd.f32 %v401, %v460
  %v486 = vmax.f32 %v462, 0.0
  %v487 = vmax.f32 %v463, 0.0
  %v488 = vmax.f32 %v464, 0.0
  %v489 = vmax.f32 %v465, 0.0
  %v490 = vmax.f32 %v466, 0.0
  %v491 = vmax.f32 %v467, 0.0
  %v492 = vmax.f32 %v468, 0.0
  %v493 = vmax.f32 %v469, 0.0
  %v494 = vmax.f32 %v470, 0.0
  %v495 = vmax.f32 %v471, 0.0
  %v496 = vmax.f32 %v472, 0.0
  %v497 = vmax.f32 %v473, 0.0
  %v498 = vmax.f32 %v474, 0.0
  %v499 = vmax.f32 %v475, 0.0
  %v500 = vmax.f32 %v476, 0.0
  %v501 = vmax.f32 %v477, 0.0
  %v502 = vmax.f32 %v478, 0.0
  %v503 = vmax.f32 %v479, 0.0
  %v504 = vmax.f32 %v480, 0.0
  %v505 = vmax.f32 %v481, 0.0
  %v506 = vmax.f32 %v482, 0.0
  %v507 = vmax.f32 %v483, 0.0
  %v508 = vmax.f32 %v484, 0.0
  %v509 = vmax.f32 %v485, 0.0
  %v510 = vpack.c.bf16 %v488, %v486
  %v511 = vpack.c.bf16 %v489, %v487
  %v512 = vpack.c.bf16 %v492, %v490
  %v513 = vpack.c.bf16 %v493, %v491
  %v514 = vpack.c.bf16 %v496, %v494
  %v515 = vpack.c.bf16 %v497, %v495
  %v516 = vpack.c.bf16 %v500, %v498
  %v517 = vpack.c.bf16 %v501, %v499
  %v518 = vpack.c.bf16 %v504, %v502
  %v519 = vpack.c.bf16 %v505, %v503
  %v520 = vpack.c.bf16 %v508, %v506
  %v521 = vpack.c.bf16 %v509, %v507
  %523 = vset.pattern.permute.xlu0 0
  %524 = vperm.xlu0 %523, %v112
  %v525 = vpop.permute.xlu0 %524
  %528 = vset.pattern.permute.xlu0 0
  %529 = vperm.xlu0 %528, %v113
  %v530 = vpop.permute.xlu0 %529
  %533 = vset.pattern.permute.xlu0 0
  %534 = vperm.xlu0 %533, %v114
  %v535 = vpop.permute.xlu0 %534
  %538 = vset.pattern.permute.xlu0 0
  %539 = vperm.xlu0 %538, %v115
  %v540 = vpop.permute.xlu0 %539
  %543 = vset.pattern.permute.xlu0 0
  %544 = vperm.xlu0 %543, %v116
  %v545 = vpop.permute.xlu0 %544
  %548 = vset.pattern.permute.xlu0 0
  %549 = vperm.xlu0 %548, %v117
  %v550 = vpop.permute.xlu0 %549
  %553 = vset.pattern.permute.xlu0 0
  %554 = vperm.xlu0 %553, %v118
  %v555 = vpop.permute.xlu0 %554
  %558 = vset.pattern.permute.xlu0 0
  %559 = vperm.xlu0 %558, %v119
  %v560 = vpop.permute.xlu0 %559
  %563 = vset.pattern.permute.xlu0 0
  %564 = vperm.xlu0 %563, %v120
  %v565 = vpop.permute.xlu0 %564
  %568 = vset.pattern.permute.xlu0 0
  %569 = vperm.xlu0 %568, %v121
  %v570 = vpop.permute.xlu0 %569
  %573 = vset.pattern.permute.xlu0 0
  %574 = vperm.xlu0 %573, %v122
  %v575 = vpop.permute.xlu0 %574
  %578 = vset.pattern.permute.xlu0 0
  %579 = vperm.xlu0 %578, %v123
  %v580 = vpop.permute.xlu0 %579
  %583 = vset.pattern.permute.xlu0 0
  %584 = vperm.xlu0 %583, %v124
  %v585 = vpop.permute.xlu0 %584
  %588 = vset.pattern.permute.xlu0 0
  %589 = vperm.xlu0 %588, %v125
  %v590 = vpop.permute.xlu0 %589
  %593 = vset.pattern.permute.xlu0 0
  %594 = vperm.xlu0 %593, %v126
  %v595 = vpop.permute.xlu0 %594
  %598 = vset.pattern.permute.xlu0 0
  %599 = vperm.xlu0 %598, %v127
  %v600 = vpop.permute.xlu0 %599
  %v618 = vunpack.c.l.b16 %v72
  %v619 = vunpack.c.l.b16 %v73
  %v620 = vunpack.c.l.b16 %v74
  %v621 = vunpack.c.l.b16 %v75
  %v622 = vunpack.c.l.b16 %v76
  %v623 = vunpack.c.l.b16 %v77
  %v624 = vunpack.c.l.b16 %v78
  %v625 = vunpack.c.l.b16 %v79
  %v626 = vunpack.c.l.b16 %v80
  %v627 = vunpack.c.l.b16 %v81
  %v628 = vunpack.c.l.b16 %v82
  %v629 = vunpack.c.l.b16 %v83
  %v630 = vunpack.c.l.b16 %v84
  %v631 = vunpack.c.l.b16 %v85
  %v632 = vunpack.c.l.b16 %v86
  %v633 = vunpack.c.l.b16 %v87
  %v634 = vpack.c.b16 %v619, %v618
  %v635 = vpack.c.b16 %v621, %v620
  %v636 = vpack.c.b16 %v623, %v622
  %v637 = vpack.c.b16 %v625, %v624
  %v638 = vpack.c.b16 %v627, %v626
  %v639 = vpack.c.b16 %v629, %v628
  %v640 = vpack.c.b16 %v631, %v630
  %v641 = vpack.c.b16 %v633, %v632
  %vm642 = vcmask 785408
  %v644 = vsel %vm642, %v634, 0
  %v647 = vsel %vm642, %v635, 0
  %v650 = vsel %vm642, %v636, 0
  %v653 = vsel %vm642, %v637, 0
  %v656 = vsel %vm642, %v638, 0
  %v659 = vsel %vm642, %v639, 0
  %v662 = vsel %vm642, %v640, 0
  %v665 = vsel %vm642, %v641, 0
  %667 = vmatprep.subr.bf16.mxu0 %v511
  %668 = vmatpush1.bf16.msra.mxu0 %v510
  %669 = vmatprep.subr.bf16.mxu0 %v513
  %670 = vmatpush1.bf16.msra.mxu0 %v512
  %671 = vmatprep.subr.bf16.mxu0 %v515
  %672 = vmatpush1.bf16.msra.mxu0 %v514
  %673 = vmatprep.subr.bf16.mxu0 %v517
  %674 = vmatpush1.bf16.msra.mxu0 %v516
  %675 = vmatprep.subr.bf16.mxu0 %v519
  %676 = vmatpush1.bf16.msra.mxu0 %v518
  %677 = vmatprep.subr.bf16.mxu0 %v521
  %678 = vmatpush1.bf16.msra.mxu0 %v520
  %679 = vmatprep.subr.bf16.mxu0 0
  %680 = vmatpush1.bf16.msra.mxu0 0
  %681 = vmatprep.subr.bf16.mxu0 0
  %682 = vmatpush1.bf16.msra.mxu0 0
  %683 = vmatprep.subr.bf16.mxu0 0
  %684 = vmatpush1.bf16.msra.mxu0 0
  %685 = vmatprep.subr.bf16.mxu0 0
  %686 = vmatpush1.bf16.msra.mxu0 0
  %687 = vmatprep.subr.bf16.mxu0 0
  %688 = vmatpush1.bf16.msra.mxu0 0
  %689 = vmatprep.subr.bf16.mxu0 0
  %690 = vmatpush1.bf16.msra.mxu0 0
  %691 = vmatprep.subr.bf16.mxu0 0
  %692 = vmatpush1.bf16.msra.mxu0 0
  %693 = vmatprep.subr.bf16.mxu0 0
  %694 = vmatpush1.bf16.msra.mxu0 0
  %695 = vmatprep.subr.bf16.mxu0 0
  %696 = vmatpush1.bf16.msra.mxu0 0
  %697 = vmatprep.subr.bf16.mxu0 0
  %698 = vmatpush1.bf16.msra.mxu0 0
  %699 = vmatprep.mubr.bf16.mxu0 0
  %700 = vmatmul.mubr.bf16.gmra.mrb[0].mxu0 %v644
  %v701 = vpop.f32.mrb[0].mxu0
  %v702 = vadd.f32 %v525, %v701
  %v703 = vpop.f32.mrb[0].mxu0
  %v704 = vadd.f32 %v525, %v703
  %v705 = vpop.f32.mrb[0].mxu0
  %v706 = vadd.f32 %v530, %v705
  %v707 = vpop.f32.mrb[0].mxu0
  %v708 = vadd.f32 %v530, %v707
  %709 = vmatprep.mubr.bf16.mxu0 0
  %710 = vmatmul.mubr.bf16.gmra.mrb[0].mxu0 %v647
  %v711 = vpop.f32.mrb[0].mxu0
  %v712 = vadd.f32 %v535, %v711
  %v713 = vpop.f32.mrb[0].mxu0
  %v714 = vadd.f32 %v535, %v713
  %v715 = vpop.f32.mrb[0].mxu0
  %v716 = vadd.f32 %v540, %v715
  %v717 = vpop.f32.mrb[0].mxu0
  %v718 = vadd.f32 %v540, %v717
  %719 = vmatprep.mubr.bf16.mxu0 0
  %720 = vmatmul.mubr.bf16.gmra.mrb[0].mxu0 %v650
  %v721 = vpop.f32.mrb[0].mxu0
  %v722 = vadd.f32 %v545, %v721
  %v723 = vpop.f32.mrb[0].mxu0
  %v724 = vadd.f32 %v545, %v723
  %v725 = vpop.f32.mrb[0].mxu0
  %v726 = vadd.f32 %v550, %v725
  %v727 = vpop.f32.mrb[0].mxu0
  %v728 = vadd.f32 %v550, %v727
  %729 = vmatprep.mubr.bf16.mxu0 0
  %730 = vmatmul.mubr.bf16.gmra.mrb[0].mxu0 %v653
  %v731 = vpop.f32.mrb[0].mxu0
  %v732 = vadd.f32 %v555, %v731
  %v733 = vpop.f32.mrb[0].mxu0
  %v734 = vadd.f32 %v555, %v733
  %v735 = vpop.f32.mrb[0].mxu0
  %v736 = vadd.f32 %v560, %v735
  %v737 = vpop.f32.mrb[0].mxu0
  %v738 = vadd.f32 %v560, %v737
  %739 = vmatprep.mubr.bf16.mxu0 0
  %740 = vmatmul.mubr.bf16.gmra.mrb[0].mxu0 %v656
  %v741 = vpop.f32.mrb[0].mxu0
  %v742 = vadd.f32 %v565, %v741
  %v743 = vpop.f32.mrb[0].mxu0
  %v744 = vadd.f32 %v565, %v743
  %v745 = vpop.f32.mrb[0].mxu0
  %v746 = vadd.f32 %v570, %v745
  %v747 = vpop.f32.mrb[0].mxu0
  %v748 = vadd.f32 %v570, %v747
  %749 = vmatprep.mubr.bf16.mxu0 0
  %750 = vmatmul.mubr.bf16.gmra.mrb[0].mxu0 %v659
  %v751 = vpop.f32.mrb[0].mxu0
  %v752 = vadd.f32 %v575, %v751
  %v753 = vpop.f32.mrb[0].mxu0
  %v754 = vadd.f32 %v575, %v753
  %v755 = vpop.f32.mrb[0].mxu0
  %v756 = vadd.f32 %v580, %v755
  %v757 = vpop.f32.mrb[0].mxu0
  %v758 = vadd.f32 %v580, %v757
  %759 = vmatprep.mubr.bf16.mxu0 0
  %760 = vmatmul.mubr.bf16.gmra.mrb[0].mxu0 %v662
  %v761 = vpop.f32.mrb[0].mxu0
  %v762 = vadd.f32 %v585, %v761
  %v763 = vpop.f32.mrb[0].mxu0
  %v764 = vadd.f32 %v585, %v763
  %v765 = vpop.f32.mrb[0].mxu0
  %v766 = vadd.f32 %v590, %v765
  %v767 = vpop.f32.mrb[0].mxu0
  %v768 = vadd.f32 %v590, %v767
  %769 = vmatprep.mubr.bf16.mxu0 0
  %770 = vmatmul.mubr.bf16.gmra.mrb[0].mxu0 %v665
  %v771 = vpop.f32.mrb[0].mxu0
  %v772 = vadd.f32 %v595, %v771
  %v773 = vpop.f32.mrb[0].mxu0
  %v774 = vadd.f32 %v595, %v773
  %v775 = vpop.f32.mrb[0].mxu0
  %v776 = vadd.f32 %v600, %v775
  %v777 = vpop.f32.mrb[0].mxu0
  %v778 = vadd.f32 %v600, %v777
  %779 = vdwg.mxu0
  %780 = vst [vmem:[%s56] sm:$0xff] %v702
  %781 = vst [vmem:[%s56 + $0x8] sm:$0xff] %v704
  %782 = vst [vmem:[%s56 + $0x10] sm:$0xff] %v706
  %783 = vst [vmem:[%s56 + $0x18] sm:$0xff] %v708
  %784 = vst [vmem:[%s56 + $0x20] sm:$0xff] %v712
  %785 = vst [vmem:[%s56 + $0x28] sm:$0xff] %v714
  %786 = vst [vmem:[%s56 + $0x30] sm:$0xff] %v716
  %787 = vst [vmem:[%s56 + $0x38] sm:$0xff] %v718
  %788 = vst [vmem:[%s56 + $0x40] sm:$0xff] %v722
  %789 = vst [vmem:[%s56 + $0x48] sm:$0xff] %v724
  %790 = vst [vmem:[%s56 + $0x50] sm:$0xff] %v726
  %791 = vst [vmem:[%s56 + $0x58] sm:$0xff] %v728
  %792 = vst [vmem:[%s56 + $0x60] sm:$0xff] %v732
  %793 = vst [vmem:[%s56 + $0x68] sm:$0xff] %v734
  %794 = vst [vmem:[%s56 + $0x70] sm:$0xff] %v736
  %795 = vst [vmem:[%s56 + $0x78] sm:$0xff] %v738
  %796 = vst [vmem:[%s56 + $0x80] sm:$0xff] %v742
  %797 = vst [vmem:[%s56 + $0x88] sm:$0xff] %v744
  %798 = vst [vmem:[%s56 + $0x90] sm:$0xff] %v746
  %799 = vst [vmem:[%s56 + $0x98] sm:$0xff] %v748
  %800 = vst [vmem:[%s56 + $0xa0] sm:$0xff] %v752
  %801 = vst [vmem:[%s56 + $0xa8] sm:$0xff] %v754
  %802 = vst [vmem:[%s56 + $0xb0] sm:$0xff] %v756
  %803 = vst [vmem:[%s56 + $0xb8] sm:$0xff] %v758
  %804 = vst [vmem:[%s56 + $0xc0] sm:$0xff] %v762
  %805 = vst [vmem:[%s56 + $0xc8] sm:$0xff] %v764
  %806 = vst [vmem:[%s56 + $0xd0] sm:$0xff] %v766
  %807 = vst [vmem:[%s56 + $0xd8] sm:$0xff] %v768
  %808 = vst [vmem:[%s56 + $0xe0] sm:$0xff] %v772
  %809 = vst [vmem:[%s56 + $0xe8] sm:$0xff] %v774
  %810 = vst [vmem:[%s56 + $0xf0] sm:$0xff] %v776
  %811 = vst [vmem:[%s56 + $0xf8] sm:$0xff] %v778
  %s812 = scalar_lea.vmem %s48, 64
  %v813 = vld [vmem:[%s812] sm:$0xff]
  %v814 = vld [vmem:[%s812 + $0x8] sm:$0xff]
  %v815 = vld [vmem:[%s812 + $0x10] sm:$0xff]
  %v816 = vld [vmem:[%s812 + $0x18] sm:$0xff]
  %v817 = vld [vmem:[%s812 + $0x20] sm:$0xff]
  %v818 = vld [vmem:[%s812 + $0x28] sm:$0xff]
  %v819 = vld [vmem:[%s812 + $0x30] sm:$0xff]
  %v820 = vld [vmem:[%s812 + $0x38] sm:$0xff]
  %v829 = vunpack.c.l.b16 %v813
  %v830 = vunpack.c.h.b16 %v813
  %v831 = vunpack.c.l.b16 %v814
  %v832 = vunpack.c.h.b16 %v814
  %v833 = vunpack.c.l.b16 %v815
  %v834 = vunpack.c.h.b16 %v815
  %v835 = vunpack.c.l.b16 %v816
  %v836 = vunpack.c.h.b16 %v816
  %v837 = vunpack.c.l.b16 %v817
  %v838 = vunpack.c.h.b16 %v817
  %v839 = vunpack.c.l.b16 %v818
  %v840 = vunpack.c.h.b16 %v818
  %v841 = vunpack.c.l.b16 %v819
  %v842 = vunpack.c.h.b16 %v819
  %v843 = vunpack.c.l.b16 %v820
  %v844 = vunpack.c.h.b16 %v820
  %v845 = vpack.c.b16 %v831, %v829
  %v846 = vpack.c.b16 %v832, %v830
  %v847 = vpack.c.b16 %v835, %v833
  %v848 = vpack.c.b16 %v836, %v834
  %v849 = vpack.c.b16 %v839, %v837
  %v850 = vpack.c.b16 %v840, %v838
  %v851 = vpack.c.b16 %v843, %v841
  %v852 = vpack.c.b16 %v844, %v842
  %861 = vmatprep.subr.bf16.mxu0 %v846
  %862 = vmatpush1.bf16.msra.mxu0 %v845
  %863 = vmatprep.subr.bf16.mxu0 %v848
  %864 = vmatpush1.bf16.msra.mxu0 %v847
  %865 = vmatprep.subr.bf16.mxu0 %v850
  %866 = vmatpush1.bf16.msra.mxu0 %v849
  %867 = vmatprep.subr.bf16.mxu0 %v852
  %868 = vmatpush1.bf16.msra.mxu0 %v851
  %869 = vmatprep.subr.bf16.mxu0 0
  %870 = vmatpush1.bf16.msra.mxu0 0
  %871 = vmatprep.subr.bf16.mxu0 0
  %872 = vmatpush1.bf16.msra.mxu0 0
  %873 = vmatprep.subr.bf16.mxu0 0
  %874 = vmatpush1.bf16.msra.mxu0 0
  %875 = vmatprep.subr.bf16.mxu0 0
  %876 = vmatpush1.bf16.msra.mxu0 0
  %877 = vmatprep.subr.bf16.mxu0 0
  %878 = vmatpush1.bf16.msra.mxu0 0
  %879 = vmatprep.subr.bf16.mxu0 0
  %880 = vmatpush1.bf16.msra.mxu0 0
  %881 = vmatprep.subr.bf16.mxu0 0
  %882 = vmatpush1.bf16.msra.mxu0 0
  %883 = vmatprep.subr.bf16.mxu0 0
  %884 = vmatpush1.bf16.msra.mxu0 0
  %885 = vmatprep.subr.bf16.mxu0 0
  %886 = vmatpush1.bf16.msra.mxu0 0
  %887 = vmatprep.subr.bf16.mxu0 0
  %888 = vmatpush1.bf16.msra.mxu0 0
  %889 = vmatprep.subr.bf16.mxu0 0
  %890 = vmatpush1.bf16.msra.mxu0 0
  %891 = vmatprep.subr.bf16.mxu0 0
  %892 = vmatpush1.bf16.msra.mxu0 0
  %893 = vmatprep.mubr.bf16.mxu0 0
  %894 = vmatmul.mubr.bf16.gmra.mrb[0].mxu0 %v208
  %v895 = vpop.f32.mrb[0].mxu0
  %v896 = vadd.f32 0.0, %v895
  %v897 = vpop.f32.mrb[0].mxu0
  %v898 = vadd.f32 0.0, %v897
  %v899 = vpop.f32.mrb[0].mxu0
  %v900 = vadd.f32 0.0, %v899
  %v901 = vpop.f32.mrb[0].mxu0
  %v902 = vadd.f32 0.0, %v901
  %903 = vmatprep.mubr.bf16.mxu0 0
  %904 = vmatmul.mubr.bf16.gmra.mrb[0].mxu0 %v211
  %v905 = vpop.f32.mrb[0].mxu0
  %v906 = vadd.f32 0.0, %v905
  %v907 = vpop.f32.mrb[0].mxu0
  %v908 = vadd.f32 0.0, %v907
  %v909 = vpop.f32.mrb[0].mxu0
  %v910 = vadd.f32 0.0, %v909
  %v911 = vpop.f32.mrb[0].mxu0
  %v912 = vadd.f32 0.0, %v911
  %913 = vmatprep.mubr.bf16.mxu0 0
  %914 = vmatmul.mubr.bf16.gmra.mrb[0].mxu0 %v214
  %v915 = vpop.f32.mrb[0].mxu0
  %v916 = vadd.f32 0.0, %v915
  %v917 = vpop.f32.mrb[0].mxu0
  %v918 = vadd.f32 0.0, %v917
  %v919 = vpop.f32.mrb[0].mxu0
  %v920 = vadd.f32 0.0, %v919
  %v921 = vpop.f32.mrb[0].mxu0
  %v922 = vadd.f32 0.0, %v921
  %923 = vmatprep.mubr.bf16.mxu0 0
  %924 = vmatmul.mubr.bf16.gmra.mrb[0].mxu0 %v217
  %v925 = vpop.f32.mrb[0].mxu0
  %v926 = vadd.f32 0.0, %v925
  %v927 = vpop.f32.mrb[0].mxu0
  %v928 = vadd.f32 0.0, %v927
  %v929 = vpop.f32.mrb[0].mxu0
  %v930 = vadd.f32 0.0, %v929
  %v931 = vpop.f32.mrb[0].mxu0
  %v932 = vadd.f32 0.0, %v931
  %933 = vmatprep.mubr.bf16.mxu0 0
  %934 = vmatmul.mubr.bf16.gmra.mrb[0].mxu0 %v220
  %v935 = vpop.f32.mrb[0].mxu0
  %v936 = vadd.f32 0.0, %v935
  %v937 = vpop.f32.mrb[0].mxu0
  %v938 = vadd.f32 0.0, %v937
  %v939 = vpop.f32.mrb[0].mxu0
  %v940 = vadd.f32 0.0, %v939
  %v941 = vpop.f32.mrb[0].mxu0
  %v942 = vadd.f32 0.0, %v941
  %943 = vmatprep.mubr.bf16.mxu0 0
  %944 = vmatmul.mubr.bf16.gmra.mrb[0].mxu0 %v223
  %v945 = vpop.f32.mrb[0].mxu0
  %v946 = vadd.f32 0.0, %v945
  %v947 = vpop.f32.mrb[0].mxu0
  %v948 = vadd.f32 0.0, %v947
  %v949 = vpop.f32.mrb[0].mxu0
  %v950 = vadd.f32 0.0, %v949
  %v951 = vpop.f32.mrb[0].mxu0
  %v952 = vadd.f32 0.0, %v951
  %953 = vdwg.mxu0
  %v954 = vmul.f32 %v896, %v321
  %v955 = vmul.f32 %v898, %v321
  %v956 = vmul.f32 %v900, %v326
  %v957 = vmul.f32 %v902, %v326
  %v958 = vmul.f32 %v906, %v331
  %v959 = vmul.f32 %v908, %v331
  %v960 = vmul.f32 %v910, %v336
  %v961 = vmul.f32 %v912, %v336
  %v962 = vmul.f32 %v916, %v341
  %v963 = vmul.f32 %v918, %v341
  %v964 = vmul.f32 %v920, %v346
  %v965 = vmul.f32 %v922, %v346
  %v966 = vmul.f32 %v926, %v351
  %v967 = vmul.f32 %v928, %v351
  %v968 = vmul.f32 %v930, %v356
  %v969 = vmul.f32 %v932, %v356
  %v970 = vmul.f32 %v936, %v361
  %v971 = vmul.f32 %v938, %v361
  %v972 = vmul.f32 %v940, %v366
  %v973 = vmul.f32 %v942, %v366
  %v974 = vmul.f32 %v946, %v371
  %v975 = vmul.f32 %v948, %v371
  %v976 = vmul.f32 %v950, %v376
  %v977 = vmul.f32 %v952, %v376
  %v978 = vadd.f32 %v954, %v405
  %v979 = vadd.f32 %v955, %v405
  %v980 = vadd.f32 %v956, %v410
  %v981 = vadd.f32 %v957, %v410
  %v982 = vadd.f32 %v958, %v415
  %v983 = vadd.f32 %v959, %v415
  %v984 = vadd.f32 %v960, %v420
  %v985 = vadd.f32 %v961, %v420
  %v986 = vadd.f32 %v962, %v425
  %v987 = vadd.f32 %v963, %v425
  %v988 = vadd.f32 %v964, %v430
  %v989 = vadd.f32 %v965, %v430
  %v990 = vadd.f32 %v966, %v435
  %v991 = vadd.f32 %v967, %v435
  %v992 = vadd.f32 %v968, %v440
  %v993 = vadd.f32 %v969, %v440
  %v994 = vadd.f32 %v970, %v445
  %v995 = vadd.f32 %v971, %v445
  %v996 = vadd.f32 %v972, %v450
  %v997 = vadd.f32 %v973, %v450
  %v998 = vadd.f32 %v974, %v455
  %v999 = vadd.f32 %v975, %v455
  %v1000 = vadd.f32 %v976, %v460
  %v1001 = vadd.f32 %v977, %v460
  %v1002 = vmax.f32 %v978, 0.0
  %v1003 = vmax.f32 %v979, 0.0
  %v1004 = vmax.f32 %v980, 0.0
  %v1005 = vmax.f32 %v981, 0.0
  %v1006 = vmax.f32 %v982, 0.0
  %v1007 = vmax.f32 %v983, 0.0
  %v1008 = vmax.f32 %v984, 0.0
  %v1009 = vmax.f32 %v985, 0.0
  %v1010 = vmax.f32 %v986, 0.0
  %v1011 = vmax.f32 %v987, 0.0
  %v1012 = vmax.f32 %v988, 0.0
  %v1013 = vmax.f32 %v989, 0.0
  %v1014 = vmax.f32 %v990, 0.0
  %v1015 = vmax.f32 %v991, 0.0
  %v1016 = vmax.f32 %v992, 0.0
  %v1017 = vmax.f32 %v993, 0.0
  %v1018 = vmax.f32 %v994, 0.0
  %v1019 = vmax.f32 %v995, 0.0
  %v1020 = vmax.f32 %v996, 0.0
  %v1021 = vmax.f32 %v997, 0.0
  %v1022 = vmax.f32 %v998, 0.0
  %v1023 = vmax.f32 %v999, 0.0
  %v1024 = vmax.f32 %v1000, 0.0
  %v1025 = vmax.f32 %v1001, 0.0
  %v1026 = vpack.c.bf16 %v1004, %v1002
  %v1027 = vpack.c.bf16 %v1005, %v1003
  %v1028 = vpack.c.bf16 %v1008, %v1006
  %v1029 = vpack.c.bf16 %v1009, %v1007
  %v1030 = vpack.c.bf16 %v1012, %v1010
  %v1031 = vpack.c.bf16 %v1013, %v1011
  %v1032 = vpack.c.bf16 %v1016, %v1014
  %v1033 = vpack.c.bf16 %v1017, %v1015
  %v1034 = vpack.c.bf16 %v1020, %v1018
  %v1035 = vpack.c.bf16 %v1021, %v1019
  %v1036 = vpack.c.bf16 %v1024, %v1022
  %v1037 = vpack.c.bf16 %v1025, %v1023
  %1038 = vmatprep.subr.bf16.mxu0 %v1027
  %1039 = vmatpush1.bf16.msra.mxu0 %v1026
  %1040 = vmatprep.subr.bf16.mxu0 %v1029
  %1041 = vmatpush1.bf16.msra.mxu0 %v1028
  %1042 = vmatprep.subr.bf16.mxu0 %v1031
  %1043 = vmatpush1.bf16.msra.mxu0 %v1030
  %1044 = vmatprep.subr.bf16.mxu0 %v1033
  %1045 = vmatpush1.bf16.msra.mxu0 %v1032
  %1046 = vmatprep.subr.bf16.mxu0 %v1035
  %1047 = vmatpush1.bf16.msra.mxu0 %v1034
  %1048 = vmatprep.subr.bf16.mxu0 %v1037
  %1049 = vmatpush1.bf16.msra.mxu0 %v1036
  %1050 = vmatprep.subr.bf16.mxu0 0
  %1051 = vmatpush1.bf16.msra.mxu0 0
  %1052 = vmatprep.subr.bf16.mxu0 0
  %1053 = vmatpush1.bf16.msra.mxu0 0
  %1054 = vmatprep.subr.bf16.mxu0 0
  %1055 = vmatpush1.bf16.msra.mxu0 0
  %1056 = vmatprep.subr.bf16.mxu0 0
  %1057 = vmatpush1.bf16.msra.mxu0 0
  %1058 = vmatprep.subr.bf16.mxu0 0
  %1059 = vmatpush1.bf16.msra.mxu0 0
  %1060 = vmatprep.subr.bf16.mxu0 0
  %1061 = vmatpush1.bf16.msra.mxu0 0
  %1062 = vmatprep.subr.bf16.mxu0 0
  %1063 = vmatpush1.bf16.msra.mxu0 0
  %1064 = vmatprep.subr.bf16.mxu0 0
  %1065 = vmatpush1.bf16.msra.mxu0 0
  %1066 = vmatprep.subr.bf16.mxu0 0
  %1067 = vmatpush1.bf16.msra.mxu0 0
  %1068 = vmatprep.subr.bf16.mxu0 0
  %1069 = vmatpush1.bf16.msra.mxu0 0
  %1070 = vmatprep.mubr.bf16.mxu0 0
  %1071 = vmatmul.mubr.bf16.gmra.mrb[0].mxu0 %v644
  %v1072 = vpop.f32.mrb[0].mxu0
  %v1073 = vadd.f32 %v525, %v1072
  %v1074 = vpop.f32.mrb[0].mxu0
  %v1075 = vadd.f32 %v525, %v1074
  %v1076 = vpop.f32.mrb[0].mxu0
  %v1077 = vadd.f32 %v530, %v1076
  %v1078 = vpop.f32.mrb[0].mxu0
  %v1079 = vadd.f32 %v530, %v1078
  %1080 = vmatprep.mubr.bf16.mxu0 0
  %1081 = vmatmul.mubr.bf16.gmra.mrb[0].mxu0 %v647
  %v1082 = vpop.f32.mrb[0].mxu0
  %v1083 = vadd.f32 %v535, %v1082
  %v1084 = vpop.f32.mrb[0].mxu0
  %v1085 = vadd.f32 %v535, %v1084
  %v1086 = vpop.f32.mrb[0].mxu0
  %v1087 = vadd.f32 %v540, %v1086
  %v1088 = vpop.f32.mrb[0].mxu0
  %v1089 = vadd.f32 %v540, %v1088
  %1090 = vmatprep.mubr.bf16.mxu0 0
  %1091 = vmatmul.mubr.bf16.gmra.mrb[0].mxu0 %v650
  %v1092 = vpop.f32.mrb[0].mxu0
  %v1093 = vadd.f32 %v545, %v1092
  %v1094 = vpop.f32.mrb[0].mxu0
  %v1095 = vadd.f32 %v545, %v1094
  %v1096 = vpop.f32.mrb[0].mxu0
  %v1097 = vadd.f32 %v550, %v1096
  %v1098 = vpop.f32.mrb[0].mxu0
  %v1099 = vadd.f32 %v550, %v1098
  %1100 = vmatprep.mubr.bf16.mxu0 0
  %1101 = vmatmul.mubr.bf16.gmra.mrb[0].mxu0 %v653
  %v1102 = vpop.f32.mrb[0].mxu0
  %v1103 = vadd.f32 %v555, %v1102
  %v1104 = vpop.f32.mrb[0].mxu0
  %v1105 = vadd.f32 %v555, %v1104
  %v1106 = vpop.f32.mrb[0].mxu0
  %v1107 = vadd.f32 %v560, %v1106
  %v1108 = vpop.f32.mrb[0].mxu0
  %v1109 = vadd.f32 %v560, %v1108
  %1110 = vmatprep.mubr.bf16.mxu0 0
  %1111 = vmatmul.mubr.bf16.gmra.mrb[0].mxu0 %v656
  %v1112 = vpop.f32.mrb[0].mxu0
  %v1113 = vadd.f32 %v565, %v1112
  %v1114 = vpop.f32.mrb[0].mxu0
  %v1115 = vadd.f32 %v565, %v1114
  %v1116 = vpop.f32.mrb[0].mxu0
  %v1117 = vadd.f32 %v570, %v1116
  %v1118 = vpop.f32.mrb[0].mxu0
  %v1119 = vadd.f32 %v570, %v1118
  %1120 = vmatprep.mubr.bf16.mxu0 0
  %1121 = vmatmul.mubr.bf16.gmra.mrb[0].mxu0 %v659
  %v1122 = vpop.f32.mrb[0].mxu0
  %v1123 = vadd.f32 %v575, %v1122
  %v1124 = vpop.f32.mrb[0].mxu0
  %v1125 = vadd.f32 %v575, %v1124
  %v1126 = vpop.f32.mrb[0].mxu0
  %v1127 = vadd.f32 %v580, %v1126
  %v1128 = vpop.f32.mrb[0].mxu0
  %v1129 = vadd.f32 %v580, %v1128
  %1130 = vmatprep.mubr.bf16.mxu0 0
  %1131 = vmatmul.mubr.bf16.gmra.mrb[0].mxu0 %v662
  %v1132 = vpop.f32.mrb[0].mxu0
  %v1133 = vadd.f32 %v585, %v1132
  %v1134 = vpop.f32.mrb[0].mxu0
  %v1135 = vadd.f32 %v585, %v1134
  %v1136 = vpop.f32.mrb[0].mxu0
  %v1137 = vadd.f32 %v590, %v1136
  %v1138 = vpop.f32.mrb[0].mxu0
  %v1139 = vadd.f32 %v590, %v1138
  %1140 = vmatprep.mubr.bf16.mxu0 0
  %1141 = vmatmul.mubr.bf16.gmra.mrb[0].mxu0 %v665
  %v1142 = vpop.f32.mrb[0].mxu0
  %v1143 = vadd.f32 %v595, %v1142
  %v1144 = vpop.f32.mrb[0].mxu0
  %v1145 = vadd.f32 %v595, %v1144
  %v1146 = vpop.f32.mrb[0].mxu0
  %v1147 = vadd.f32 %v600, %v1146
  %v1148 = vpop.f32.mrb[0].mxu0
  %v1149 = vadd.f32 %v600, %v1148
  %1150 = vdwg.mxu0
  %s1151 = scalar_lea.vmem %s56, 256
  %1152 = vst [vmem:[%s1151] sm:$0xff] %v1073
  %1153 = vst [vmem:[%s1151 + $0x8] sm:$0xff] %v1075
  %1154 = vst [vmem:[%s1151 + $0x10] sm:$0xff] %v1077
  %1155 = vst [vmem:[%s1151 + $0x18] sm:$0xff] %v1079
  %1156 = vst [vmem:[%s1151 + $0x20] sm:$0xff] %v1083
  %1157 = vst [vmem:[%s1151 + $0x28] sm:$0xff] %v1085
  %1158 = vst [vmem:[%s1151 + $0x30] sm:$0xff] %v1087
  %1159 = vst [vmem:[%s1151 + $0x38] sm:$0xff] %v1089
  %1160 = vst [vmem:[%s1151 + $0x40] sm:$0xff] %v1093
  %1161 = vst [vmem:[%s1151 + $0x48] sm:$0xff] %v1095
  %1162 = vst [vmem:[%s1151 + $0x50] sm:$0xff] %v1097
  %1163 = vst [vmem:[%s1151 + $0x58] sm:$0xff] %v1099
  %1164 = vst [vmem:[%s1151 + $0x60] sm:$0xff] %v1103
  %1165 = vst [vmem:[%s1151 + $0x68] sm:$0xff] %v1105
  %1166 = vst [vmem:[%s1151 + $0x70] sm:$0xff] %v1107
  %1167 = vst [vmem:[%s1151 + $0x78] sm:$0xff] %v1109
  %1168 = vst [vmem:[%s1151 + $0x80] sm:$0xff] %v1113
  %1169 = vst [vmem:[%s1151 + $0x88] sm:$0xff] %v1115
  %1170 = vst [vmem:[%s1151 + $0x90] sm:$0xff] %v1117
  %1171 = vst [vmem:[%s1151 + $0x98] sm:$0xff] %v1119
  %1172 = vst [vmem:[%s1151 + $0xa0] sm:$0xff] %v1123
  %1173 = vst [vmem:[%s1151 + $0xa8] sm:$0xff] %v1125
  %1174 = vst [vmem:[%s1151 + $0xb0] sm:$0xff] %v1127
  %1175 = vst [vmem:[%s1151 + $0xb8] sm:$0xff] %v1129
  %1176 = vst [vmem:[%s1151 + $0xc0] sm:$0xff] %v1133
  %1177 = vst [vmem:[%s1151 + $0xc8] sm:$0xff] %v1135
  %1178 = vst [vmem:[%s1151 + $0xd0] sm:$0xff] %v1137
  %1179 = vst [vmem:[%s1151 + $0xd8] sm:$0xff] %v1139
  %1180 = vst [vmem:[%s1151 + $0xe0] sm:$0xff] %v1143
  %1181 = vst [vmem:[%s1151 + $0xe8] sm:$0xff] %v1145
  %1182 = vst [vmem:[%s1151 + $0xf0] sm:$0xff] %v1147
  %1183 = vst [vmem:[%s1151 + $0xf8] sm:$0xff] %v1149
  %s1184 = sadd.s32 0, 0
  %s1185 = smul.u32 2, %s1184
  %p1186 = scmp.lt.s32.totalorder %s1185, 1
  %s1187 = scalar_select %p1186, %s1185, 1
  %s1188 = smul.addr %s1187, 8
  %s1189 = scalar_lea.vmem %s6, %s1188
  // Predicated region
  $region26: #{resnet18_autoencoder_forward.9} parent=0 // pred_check
    _
  $region27: #{resnet18_autoencoder_forward.9} parent=0 // pred_check_branch
    %1191 = sbr.rel (0) target = $region29
  $region28: #{resnet18_autoencoder_forward.9} parent=0 // pred_region
    %s1192 = sadd.s32 0, 0
    %s1193 = smul.u32 2, %s1192
  $region29: #{resnet18_autoencoder_forward.9} parent=0 // pred_fallthru
    _
  // Predicated region
  $region30: #{resnet18_autoencoder_forward.9} parent=0 // pred_check
    _
  $region31: #{resnet18_autoencoder_forward.9} parent=0 // pred_check_branch
    %1195 = sbr.rel (0) target = $region33
  $region32: #{resnet18_autoencoder_forward.9} parent=0 // pred_region
    %s1196 = sadd.s32 0, 0
    %s1197 = smul.u32 2, %s1196
    %p1198 = scmp.lt.s32.totalorder %s1197, 1
    %s1199 = scalar_select %p1198, %s1197, 1
    %s1200 = smul.addr %s1199, 8
    %s1201 = scalar_lea.vmem %s6, %s1200
  $region33: #{resnet18_autoencoder_forward.9} parent=0 // pred_fallthru
    _

</llo_original>
